<compile_context>
chip_gen: v7x
topology: tpu7x:2x2x1
jax: 0.10.0
libtpu: 0.0.40
codegen_flags: <defaults>
</compile_context>

<pallas_src>
import functools

import jax
import jax.numpy as jnp
from jax.experimental import pallas as pl
from jax.experimental.pallas import tpu as pltpu


# ----------------------------------------------------------------------------
# Fused kernel factory (all spatial/channel sizes are static Python ints).
# ----------------------------------------------------------------------------
def _make_fused_kernel(H, W, Cin, C1, C2, C3):
    H1, W1 = H + 2, W + 2       # spatial after conv1 (padding=1)
    H2, W2 = H + 4, W + 4       # spatial after conv2
    H3, W3 = H + 6, W + 6       # spatial after conv3 (== output)

    def conv1x1(src_ref, w_ref, b_ref):
        """Pointwise conv over a (1, Cin, h, w) VMEM ref with SMEM weights.

        z[0, co, :, :] = b[co] + sum_ci w[ci, co] * src[0, ci, :, :]

        Each input channel plane is loaded from VMEM exactly once; weights are
        SMEM scalars, so every MAC is a free scalar-broadcast on the VPU (no
        lane/sublane relayout).  Keep this on the VPU for Cin/Cout <= ~64;
        beyond that the MXU (jnp.dot, bf16 in / f32 accum) wins.
        Returns a list of Cout pre-activation planes, each (1, 1, h, w).
        """
        cin, cout = w_ref.shape
        accs = [None] * cout
        for ci in range(cin):
            xc = src_ref[:, ci:ci + 1]                    # (1,1,h,w), one load
            for co in range(cout):
                t = w_ref[ci, co] * xc                    # SMEM scalar * plane
                accs[co] = t if accs[co] is None else accs[co] + t
        return [accs[co] + b_ref[co] for co in range(cout)]

    def silu(z):
        return z * jax.nn.sigmoid(z)

    def kernel(x_ref, w1_ref, b1_ref, w2_ref, b2_ref, w3_ref, b3_ref,
               out_ref, xp1_ref, xp2_ref, xp3_ref):
        # Zero-fill padded scratch (only the border rings really need it; the
        # buffers are a handful of vregs so a full clear is cheapest/simplest).
        xp1_ref[...] = jnp.zeros_like(xp1_ref)
        xp2_ref[...] = jnp.zeros_like(xp2_ref)
        xp3_ref[...] = jnp.zeros_like(xp3_ref)

        # ---- stage 1: v1 = conv1(zero_pad1(x)); v3 = silu(v1) ---------------
        # One rectangular block store realizes the whole spatial pad.
        xp1_ref[:, :, 1:1 + H, 1:1 + W] = x_ref[...]
        z1 = conv1x1(xp1_ref, w1_ref, b1_ref)             # C1 planes (1,1,H1,W1)

        # ---- stage 2 input: cat([v3, v1]) zero-padded by 1 -------------------
        # TODO(synk): original conv2 declares in_channels=2 / groups=2 (invalid
        # vs the 2*C1-channel concat); corrected to a dense 2*C1 -> C2 conv.
        for co in range(C1):
            v1 = z1[co]
            v3 = silu(v1)
            xp2_ref[:, co:co + 1,           1:1 + H1, 1:1 + W1] = v3
            xp2_ref[:, C1 + co:C1 + co + 1, 1:1 + H1, 1:1 + W1] = v1
            # v1 / v3 also feed conv3's input, spatially padded by 2 there.
            c_v1 = C2 + co
            c_v3 = C2 + C1 + C2 + co
            xp3_ref[:, c_v1:c_v1 + 1, 2:2 + H1, 2:2 + W1] = v1
            xp3_ref[:, c_v3:c_v3 + 1, 2:2 + H1, 2:2 + W1] = v3

        # ---- stage 2: v4 = conv2(pad1(cat[v3,v1])); v6 = silu(v4) ------------
        z2 = conv1x1(xp2_ref, w2_ref, b2_ref)             # C2 planes (1,1,H2,W2)

        # ---- stage 3 input: cat([v6, v1, v4, v3]) zero-padded by 1 -----------
        # TODO(synk): original cat mixes spatial sizes (H+4 vs H+2) and conv3
        # declares in_channels=5 / groups=3 (invalid); corrected by zero-padding
        # v1/v3 spatially by 1 (offset 2 above) and a dense 2*(C1+C2) -> C3 conv.
        for co in range(C2):
            v4 = z2[co]
            v6 = silu(v4)
            c_v6 = co
            c_v4 = C2 + C1 + co
            xp3_ref[:, c_v6:c_v6 + 1, 1:1 + H2, 1:1 + W2] = v6
            xp3_ref[:, c_v4:c_v4 + 1, 1:1 + H2, 1:1 + W2] = v4

        # ---- stage 3: v10 = silu(conv3(pad1(cat[v6,v1,v4,v3]))) --------------
        z3 = conv1x1(xp3_ref, w3_ref, b3_ref)             # C3 planes (1,1,H3,W3)
        for co in range(C3):
            out_ref[:, co:co + 1] = silu(z3[co])          # only HBM-bound write

    return kernel


# ----------------------------------------------------------------------------
# Forward pass (mirrors Model.forward) — single fused pallas_call over batch.
# ----------------------------------------------------------------------------
def model_forward(x_nchw, params):
    N, Cin, H, W = x_nchw.shape
    C1 = params["w1"].shape[1]
    C2 = params["w2"].shape[1]
    C3 = params["w3"].shape[1]
    K2 = 2 * C1                      # conv2 in-channels: cat([v3, v1])
    K3 = 2 * C1 + 2 * C2             # conv3 in-channels: cat([v6, v1, v4, v3])
    H1, W1 = H + 2, W + 2
    H2, W2 = H + 4, W + 4
    H3, W3 = H + 6, W + 6

    kernel = _make_fused_kernel(H, W, Cin, C1, C2, C3)

    def smem_spec():
        return pl.BlockSpec(memory_space=pltpu.MemorySpace.SMEM)

    out = pl.pallas_call(
        kernel,
        grid=(N,),                                       # batch over the grid
        out_shape=jax.ShapeDtypeStruct((N, C3, H3, W3), jnp.float32),
        in_specs=[
            pl.BlockSpec((1, Cin, H, W), lambda n: (n, 0, 0, 0)),
            smem_spec(),   # w1 (Cin, C1)
            smem_spec(),   # b1 (C1,)
            smem_spec(),   # w2 (K2, C2)
            smem_spec(),   # b2 (C2,)
            smem_spec(),   # w3 (K3, C3)
            smem_spec(),   # b3 (C3,)
        ],
        out_specs=pl.BlockSpec((1, C3, H3, W3), lambda n: (n, 0, 0, 0)),
        scratch_shapes=[
            pltpu.VMEM((1, Cin, H1, W1), jnp.float32),   # zero-padded conv1 input
            pltpu.VMEM((1, K2, H2, W2), jnp.float32),    # zero-padded cat([v3, v1])
            pltpu.VMEM((1, K3, H3, W3), jnp.float32),    # zero-padded cat([v6,v1,v4,v3])
        ],
        compiler_params=pltpu.CompilerParams(
            dimension_semantics=("parallel",)),          # v7x: one batch per TC
    )(x_nchw, params["w1"], params["b1"], params["w2"], params["b2"],
      params["w3"], params["b3"])

    return out                                           # already NCHW


# ----------------------------------------------------------------------------
# Deterministic parameter init (PyTorch Conv2d default: U(-1/sqrt(fan_in), ..)).
# Weights stored as (Cin, Cout) since every conv is 1x1.
# ----------------------------------------------------------------------------
def init_params(key):
    def uinit(k, shape, fan_in):
        bound = 1.0 / jnp.sqrt(float(fan_in))
        return jax.random.uniform(k, shape, jnp.float32, -bound, bound)

    ks = jax.random.split(key, 6)
    return {
        "w1": uinit(ks[0], (3, 5), 3),   "b1": uinit(ks[1], (5,), 3),
        "w2": uinit(ks[2], (10, 5), 10), "b2": uinit(ks[3], (5,), 10),
        "w3": uinit(ks[4], (20, 3), 20), "b3": uinit(ks[5], (3,), 20),
    }


# Pure-JAX reference (same corrected semantics, no Pallas) for the sanity check.
def _ref_conv1x1_pad1_silu(x_nhwc, w, b):
    xp = jnp.pad(x_nhwc, ((0, 0), (1, 1), (1, 1), (0, 0)))
    z = jnp.einsum("nhwc,co->nhwo", xp, w) + b
    return z, z * jax.nn.sigmoid(z)


def _ref_forward(x_nchw, params):
    x = jnp.transpose(x_nchw, (0, 2, 3, 1))
    v1, v3 = _ref_conv1x1_pad1_silu(x, params["w1"], params["b1"])
    v33 = jnp.concatenate([v3, v1], axis=-1)
    v4, v6 = _ref_conv1x1_pad1_silu(v33, params["w2"], params["b2"])
    pad1 = lambda t: jnp.pad(t, ((0, 0), (1, 1), (1, 1), (0, 0)))
    v7 = jnp.concatenate([v6, pad1(v1), v4, pad1(v3)], axis=-1)
    _, v10 = _ref_conv1x1_pad1_silu(v7, params["w3"], params["b3"])
    return jnp.transpose(v10, (0, 3, 1, 2))


if __name__ == "__main__":
    key = jax.random.PRNGKey(0)
    kx, kp = jax.random.split(key)

    # Small shapes consistent with the module's forward (3 input channels).
    x = jax.random.normal(kx, (2, 3, 8, 8), dtype=jnp.float32)    # NCHW
    params = init_params(kp)

    fwd = jax.jit(functools.partial(model_forward, params=params))
    out = jax.block_until_ready(fwd(x))

    ref = _ref_forward(x, params)
    assert out.shape == (2, 3, 14, 14), out.shape
    assert jnp.allclose(out, ref, atol=1e-5, rtol=1e-5), "mismatch vs reference"

    print("KERNEL_OK")
</pallas_src>

<mosaic_0001>
module attributes {stable_mosaic.version = 11 : i64} {
  func.func @kernel(%arg0: i32, %arg1: memref<1x3x8x8xf32, #tpu.memory_space<vmem>>, %arg2: memref<3x5xf32, #tpu.memory_space<smem>>, %arg3: memref<5xf32, #tpu.memory_space<smem>>, %arg4: memref<10x5xf32, #tpu.memory_space<smem>>, %arg5: memref<5xf32, #tpu.memory_space<smem>>, %arg6: memref<20x3xf32, #tpu.memory_space<smem>>, %arg7: memref<3xf32, #tpu.memory_space<smem>>, %arg8: memref<1x3x14x14xf32, #tpu.memory_space<vmem>>, %arg9: memref<1x3x10x10xf32, #tpu.memory_space<vmem>>, %arg10: memref<1x10x12x12xf32, #tpu.memory_space<vmem>>, %arg11: memref<1x20x14x14xf32, #tpu.memory_space<vmem>>) attributes {dimension_semantics = [#tpu.dimension_semantics<parallel>], iteration_bounds = array<i64: 2>, scalar_prefetch = 0 : i64, scratch_operands = 3 : i64, tpu.core_type = #tpu.core_type<tc>, window_params = [{transform_indices = @transform_0, window_bounds = array<i64: 1, 3, 8, 8>}, {transform_indices = @transform_1, window_bounds = array<i64: 3, 5>}, {transform_indices = @transform_2, window_bounds = array<i64: 5>}, {transform_indices = @transform_3, window_bounds = array<i64: 10, 5>}, {transform_indices = @transform_4, window_bounds = array<i64: 5>}, {transform_indices = @transform_5, window_bounds = array<i64: 20, 3>}, {transform_indices = @transform_6, window_bounds = array<i64: 3>}, {transform_indices = @transform_7, window_bounds = array<i64: 1, 3, 14, 14>}]} {
    %cst = arith.constant 0.000000e+00 : f32
    %0 = vector.broadcast %cst : f32 to vector<1x3x10x10xf32>
    %c0 = arith.constant 0 : index
    %c0_0 = arith.constant 0 : index
    %c0_1 = arith.constant 0 : index
    %c0_2 = arith.constant 0 : index
    %1 = vector.load %arg9[%c0, %c0_0, %c0_1, %c0_2] : memref<1x3x10x10xf32, #tpu.memory_space<vmem>>, vector<1x3x10x10xf32>
    tpu.vector_store %arg9[%c0, %c0_0, %c0_1, %c0_2], %0 {strides = array<i32>} : memref<1x3x10x10xf32, #tpu.memory_space<vmem>>, vector<1x3x10x10xf32>,
    %cst_3 = arith.constant 0.000000e+00 : f32
    %2 = vector.broadcast %cst_3 : f32 to vector<1x10x12x12xf32>
    %c0_4 = arith.constant 0 : index
    %c0_5 = arith.constant 0 : index
    %c0_6 = arith.constant 0 : index
    %c0_7 = arith.constant 0 : index
    %3 = vector.load %arg10[%c0_4, %c0_5, %c0_6, %c0_7] : memref<1x10x12x12xf32, #tpu.memory_space<vmem>>, vector<1x10x12x12xf32>
    tpu.vector_store %arg10[%c0_4, %c0_5, %c0_6, %c0_7], %2 {strides = array<i32>} : memref<1x10x12x12xf32, #tpu.memory_space<vmem>>, vector<1x10x12x12xf32>,
    %cst_8 = arith.constant 0.000000e+00 : f32
    %4 = vector.broadcast %cst_8 : f32 to vector<1x20x14x14xf32>
    %c0_9 = arith.constant 0 : index
    %c0_10 = arith.constant 0 : index
    %c0_11 = arith.constant 0 : index
    %c0_12 = arith.constant 0 : index
    %5 = vector.load %arg11[%c0_9, %c0_10, %c0_11, %c0_12] : memref<1x20x14x14xf32, #tpu.memory_space<vmem>>, vector<1x20x14x14xf32>
    tpu.vector_store %arg11[%c0_9, %c0_10, %c0_11, %c0_12], %4 {strides = array<i32>} : memref<1x20x14x14xf32, #tpu.memory_space<vmem>>, vector<1x20x14x14xf32>,
    %c0_13 = arith.constant 0 : index
    %c0_14 = arith.constant 0 : index
    %c0_15 = arith.constant 0 : index
    %c0_16 = arith.constant 0 : index
    %6 = vector.load %arg1[%c0_13, %c0_14, %c0_15, %c0_16] : memref<1x3x8x8xf32, #tpu.memory_space<vmem>>, vector<1x3x8x8xf32>
    %c0_17 = arith.constant 0 : index
    %c0_18 = arith.constant 0 : index
    %c1 = arith.constant 1 : index
    %c1_19 = arith.constant 1 : index
    %7 = vector.load %arg9[%c0_17, %c0_18, %c1, %c1_19] : memref<1x3x10x10xf32, #tpu.memory_space<vmem>>, vector<1x3x8x8xf32>
    tpu.vector_store %arg9[%c0_17, %c0_18, %c1, %c1_19], %6 {strides = array<i32>} : memref<1x3x10x10xf32, #tpu.memory_space<vmem>>, vector<1x3x8x8xf32>,
    %c0_20 = arith.constant 0 : index
    %c0_21 = arith.constant 0 : index
    %c0_22 = arith.constant 0 : index
    %c0_23 = arith.constant 0 : index
    %8 = vector.load %arg9[%c0_20, %c0_21, %c0_22, %c0_23] : memref<1x3x10x10xf32, #tpu.memory_space<vmem>>, vector<1x1x10x10xf32>
    %c0_24 = arith.constant 0 : index
    %c0_25 = arith.constant 0 : index
    %9 = memref.load %arg2[%c0_24, %c0_25] : memref<3x5xf32, #tpu.memory_space<smem>>
    %10 = vector.broadcast %9 : f32 to vector<1x1x10x10xf32>
    %11 = arith.mulf %10, %8 : vector<1x1x10x10xf32>
    %c0_26 = arith.constant 0 : index
    %c1_27 = arith.constant 1 : index
    %12 = memref.load %arg2[%c0_26, %c1_27] : memref<3x5xf32, #tpu.memory_space<smem>>
    %13 = vector.broadcast %12 : f32 to vector<1x1x10x10xf32>
    %14 = arith.mulf %13, %8 : vector<1x1x10x10xf32>
    %c0_28 = arith.constant 0 : index
    %c2 = arith.constant 2 : index
    %15 = memref.load %arg2[%c0_28, %c2] : memref<3x5xf32, #tpu.memory_space<smem>>
    %16 = vector.broadcast %15 : f32 to vector<1x1x10x10xf32>
    %17 = arith.mulf %16, %8 : vector<1x1x10x10xf32>
    %c0_29 = arith.constant 0 : index
    %c3 = arith.constant 3 : index
    %18 = memref.load %arg2[%c0_29, %c3] : memref<3x5xf32, #tpu.memory_space<smem>>
    %19 = vector.broadcast %18 : f32 to vector<1x1x10x10xf32>
    %20 = arith.mulf %19, %8 : vector<1x1x10x10xf32>
    %c0_30 = arith.constant 0 : index
    %c4 = arith.constant 4 : index
    %21 = memref.load %arg2[%c0_30, %c4] : memref<3x5xf32, #tpu.memory_space<smem>>
    %22 = vector.broadcast %21 : f32 to vector<1x1x10x10xf32>
    %23 = arith.mulf %22, %8 : vector<1x1x10x10xf32>
    %c0_31 = arith.constant 0 : index
    %c1_32 = arith.constant 1 : index
    %c0_33 = arith.constant 0 : index
    %c0_34 = arith.constant 0 : index
    %24 = vector.load %arg9[%c0_31, %c1_32, %c0_33, %c0_34] : memref<1x3x10x10xf32, #tpu.memory_space<vmem>>, vector<1x1x10x10xf32>
    %c1_35 = arith.constant 1 : index
    %c0_36 = arith.constant 0 : index
    %25 = memref.load %arg2[%c1_35, %c0_36] : memref<3x5xf32, #tpu.memory_space<smem>>
    %26 = vector.broadcast %25 : f32 to vector<1x1x10x10xf32>
    %27 = arith.mulf %26, %24 : vector<1x1x10x10xf32>
    %28 = arith.addf %11, %27 : vector<1x1x10x10xf32>
    %c1_37 = arith.constant 1 : index
    %c1_38 = arith.constant 1 : index
    %29 = memref.load %arg2[%c1_37, %c1_38] : memref<3x5xf32, #tpu.memory_space<smem>>
    %30 = vector.broadcast %29 : f32 to vector<1x1x10x10xf32>
    %31 = arith.mulf %30, %24 : vector<1x1x10x10xf32>
    %32 = arith.addf %14, %31 : vector<1x1x10x10xf32>
    %c1_39 = arith.constant 1 : index
    %c2_40 = arith.constant 2 : index
    %33 = memref.load %arg2[%c1_39, %c2_40] : memref<3x5xf32, #tpu.memory_space<smem>>
    %34 = vector.broadcast %33 : f32 to vector<1x1x10x10xf32>
    %35 = arith.mulf %34, %24 : vector<1x1x10x10xf32>
    %36 = arith.addf %17, %35 : vector<1x1x10x10xf32>
    %c1_41 = arith.constant 1 : index
    %c3_42 = arith.constant 3 : index
    %37 = memref.load %arg2[%c1_41, %c3_42] : memref<3x5xf32, #tpu.memory_space<smem>>
    %38 = vector.broadcast %37 : f32 to vector<1x1x10x10xf32>
    %39 = arith.mulf %38, %24 : vector<1x1x10x10xf32>
    %40 = arith.addf %20, %39 : vector<1x1x10x10xf32>
    %c1_43 = arith.constant 1 : index
    %c4_44 = arith.constant 4 : index
    %41 = memref.load %arg2[%c1_43, %c4_44] : memref<3x5xf32, #tpu.memory_space<smem>>
    %42 = vector.broadcast %41 : f32 to vector<1x1x10x10xf32>
    %43 = arith.mulf %42, %24 : vector<1x1x10x10xf32>
    %44 = arith.addf %23, %43 : vector<1x1x10x10xf32>
    %c0_45 = arith.constant 0 : index
    %c2_46 = arith.constant 2 : index
    %c0_47 = arith.constant 0 : index
    %c0_48 = arith.constant 0 : index
    %45 = vector.load %arg9[%c0_45, %c2_46, %c0_47, %c0_48] : memref<1x3x10x10xf32, #tpu.memory_space<vmem>>, vector<1x1x10x10xf32>
    %c2_49 = arith.constant 2 : index
    %c0_50 = arith.constant 0 : index
    %46 = memref.load %arg2[%c2_49, %c0_50] : memref<3x5xf32, #tpu.memory_space<smem>>
    %47 = vector.broadcast %46 : f32 to vector<1x1x10x10xf32>
    %48 = arith.mulf %47, %45 : vector<1x1x10x10xf32>
    %49 = arith.addf %28, %48 : vector<1x1x10x10xf32>
    %c2_51 = arith.constant 2 : index
    %c1_52 = arith.constant 1 : index
    %50 = memref.load %arg2[%c2_51, %c1_52] : memref<3x5xf32, #tpu.memory_space<smem>>
    %51 = vector.broadcast %50 : f32 to vector<1x1x10x10xf32>
    %52 = arith.mulf %51, %45 : vector<1x1x10x10xf32>
    %53 = arith.addf %32, %52 : vector<1x1x10x10xf32>
    %c2_53 = arith.constant 2 : index
    %c2_54 = arith.constant 2 : index
    %54 = memref.load %arg2[%c2_53, %c2_54] : memref<3x5xf32, #tpu.memory_space<smem>>
    %55 = vector.broadcast %54 : f32 to vector<1x1x10x10xf32>
    %56 = arith.mulf %55, %45 : vector<1x1x10x10xf32>
    %57 = arith.addf %36, %56 : vector<1x1x10x10xf32>
    %c2_55 = arith.constant 2 : index
    %c3_56 = arith.constant 3 : index
    %58 = memref.load %arg2[%c2_55, %c3_56] : memref<3x5xf32, #tpu.memory_space<smem>>
    %59 = vector.broadcast %58 : f32 to vector<1x1x10x10xf32>
    %60 = arith.mulf %59, %45 : vector<1x1x10x10xf32>
    %61 = arith.addf %40, %60 : vector<1x1x10x10xf32>
    %c2_57 = arith.constant 2 : index
    %c4_58 = arith.constant 4 : index
    %62 = memref.load %arg2[%c2_57, %c4_58] : memref<3x5xf32, #tpu.memory_space<smem>>
    %63 = vector.broadcast %62 : f32 to vector<1x1x10x10xf32>
    %64 = arith.mulf %63, %45 : vector<1x1x10x10xf32>
    %65 = arith.addf %44, %64 : vector<1x1x10x10xf32>
    %c0_59 = arith.constant 0 : index
    %66 = memref.load %arg3[%c0_59] : memref<5xf32, #tpu.memory_space<smem>>
    %67 = vector.broadcast %66 : f32 to vector<1x1x10x10xf32>
    %68 = arith.addf %49, %67 : vector<1x1x10x10xf32>
    %c1_60 = arith.constant 1 : index
    %69 = memref.load %arg3[%c1_60] : memref<5xf32, #tpu.memory_space<smem>>
    %70 = vector.broadcast %69 : f32 to vector<1x1x10x10xf32>
    %71 = arith.addf %53, %70 : vector<1x1x10x10xf32>
    %c2_61 = arith.constant 2 : index
    %72 = memref.load %arg3[%c2_61] : memref<5xf32, #tpu.memory_space<smem>>
    %73 = vector.broadcast %72 : f32 to vector<1x1x10x10xf32>
    %74 = arith.addf %57, %73 : vector<1x1x10x10xf32>
    %c3_62 = arith.constant 3 : index
    %75 = memref.load %arg3[%c3_62] : memref<5xf32, #tpu.memory_space<smem>>
    %76 = vector.broadcast %75 : f32 to vector<1x1x10x10xf32>
    %77 = arith.addf %61, %76 : vector<1x1x10x10xf32>
    %c4_63 = arith.constant 4 : index
    %78 = memref.load %arg3[%c4_63] : memref<5xf32, #tpu.memory_space<smem>>
    %79 = vector.broadcast %78 : f32 to vector<1x1x10x10xf32>
    %80 = arith.addf %65, %79 : vector<1x1x10x10xf32>
    %81 = arith.negf %68 : vector<1x1x10x10xf32>
    %82 = math.exp %81 : vector<1x1x10x10xf32>
    %cst_64 = arith.constant 1.000000e+00 : f32
    %83 = vector.broadcast %cst_64 : f32 to vector<1x1x10x10xf32>
    %84 = arith.addf %83, %82 : vector<1x1x10x10xf32>
    %85 = arith.divf %83, %84 : vector<1x1x10x10xf32>
    %86 = arith.mulf %68, %85 : vector<1x1x10x10xf32>
    %c0_65 = arith.constant 0 : index
    %c0_66 = arith.constant 0 : index
    %c1_67 = arith.constant 1 : index
    %c1_68 = arith.constant 1 : index
    %87 = vector.load %arg10[%c0_65, %c0_66, %c1_67, %c1_68] : memref<1x10x12x12xf32, #tpu.memory_space<vmem>>, vector<1x1x10x10xf32>
    tpu.vector_store %arg10[%c0_65, %c0_66, %c1_67, %c1_68], %86 {strides = array<i32>} : memref<1x10x12x12xf32, #tpu.memory_space<vmem>>, vector<1x1x10x10xf32>,
    %c0_69 = arith.constant 0 : index
    %c5 = arith.constant 5 : index
    %c1_70 = arith.constant 1 : index
    %c1_71 = arith.constant 1 : index
    %88 = vector.load %arg10[%c0_69, %c5, %c1_70, %c1_71] : memref<1x10x12x12xf32, #tpu.memory_space<vmem>>, vector<1x1x10x10xf32>
    tpu.vector_store %arg10[%c0_69, %c5, %c1_70, %c1_71], %68 {strides = array<i32>} : memref<1x10x12x12xf32, #tpu.memory_space<vmem>>, vector<1x1x10x10xf32>,
    %c0_72 = arith.constant 0 : index
    %c5_73 = arith.constant 5 : index
    %c2_74 = arith.constant 2 : index
    %c2_75 = arith.constant 2 : index
    %89 = vector.load %arg11[%c0_72, %c5_73, %c2_74, %c2_75] : memref<1x20x14x14xf32, #tpu.memory_space<vmem>>, vector<1x1x10x10xf32>
    tpu.vector_store %arg11[%c0_72, %c5_73, %c2_74, %c2_75], %68 {strides = array<i32>} : memref<1x20x14x14xf32, #tpu.memory_space<vmem>>, vector<1x1x10x10xf32>,
    %c0_76 = arith.constant 0 : index
    %c15 = arith.constant 15 : index
    %c2_77 = arith.constant 2 : index
    %c2_78 = arith.constant 2 : index
    %90 = vector.load %arg11[%c0_76, %c15, %c2_77, %c2_78] : memref<1x20x14x14xf32, #tpu.memory_space<vmem>>, vector<1x1x10x10xf32>
    tpu.vector_store %arg11[%c0_76, %c15, %c2_77, %c2_78], %86 {strides = array<i32>} : memref<1x20x14x14xf32, #tpu.memory_space<vmem>>, vector<1x1x10x10xf32>,
    %91 = arith.negf %71 : vector<1x1x10x10xf32>
    %92 = math.exp %91 : vector<1x1x10x10xf32>
    %cst_79 = arith.constant 1.000000e+00 : f32
    %93 = vector.broadcast %cst_79 : f32 to vector<1x1x10x10xf32>
    %94 = arith.addf %93, %92 : vector<1x1x10x10xf32>
    %95 = arith.divf %93, %94 : vector<1x1x10x10xf32>
    %96 = arith.mulf %71, %95 : vector<1x1x10x10xf32>
    %c0_80 = arith.constant 0 : index
    %c1_81 = arith.constant 1 : index
    %c1_82 = arith.constant 1 : index
    %c1_83 = arith.constant 1 : index
    %97 = vector.load %arg10[%c0_80, %c1_81, %c1_82, %c1_83] : memref<1x10x12x12xf32, #tpu.memory_space<vmem>>, vector<1x1x10x10xf32>
    tpu.vector_store %arg10[%c0_80, %c1_81, %c1_82, %c1_83], %96 {strides = array<i32>} : memref<1x10x12x12xf32, #tpu.memory_space<vmem>>, vector<1x1x10x10xf32>,
    %c0_84 = arith.constant 0 : index
    %c6 = arith.constant 6 : index
    %c1_85 = arith.constant 1 : index
    %c1_86 = arith.constant 1 : index
    %98 = vector.load %arg10[%c0_84, %c6, %c1_85, %c1_86] : memref<1x10x12x12xf32, #tpu.memory_space<vmem>>, vector<1x1x10x10xf32>
    tpu.vector_store %arg10[%c0_84, %c6, %c1_85, %c1_86], %71 {strides = array<i32>} : memref<1x10x12x12xf32, #tpu.memory_space<vmem>>, vector<1x1x10x10xf32>,
    %c0_87 = arith.constant 0 : index
    %c6_88 = arith.constant 6 : index
    %c2_89 = arith.constant 2 : index
    %c2_90 = arith.constant 2 : index
    %99 = vector.load %arg11[%c0_87, %c6_88, %c2_89, %c2_90] : memref<1x20x14x14xf32, #tpu.memory_space<vmem>>, vector<1x1x10x10xf32>
    tpu.vector_store %arg11[%c0_87, %c6_88, %c2_89, %c2_90], %71 {strides = array<i32>} : memref<1x20x14x14xf32, #tpu.memory_space<vmem>>, vector<1x1x10x10xf32>,
    %c0_91 = arith.constant 0 : index
    %c16 = arith.constant 16 : index
    %c2_92 = arith.constant 2 : index
    %c2_93 = arith.constant 2 : index
    %100 = vector.load %arg11[%c0_91, %c16, %c2_92, %c2_93] : memref<1x20x14x14xf32, #tpu.memory_space<vmem>>, vector<1x1x10x10xf32>
    tpu.vector_store %arg11[%c0_91, %c16, %c2_92, %c2_93], %96 {strides = array<i32>} : memref<1x20x14x14xf32, #tpu.memory_space<vmem>>, vector<1x1x10x10xf32>,
    %101 = arith.negf %74 : vector<1x1x10x10xf32>
    %102 = math.exp %101 : vector<1x1x10x10xf32>
    %cst_94 = arith.constant 1.000000e+00 : f32
    %103 = vector.broadcast %cst_94 : f32 to vector<1x1x10x10xf32>
    %104 = arith.addf %103, %102 : vector<1x1x10x10xf32>
    %105 = arith.divf %103, %104 : vector<1x1x10x10xf32>
    %106 = arith.mulf %74, %105 : vector<1x1x10x10xf32>
    %c0_95 = arith.constant 0 : index
    %c2_96 = arith.constant 2 : index
    %c1_97 = arith.constant 1 : index
    %c1_98 = arith.constant 1 : index
    %107 = vector.load %arg10[%c0_95, %c2_96, %c1_97, %c1_98] : memref<1x10x12x12xf32, #tpu.memory_space<vmem>>, vector<1x1x10x10xf32>
    tpu.vector_store %arg10[%c0_95, %c2_96, %c1_97, %c1_98], %106 {strides = array<i32>} : memref<1x10x12x12xf32, #tpu.memory_space<vmem>>, vector<1x1x10x10xf32>,
    %c0_99 = arith.constant 0 : index
    %c7 = arith.constant 7 : index
    %c1_100 = arith.constant 1 : index
    %c1_101 = arith.constant 1 : index
    %108 = vector.load %arg10[%c0_99, %c7, %c1_100, %c1_101] : memref<1x10x12x12xf32, #tpu.memory_space<vmem>>, vector<1x1x10x10xf32>
    tpu.vector_store %arg10[%c0_99, %c7, %c1_100, %c1_101], %74 {strides = array<i32>} : memref<1x10x12x12xf32, #tpu.memory_space<vmem>>, vector<1x1x10x10xf32>,
    %c0_102 = arith.constant 0 : index
    %c7_103 = arith.constant 7 : index
    %c2_104 = arith.constant 2 : index
    %c2_105 = arith.constant 2 : index
    %109 = vector.load %arg11[%c0_102, %c7_103, %c2_104, %c2_105] : memref<1x20x14x14xf32, #tpu.memory_space<vmem>>, vector<1x1x10x10xf32>
    tpu.vector_store %arg11[%c0_102, %c7_103, %c2_104, %c2_105], %74 {strides = array<i32>} : memref<1x20x14x14xf32, #tpu.memory_space<vmem>>, vector<1x1x10x10xf32>,
    %c0_106 = arith.constant 0 : index
    %c17 = arith.constant 17 : index
    %c2_107 = arith.constant 2 : index
    %c2_108 = arith.constant 2 : index
    %110 = vector.load %arg11[%c0_106, %c17, %c2_107, %c2_108] : memref<1x20x14x14xf32, #tpu.memory_space<vmem>>, vector<1x1x10x10xf32>
    tpu.vector_store %arg11[%c0_106, %c17, %c2_107, %c2_108], %106 {strides = array<i32>} : memref<1x20x14x14xf32, #tpu.memory_space<vmem>>, vector<1x1x10x10xf32>,
    %111 = arith.negf %77 : vector<1x1x10x10xf32>
    %112 = math.exp %111 : vector<1x1x10x10xf32>
    %cst_109 = arith.constant 1.000000e+00 : f32
    %113 = vector.broadcast %cst_109 : f32 to vector<1x1x10x10xf32>
    %114 = arith.addf %113, %112 : vector<1x1x10x10xf32>
    %115 = arith.divf %113, %114 : vector<1x1x10x10xf32>
    %116 = arith.mulf %77, %115 : vector<1x1x10x10xf32>
    %c0_110 = arith.constant 0 : index
    %c3_111 = arith.constant 3 : index
    %c1_112 = arith.constant 1 : index
    %c1_113 = arith.constant 1 : index
    %117 = vector.load %arg10[%c0_110, %c3_111, %c1_112, %c1_113] : memref<1x10x12x12xf32, #tpu.memory_space<vmem>>, vector<1x1x10x10xf32>
    tpu.vector_store %arg10[%c0_110, %c3_111, %c1_112, %c1_113], %116 {strides = array<i32>} : memref<1x10x12x12xf32, #tpu.memory_space<vmem>>, vector<1x1x10x10xf32>,
    %c0_114 = arith.constant 0 : index
    %c8 = arith.constant 8 : index
    %c1_115 = arith.constant 1 : index
    %c1_116 = arith.constant 1 : index
    %118 = vector.load %arg10[%c0_114, %c8, %c1_115, %c1_116] : memref<1x10x12x12xf32, #tpu.memory_space<vmem>>, vector<1x1x10x10xf32>
    tpu.vector_store %arg10[%c0_114, %c8, %c1_115, %c1_116], %77 {strides = array<i32>} : memref<1x10x12x12xf32, #tpu.memory_space<vmem>>, vector<1x1x10x10xf32>,
    %c0_117 = arith.constant 0 : index
    %c8_118 = arith.constant 8 : index
    %c2_119 = arith.constant 2 : index
    %c2_120 = arith.constant 2 : index
    %119 = vector.load %arg11[%c0_117, %c8_118, %c2_119, %c2_120] : memref<1x20x14x14xf32, #tpu.memory_space<vmem>>, vector<1x1x10x10xf32>
    tpu.vector_store %arg11[%c0_117, %c8_118, %c2_119, %c2_120], %77 {strides = array<i32>} : memref<1x20x14x14xf32, #tpu.memory_space<vmem>>, vector<1x1x10x10xf32>,
    %c0_121 = arith.constant 0 : index
    %c18 = arith.constant 18 : index
    %c2_122 = arith.constant 2 : index
    %c2_123 = arith.constant 2 : index
    %120 = vector.load %arg11[%c0_121, %c18, %c2_122, %c2_123] : memref<1x20x14x14xf32, #tpu.memory_space<vmem>>, vector<1x1x10x10xf32>
    tpu.vector_store %arg11[%c0_121, %c18, %c2_122, %c2_123], %116 {strides = array<i32>} : memref<1x20x14x14xf32, #tpu.memory_space<vmem>>, vector<1x1x10x10xf32>,
    %121 = arith.negf %80 : vector<1x1x10x10xf32>
    %122 = math.exp %121 : vector<1x1x10x10xf32>
    %cst_124 = arith.constant 1.000000e+00 : f32
    %123 = vector.broadcast %cst_124 : f32 to vector<1x1x10x10xf32>
    %124 = arith.addf %123, %122 : vector<1x1x10x10xf32>
    %125 = arith.divf %123, %124 : vector<1x1x10x10xf32>
    %126 = arith.mulf %80, %125 : vector<1x1x10x10xf32>
    %c0_125 = arith.constant 0 : index
    %c4_126 = arith.constant 4 : index
    %c1_127 = arith.constant 1 : index
    %c1_128 = arith.constant 1 : index
    %127 = vector.load %arg10[%c0_125, %c4_126, %c1_127, %c1_128] : memref<1x10x12x12xf32, #tpu.memory_space<vmem>>, vector<1x1x10x10xf32>
    tpu.vector_store %arg10[%c0_125, %c4_126, %c1_127, %c1_128], %126 {strides = array<i32>} : memref<1x10x12x12xf32, #tpu.memory_space<vmem>>, vector<1x1x10x10xf32>,
    %c0_129 = arith.constant 0 : index
    %c9 = arith.constant 9 : index
    %c1_130 = arith.constant 1 : index
    %c1_131 = arith.constant 1 : index
    %128 = vector.load %arg10[%c0_129, %c9, %c1_130, %c1_131] : memref<1x10x12x12xf32, #tpu.memory_space<vmem>>, vector<1x1x10x10xf32>
    tpu.vector_store %arg10[%c0_129, %c9, %c1_130, %c1_131], %80 {strides = array<i32>} : memref<1x10x12x12xf32, #tpu.memory_space<vmem>>, vector<1x1x10x10xf32>,
    %c0_132 = arith.constant 0 : index
    %c9_133 = arith.constant 9 : index
    %c2_134 = arith.constant 2 : index
    %c2_135 = arith.constant 2 : index
    %129 = vector.load %arg11[%c0_132, %c9_133, %c2_134, %c2_135] : memref<1x20x14x14xf32, #tpu.memory_space<vmem>>, vector<1x1x10x10xf32>
    tpu.vector_store %arg11[%c0_132, %c9_133, %c2_134, %c2_135], %80 {strides = array<i32>} : memref<1x20x14x14xf32, #tpu.memory_space<vmem>>, vector<1x1x10x10xf32>,
    %c0_136 = arith.constant 0 : index
    %c19 = arith.constant 19 : index
    %c2_137 = arith.constant 2 : index
    %c2_138 = arith.constant 2 : index
    %130 = vector.load %arg11[%c0_136, %c19, %c2_137, %c2_138] : memref<1x20x14x14xf32, #tpu.memory_space<vmem>>, vector<1x1x10x10xf32>
    tpu.vector_store %arg11[%c0_136, %c19, %c2_137, %c2_138], %126 {strides = array<i32>} : memref<1x20x14x14xf32, #tpu.memory_space<vmem>>, vector<1x1x10x10xf32>,
    %c0_139 = arith.constant 0 : index
    %c0_140 = arith.constant 0 : index
    %c0_141 = arith.constant 0 : index
    %c0_142 = arith.constant 0 : index
    %131 = vector.load %arg10[%c0_139, %c0_140, %c0_141, %c0_142] : memref<1x10x12x12xf32, #tpu.memory_space<vmem>>, vector<1x1x12x12xf32>
    %c0_143 = arith.constant 0 : index
    %c0_144 = arith.constant 0 : index
    %132 = memref.load %arg4[%c0_143, %c0_144] : memref<10x5xf32, #tpu.memory_space<smem>>
    %133 = vector.broadcast %132 : f32 to vector<1x1x12x12xf32>
    %134 = arith.mulf %133, %131 : vector<1x1x12x12xf32>
    %c0_145 = arith.constant 0 : index
    %c1_146 = arith.constant 1 : index
    %135 = memref.load %arg4[%c0_145, %c1_146] : memref<10x5xf32, #tpu.memory_space<smem>>
    %136 = vector.broadcast %135 : f32 to vector<1x1x12x12xf32>
    %137 = arith.mulf %136, %131 : vector<1x1x12x12xf32>
    %c0_147 = arith.constant 0 : index
    %c2_148 = arith.constant 2 : index
    %138 = memref.load %arg4[%c0_147, %c2_148] : memref<10x5xf32, #tpu.memory_space<smem>>
    %139 = vector.broadcast %138 : f32 to vector<1x1x12x12xf32>
    %140 = arith.mulf %139, %131 : vector<1x1x12x12xf32>
    %c0_149 = arith.constant 0 : index
    %c3_150 = arith.constant 3 : index
    %141 = memref.load %arg4[%c0_149, %c3_150] : memref<10x5xf32, #tpu.memory_space<smem>>
    %142 = vector.broadcast %141 : f32 to vector<1x1x12x12xf32>
    %143 = arith.mulf %142, %131 : vector<1x1x12x12xf32>
    %c0_151 = arith.constant 0 : index
    %c4_152 = arith.constant 4 : index
    %144 = memref.load %arg4[%c0_151, %c4_152] : memref<10x5xf32, #tpu.memory_space<smem>>
    %145 = vector.broadcast %144 : f32 to vector<1x1x12x12xf32>
    %146 = arith.mulf %145, %131 : vector<1x1x12x12xf32>
    %c0_153 = arith.constant 0 : index
    %c1_154 = arith.constant 1 : index
    %c0_155 = arith.constant 0 : index
    %c0_156 = arith.constant 0 : index
    %147 = vector.load %arg10[%c0_153, %c1_154, %c0_155, %c0_156] : memref<1x10x12x12xf32, #tpu.memory_space<vmem>>, vector<1x1x12x12xf32>
    %c1_157 = arith.constant 1 : index
    %c0_158 = arith.constant 0 : index
    %148 = memref.load %arg4[%c1_157, %c0_158] : memref<10x5xf32, #tpu.memory_space<smem>>
    %149 = vector.broadcast %148 : f32 to vector<1x1x12x12xf32>
    %150 = arith.mulf %149, %147 : vector<1x1x12x12xf32>
    %151 = arith.addf %134, %150 : vector<1x1x12x12xf32>
    %c1_159 = arith.constant 1 : index
    %c1_160 = arith.constant 1 : index
    %152 = memref.load %arg4[%c1_159, %c1_160] : memref<10x5xf32, #tpu.memory_space<smem>>
    %153 = vector.broadcast %152 : f32 to vector<1x1x12x12xf32>
    %154 = arith.mulf %153, %147 : vector<1x1x12x12xf32>
    %155 = arith.addf %137, %154 : vector<1x1x12x12xf32>
    %c1_161 = arith.constant 1 : index
    %c2_162 = arith.constant 2 : index
    %156 = memref.load %arg4[%c1_161, %c2_162] : memref<10x5xf32, #tpu.memory_space<smem>>
    %157 = vector.broadcast %156 : f32 to vector<1x1x12x12xf32>
    %158 = arith.mulf %157, %147 : vector<1x1x12x12xf32>
    %159 = arith.addf %140, %158 : vector<1x1x12x12xf32>
    %c1_163 = arith.constant 1 : index
    %c3_164 = arith.constant 3 : index
    %160 = memref.load %arg4[%c1_163, %c3_164] : memref<10x5xf32, #tpu.memory_space<smem>>
    %161 = vector.broadcast %160 : f32 to vector<1x1x12x12xf32>
    %162 = arith.mulf %161, %147 : vector<1x1x12x12xf32>
    %163 = arith.addf %143, %162 : vector<1x1x12x12xf32>
    %c1_165 = arith.constant 1 : index
    %c4_166 = arith.constant 4 : index
    %164 = memref.load %arg4[%c1_165, %c4_166] : memref<10x5xf32, #tpu.memory_space<smem>>
    %165 = vector.broadcast %164 : f32 to vector<1x1x12x12xf32>
    %166 = arith.mulf %165, %147 : vector<1x1x12x12xf32>
    %167 = arith.addf %146, %166 : vector<1x1x12x12xf32>
    %c0_167 = arith.constant 0 : index
    %c2_168 = arith.constant 2 : index
    %c0_169 = arith.constant 0 : index
    %c0_170 = arith.constant 0 : index
    %168 = vector.load %arg10[%c0_167, %c2_168, %c0_169, %c0_170] : memref<1x10x12x12xf32, #tpu.memory_space<vmem>>, vector<1x1x12x12xf32>
    %c2_171 = arith.constant 2 : index
    %c0_172 = arith.constant 0 : index
    %169 = memref.load %arg4[%c2_171, %c0_172] : memref<10x5xf32, #tpu.memory_space<smem>>
    %170 = vector.broadcast %169 : f32 to vector<1x1x12x12xf32>
    %171 = arith.mulf %170, %168 : vector<1x1x12x12xf32>
    %172 = arith.addf %151, %171 : vector<1x1x12x12xf32>
    %c2_173 = arith.constant 2 : index
    %c1_174 = arith.constant 1 : index
    %173 = memref.load %arg4[%c2_173, %c1_174] : memref<10x5xf32, #tpu.memory_space<smem>>
    %174 = vector.broadcast %173 : f32 to vector<1x1x12x12xf32>
    %175 = arith.mulf %174, %168 : vector<1x1x12x12xf32>
    %176 = arith.addf %155, %175 : vector<1x1x12x12xf32>
    %c2_175 = arith.constant 2 : index
    %c2_176 = arith.constant 2 : index
    %177 = memref.load %arg4[%c2_175, %c2_176] : memref<10x5xf32, #tpu.memory_space<smem>>
    %178 = vector.broadcast %177 : f32 to vector<1x1x12x12xf32>
    %179 = arith.mulf %178, %168 : vector<1x1x12x12xf32>
    %180 = arith.addf %159, %179 : vector<1x1x12x12xf32>
    %c2_177 = arith.constant 2 : index
    %c3_178 = arith.constant 3 : index
    %181 = memref.load %arg4[%c2_177, %c3_178] : memref<10x5xf32, #tpu.memory_space<smem>>
    %182 = vector.broadcast %181 : f32 to vector<1x1x12x12xf32>
    %183 = arith.mulf %182, %168 : vector<1x1x12x12xf32>
    %184 = arith.addf %163, %183 : vector<1x1x12x12xf32>
    %c2_179 = arith.constant 2 : index
    %c4_180 = arith.constant 4 : index
    %185 = memref.load %arg4[%c2_179, %c4_180] : memref<10x5xf32, #tpu.memory_space<smem>>
    %186 = vector.broadcast %185 : f32 to vector<1x1x12x12xf32>
    %187 = arith.mulf %186, %168 : vector<1x1x12x12xf32>
    %188 = arith.addf %167, %187 : vector<1x1x12x12xf32>
    %c0_181 = arith.constant 0 : index
    %c3_182 = arith.constant 3 : index
    %c0_183 = arith.constant 0 : index
    %c0_184 = arith.constant 0 : index
    %189 = vector.load %arg10[%c0_181, %c3_182, %c0_183, %c0_184] : memref<1x10x12x12xf32, #tpu.memory_space<vmem>>, vector<1x1x12x12xf32>
    %c3_185 = arith.constant 3 : index
    %c0_186 = arith.constant 0 : index
    %190 = memref.load %arg4[%c3_185, %c0_186] : memref<10x5xf32, #tpu.memory_space<smem>>
    %191 = vector.broadcast %190 : f32 to vector<1x1x12x12xf32>
    %192 = arith.mulf %191, %189 : vector<1x1x12x12xf32>
    %193 = arith.addf %172, %192 : vector<1x1x12x12xf32>
    %c3_187 = arith.constant 3 : index
    %c1_188 = arith.constant 1 : index
    %194 = memref.load %arg4[%c3_187, %c1_188] : memref<10x5xf32, #tpu.memory_space<smem>>
    %195 = vector.broadcast %194 : f32 to vector<1x1x12x12xf32>
    %196 = arith.mulf %195, %189 : vector<1x1x12x12xf32>
    %197 = arith.addf %176, %196 : vector<1x1x12x12xf32>
    %c3_189 = arith.constant 3 : index
    %c2_190 = arith.constant 2 : index
    %198 = memref.load %arg4[%c3_189, %c2_190] : memref<10x5xf32, #tpu.memory_space<smem>>
    %199 = vector.broadcast %198 : f32 to vector<1x1x12x12xf32>
    %200 = arith.mulf %199, %189 : vector<1x1x12x12xf32>
    %201 = arith.addf %180, %200 : vector<1x1x12x12xf32>
    %c3_191 = arith.constant 3 : index
    %c3_192 = arith.constant 3 : index
    %202 = memref.load %arg4[%c3_191, %c3_192] : memref<10x5xf32, #tpu.memory_space<smem>>
    %203 = vector.broadcast %202 : f32 to vector<1x1x12x12xf32>
    %204 = arith.mulf %203, %189 : vector<1x1x12x12xf32>
    %205 = arith.addf %184, %204 : vector<1x1x12x12xf32>
    %c3_193 = arith.constant 3 : index
    %c4_194 = arith.constant 4 : index
    %206 = memref.load %arg4[%c3_193, %c4_194] : memref<10x5xf32, #tpu.memory_space<smem>>
    %207 = vector.broadcast %206 : f32 to vector<1x1x12x12xf32>
    %208 = arith.mulf %207, %189 : vector<1x1x12x12xf32>
    %209 = arith.addf %188, %208 : vector<1x1x12x12xf32>
    %c0_195 = arith.constant 0 : index
    %c4_196 = arith.constant 4 : index
    %c0_197 = arith.constant 0 : index
    %c0_198 = arith.constant 0 : index
    %210 = vector.load %arg10[%c0_195, %c4_196, %c0_197, %c0_198] : memref<1x10x12x12xf32, #tpu.memory_space<vmem>>, vector<1x1x12x12xf32>
    %c4_199 = arith.constant 4 : index
    %c0_200 = arith.constant 0 : index
    %211 = memref.load %arg4[%c4_199, %c0_200] : memref<10x5xf32, #tpu.memory_space<smem>>
    %212 = vector.broadcast %211 : f32 to vector<1x1x12x12xf32>
    %213 = arith.mulf %212, %210 : vector<1x1x12x12xf32>
    %214 = arith.addf %193, %213 : vector<1x1x12x12xf32>
    %c4_201 = arith.constant 4 : index
    %c1_202 = arith.constant 1 : index
    %215 = memref.load %arg4[%c4_201, %c1_202] : memref<10x5xf32, #tpu.memory_space<smem>>
    %216 = vector.broadcast %215 : f32 to vector<1x1x12x12xf32>
    %217 = arith.mulf %216, %210 : vector<1x1x12x12xf32>
    %218 = arith.addf %197, %217 : vector<1x1x12x12xf32>
    %c4_203 = arith.constant 4 : index
    %c2_204 = arith.constant 2 : index
    %219 = memref.load %arg4[%c4_203, %c2_204] : memref<10x5xf32, #tpu.memory_space<smem>>
    %220 = vector.broadcast %219 : f32 to vector<1x1x12x12xf32>
    %221 = arith.mulf %220, %210 : vector<1x1x12x12xf32>
    %222 = arith.addf %201, %221 : vector<1x1x12x12xf32>
    %c4_205 = arith.constant 4 : index
    %c3_206 = arith.constant 3 : index
    %223 = memref.load %arg4[%c4_205, %c3_206] : memref<10x5xf32, #tpu.memory_space<smem>>
    %224 = vector.broadcast %223 : f32 to vector<1x1x12x12xf32>
    %225 = arith.mulf %224, %210 : vector<1x1x12x12xf32>
    %226 = arith.addf %205, %225 : vector<1x1x12x12xf32>
    %c4_207 = arith.constant 4 : index
    %c4_208 = arith.constant 4 : index
    %227 = memref.load %arg4[%c4_207, %c4_208] : memref<10x5xf32, #tpu.memory_space<smem>>
    %228 = vector.broadcast %227 : f32 to vector<1x1x12x12xf32>
    %229 = arith.mulf %228, %210 : vector<1x1x12x12xf32>
    %230 = arith.addf %209, %229 : vector<1x1x12x12xf32>
    %c0_209 = arith.constant 0 : index
    %c5_210 = arith.constant 5 : index
    %c0_211 = arith.constant 0 : index
    %c0_212 = arith.constant 0 : index
    %231 = vector.load %arg10[%c0_209, %c5_210, %c0_211, %c0_212] : memref<1x10x12x12xf32, #tpu.memory_space<vmem>>, vector<1x1x12x12xf32>
    %c5_213 = arith.constant 5 : index
    %c0_214 = arith.constant 0 : index
    %232 = memref.load %arg4[%c5_213, %c0_214] : memref<10x5xf32, #tpu.memory_space<smem>>
    %233 = vector.broadcast %232 : f32 to vector<1x1x12x12xf32>
    %234 = arith.mulf %233, %231 : vector<1x1x12x12xf32>
    %235 = arith.addf %214, %234 : vector<1x1x12x12xf32>
    %c5_215 = arith.constant 5 : index
    %c1_216 = arith.constant 1 : index
    %236 = memref.load %arg4[%c5_215, %c1_216] : memref<10x5xf32, #tpu.memory_space<smem>>
    %237 = vector.broadcast %236 : f32 to vector<1x1x12x12xf32>
    %238 = arith.mulf %237, %231 : vector<1x1x12x12xf32>
    %239 = arith.addf %218, %238 : vector<1x1x12x12xf32>
    %c5_217 = arith.constant 5 : index
    %c2_218 = arith.constant 2 : index
    %240 = memref.load %arg4[%c5_217, %c2_218] : memref<10x5xf32, #tpu.memory_space<smem>>
    %241 = vector.broadcast %240 : f32 to vector<1x1x12x12xf32>
    %242 = arith.mulf %241, %231 : vector<1x1x12x12xf32>
    %243 = arith.addf %222, %242 : vector<1x1x12x12xf32>
    %c5_219 = arith.constant 5 : index
    %c3_220 = arith.constant 3 : index
    %244 = memref.load %arg4[%c5_219, %c3_220] : memref<10x5xf32, #tpu.memory_space<smem>>
    %245 = vector.broadcast %244 : f32 to vector<1x1x12x12xf32>
    %246 = arith.mulf %245, %231 : vector<1x1x12x12xf32>
    %247 = arith.addf %226, %246 : vector<1x1x12x12xf32>
    %c5_221 = arith.constant 5 : index
    %c4_222 = arith.constant 4 : index
    %248 = memref.load %arg4[%c5_221, %c4_222] : memref<10x5xf32, #tpu.memory_space<smem>>
    %249 = vector.broadcast %248 : f32 to vector<1x1x12x12xf32>
    %250 = arith.mulf %249, %231 : vector<1x1x12x12xf32>
    %251 = arith.addf %230, %250 : vector<1x1x12x12xf32>
    %c0_223 = arith.constant 0 : index
    %c6_224 = arith.constant 6 : index
    %c0_225 = arith.constant 0 : index
    %c0_226 = arith.constant 0 : index
    %252 = vector.load %arg10[%c0_223, %c6_224, %c0_225, %c0_226] : memref<1x10x12x12xf32, #tpu.memory_space<vmem>>, vector<1x1x12x12xf32>
    %c6_227 = arith.constant 6 : index
    %c0_228 = arith.constant 0 : index
    %253 = memref.load %arg4[%c6_227, %c0_228] : memref<10x5xf32, #tpu.memory_space<smem>>
    %254 = vector.broadcast %253 : f32 to vector<1x1x12x12xf32>
    %255 = arith.mulf %254, %252 : vector<1x1x12x12xf32>
    %256 = arith.addf %235, %255 : vector<1x1x12x12xf32>
    %c6_229 = arith.constant 6 : index
    %c1_230 = arith.constant 1 : index
    %257 = memref.load %arg4[%c6_229, %c1_230] : memref<10x5xf32, #tpu.memory_space<smem>>
    %258 = vector.broadcast %257 : f32 to vector<1x1x12x12xf32>
    %259 = arith.mulf %258, %252 : vector<1x1x12x12xf32>
    %260 = arith.addf %239, %259 : vector<1x1x12x12xf32>
    %c6_231 = arith.constant 6 : index
    %c2_232 = arith.constant 2 : index
    %261 = memref.load %arg4[%c6_231, %c2_232] : memref<10x5xf32, #tpu.memory_space<smem>>
    %262 = vector.broadcast %261 : f32 to vector<1x1x12x12xf32>
    %263 = arith.mulf %262, %252 : vector<1x1x12x12xf32>
    %264 = arith.addf %243, %263 : vector<1x1x12x12xf32>
    %c6_233 = arith.constant 6 : index
    %c3_234 = arith.constant 3 : index
    %265 = memref.load %arg4[%c6_233, %c3_234] : memref<10x5xf32, #tpu.memory_space<smem>>
    %266 = vector.broadcast %265 : f32 to vector<1x1x12x12xf32>
    %267 = arith.mulf %266, %252 : vector<1x1x12x12xf32>
    %268 = arith.addf %247, %267 : vector<1x1x12x12xf32>
    %c6_235 = arith.constant 6 : index
    %c4_236 = arith.constant 4 : index
    %269 = memref.load %arg4[%c6_235, %c4_236] : memref<10x5xf32, #tpu.memory_space<smem>>
    %270 = vector.broadcast %269 : f32 to vector<1x1x12x12xf32>
    %271 = arith.mulf %270, %252 : vector<1x1x12x12xf32>
    %272 = arith.addf %251, %271 : vector<1x1x12x12xf32>
    %c0_237 = arith.constant 0 : index
    %c7_238 = arith.constant 7 : index
    %c0_239 = arith.constant 0 : index
    %c0_240 = arith.constant 0 : index
    %273 = vector.load %arg10[%c0_237, %c7_238, %c0_239, %c0_240] : memref<1x10x12x12xf32, #tpu.memory_space<vmem>>, vector<1x1x12x12xf32>
    %c7_241 = arith.constant 7 : index
    %c0_242 = arith.constant 0 : index
    %274 = memref.load %arg4[%c7_241, %c0_242] : memref<10x5xf32, #tpu.memory_space<smem>>
    %275 = vector.broadcast %274 : f32 to vector<1x1x12x12xf32>
    %276 = arith.mulf %275, %273 : vector<1x1x12x12xf32>
    %277 = arith.addf %256, %276 : vector<1x1x12x12xf32>
    %c7_243 = arith.constant 7 : index
    %c1_244 = arith.constant 1 : index
    %278 = memref.load %arg4[%c7_243, %c1_244] : memref<10x5xf32, #tpu.memory_space<smem>>
    %279 = vector.broadcast %278 : f32 to vector<1x1x12x12xf32>
    %280 = arith.mulf %279, %273 : vector<1x1x12x12xf32>
    %281 = arith.addf %260, %280 : vector<1x1x12x12xf32>
    %c7_245 = arith.constant 7 : index
    %c2_246 = arith.constant 2 : index
    %282 = memref.load %arg4[%c7_245, %c2_246] : memref<10x5xf32, #tpu.memory_space<smem>>
    %283 = vector.broadcast %282 : f32 to vector<1x1x12x12xf32>
    %284 = arith.mulf %283, %273 : vector<1x1x12x12xf32>
    %285 = arith.addf %264, %284 : vector<1x1x12x12xf32>
    %c7_247 = arith.constant 7 : index
    %c3_248 = arith.constant 3 : index
    %286 = memref.load %arg4[%c7_247, %c3_248] : memref<10x5xf32, #tpu.memory_space<smem>>
    %287 = vector.broadcast %286 : f32 to vector<1x1x12x12xf32>
    %288 = arith.mulf %287, %273 : vector<1x1x12x12xf32>
    %289 = arith.addf %268, %288 : vector<1x1x12x12xf32>
    %c7_249 = arith.constant 7 : index
    %c4_250 = arith.constant 4 : index
    %290 = memref.load %arg4[%c7_249, %c4_250] : memref<10x5xf32, #tpu.memory_space<smem>>
    %291 = vector.broadcast %290 : f32 to vector<1x1x12x12xf32>
    %292 = arith.mulf %291, %273 : vector<1x1x12x12xf32>
    %293 = arith.addf %272, %292 : vector<1x1x12x12xf32>
    %c0_251 = arith.constant 0 : index
    %c8_252 = arith.constant 8 : index
    %c0_253 = arith.constant 0 : index
    %c0_254 = arith.constant 0 : index
    %294 = vector.load %arg10[%c0_251, %c8_252, %c0_253, %c0_254] : memref<1x10x12x12xf32, #tpu.memory_space<vmem>>, vector<1x1x12x12xf32>
    %c8_255 = arith.constant 8 : index
    %c0_256 = arith.constant 0 : index
    %295 = memref.load %arg4[%c8_255, %c0_256] : memref<10x5xf32, #tpu.memory_space<smem>>
    %296 = vector.broadcast %295 : f32 to vector<1x1x12x12xf32>
    %297 = arith.mulf %296, %294 : vector<1x1x12x12xf32>
    %298 = arith.addf %277, %297 : vector<1x1x12x12xf32>
    %c8_257 = arith.constant 8 : index
    %c1_258 = arith.constant 1 : index
    %299 = memref.load %arg4[%c8_257, %c1_258] : memref<10x5xf32, #tpu.memory_space<smem>>
    %300 = vector.broadcast %299 : f32 to vector<1x1x12x12xf32>
    %301 = arith.mulf %300, %294 : vector<1x1x12x12xf32>
    %302 = arith.addf %281, %301 : vector<1x1x12x12xf32>
    %c8_259 = arith.constant 8 : index
    %c2_260 = arith.constant 2 : index
    %303 = memref.load %arg4[%c8_259, %c2_260] : memref<10x5xf32, #tpu.memory_space<smem>>
    %304 = vector.broadcast %303 : f32 to vector<1x1x12x12xf32>
    %305 = arith.mulf %304, %294 : vector<1x1x12x12xf32>
    %306 = arith.addf %285, %305 : vector<1x1x12x12xf32>
    %c8_261 = arith.constant 8 : index
    %c3_262 = arith.constant 3 : index
    %307 = memref.load %arg4[%c8_261, %c3_262] : memref<10x5xf32, #tpu.memory_space<smem>>
    %308 = vector.broadcast %307 : f32 to vector<1x1x12x12xf32>
    %309 = arith.mulf %308, %294 : vector<1x1x12x12xf32>
    %310 = arith.addf %289, %309 : vector<1x1x12x12xf32>
    %c8_263 = arith.constant 8 : index
    %c4_264 = arith.constant 4 : index
    %311 = memref.load %arg4[%c8_263, %c4_264] : memref<10x5xf32, #tpu.memory_space<smem>>
    %312 = vector.broadcast %311 : f32 to vector<1x1x12x12xf32>
    %313 = arith.mulf %312, %294 : vector<1x1x12x12xf32>
    %314 = arith.addf %293, %313 : vector<1x1x12x12xf32>
    %c0_265 = arith.constant 0 : index
    %c9_266 = arith.constant 9 : index
    %c0_267 = arith.constant 0 : index
    %c0_268 = arith.constant 0 : index
    %315 = vector.load %arg10[%c0_265, %c9_266, %c0_267, %c0_268] : memref<1x10x12x12xf32, #tpu.memory_space<vmem>>, vector<1x1x12x12xf32>
    %c9_269 = arith.constant 9 : index
    %c0_270 = arith.constant 0 : index
    %316 = memref.load %arg4[%c9_269, %c0_270] : memref<10x5xf32, #tpu.memory_space<smem>>
    %317 = vector.broadcast %316 : f32 to vector<1x1x12x12xf32>
    %318 = arith.mulf %317, %315 : vector<1x1x12x12xf32>
    %319 = arith.addf %298, %318 : vector<1x1x12x12xf32>
    %c9_271 = arith.constant 9 : index
    %c1_272 = arith.constant 1 : index
    %320 = memref.load %arg4[%c9_271, %c1_272] : memref<10x5xf32, #tpu.memory_space<smem>>
    %321 = vector.broadcast %320 : f32 to vector<1x1x12x12xf32>
    %322 = arith.mulf %321, %315 : vector<1x1x12x12xf32>
    %323 = arith.addf %302, %322 : vector<1x1x12x12xf32>
    %c9_273 = arith.constant 9 : index
    %c2_274 = arith.constant 2 : index
    %324 = memref.load %arg4[%c9_273, %c2_274] : memref<10x5xf32, #tpu.memory_space<smem>>
    %325 = vector.broadcast %324 : f32 to vector<1x1x12x12xf32>
    %326 = arith.mulf %325, %315 : vector<1x1x12x12xf32>
    %327 = arith.addf %306, %326 : vector<1x1x12x12xf32>
    %c9_275 = arith.constant 9 : index
    %c3_276 = arith.constant 3 : index
    %328 = memref.load %arg4[%c9_275, %c3_276] : memref<10x5xf32, #tpu.memory_space<smem>>
    %329 = vector.broadcast %328 : f32 to vector<1x1x12x12xf32>
    %330 = arith.mulf %329, %315 : vector<1x1x12x12xf32>
    %331 = arith.addf %310, %330 : vector<1x1x12x12xf32>
    %c9_277 = arith.constant 9 : index
    %c4_278 = arith.constant 4 : index
    %332 = memref.load %arg4[%c9_277, %c4_278] : memref<10x5xf32, #tpu.memory_space<smem>>
    %333 = vector.broadcast %332 : f32 to vector<1x1x12x12xf32>
    %334 = arith.mulf %333, %315 : vector<1x1x12x12xf32>
    %335 = arith.addf %314, %334 : vector<1x1x12x12xf32>
    %c0_279 = arith.constant 0 : index
    %336 = memref.load %arg5[%c0_279] : memref<5xf32, #tpu.memory_space<smem>>
    %337 = vector.broadcast %336 : f32 to vector<1x1x12x12xf32>
    %338 = arith.addf %319, %337 : vector<1x1x12x12xf32>
    %c1_280 = arith.constant 1 : index
    %339 = memref.load %arg5[%c1_280] : memref<5xf32, #tpu.memory_space<smem>>
    %340 = vector.broadcast %339 : f32 to vector<1x1x12x12xf32>
    %341 = arith.addf %323, %340 : vector<1x1x12x12xf32>
    %c2_281 = arith.constant 2 : index
    %342 = memref.load %arg5[%c2_281] : memref<5xf32, #tpu.memory_space<smem>>
    %343 = vector.broadcast %342 : f32 to vector<1x1x12x12xf32>
    %344 = arith.addf %327, %343 : vector<1x1x12x12xf32>
    %c3_282 = arith.constant 3 : index
    %345 = memref.load %arg5[%c3_282] : memref<5xf32, #tpu.memory_space<smem>>
    %346 = vector.broadcast %345 : f32 to vector<1x1x12x12xf32>
    %347 = arith.addf %331, %346 : vector<1x1x12x12xf32>
    %c4_283 = arith.constant 4 : index
    %348 = memref.load %arg5[%c4_283] : memref<5xf32, #tpu.memory_space<smem>>
    %349 = vector.broadcast %348 : f32 to vector<1x1x12x12xf32>
    %350 = arith.addf %335, %349 : vector<1x1x12x12xf32>
    %351 = arith.negf %338 : vector<1x1x12x12xf32>
    %352 = math.exp %351 : vector<1x1x12x12xf32>
    %cst_284 = arith.constant 1.000000e+00 : f32
    %353 = vector.broadcast %cst_284 : f32 to vector<1x1x12x12xf32>
    %354 = arith.addf %353, %352 : vector<1x1x12x12xf32>
    %355 = arith.divf %353, %354 : vector<1x1x12x12xf32>
    %356 = arith.mulf %338, %355 : vector<1x1x12x12xf32>
    %c0_285 = arith.constant 0 : index
    %c0_286 = arith.constant 0 : index
    %c1_287 = arith.constant 1 : index
    %c1_288 = arith.constant 1 : index
    %357 = vector.load %arg11[%c0_285, %c0_286, %c1_287, %c1_288] : memref<1x20x14x14xf32, #tpu.memory_space<vmem>>, vector<1x1x12x12xf32>
    tpu.vector_store %arg11[%c0_285, %c0_286, %c1_287, %c1_288], %356 {strides = array<i32>} : memref<1x20x14x14xf32, #tpu.memory_space<vmem>>, vector<1x1x12x12xf32>,
    %c0_289 = arith.constant 0 : index
    %c10 = arith.constant 10 : index
    %c1_290 = arith.constant 1 : index
    %c1_291 = arith.constant 1 : index
    %358 = vector.load %arg11[%c0_289, %c10, %c1_290, %c1_291] : memref<1x20x14x14xf32, #tpu.memory_space<vmem>>, vector<1x1x12x12xf32>
    tpu.vector_store %arg11[%c0_289, %c10, %c1_290, %c1_291], %338 {strides = array<i32>} : memref<1x20x14x14xf32, #tpu.memory_space<vmem>>, vector<1x1x12x12xf32>,
    %359 = arith.negf %341 : vector<1x1x12x12xf32>
    %360 = math.exp %359 : vector<1x1x12x12xf32>
    %cst_292 = arith.constant 1.000000e+00 : f32
    %361 = vector.broadcast %cst_292 : f32 to vector<1x1x12x12xf32>
    %362 = arith.addf %361, %360 : vector<1x1x12x12xf32>
    %363 = arith.divf %361, %362 : vector<1x1x12x12xf32>
    %364 = arith.mulf %341, %363 : vector<1x1x12x12xf32>
    %c0_293 = arith.constant 0 : index
    %c1_294 = arith.constant 1 : index
    %c1_295 = arith.constant 1 : index
    %c1_296 = arith.constant 1 : index
    %365 = vector.load %arg11[%c0_293, %c1_294, %c1_295, %c1_296] : memref<1x20x14x14xf32, #tpu.memory_space<vmem>>, vector<1x1x12x12xf32>
    tpu.vector_store %arg11[%c0_293, %c1_294, %c1_295, %c1_296], %364 {strides = array<i32>} : memref<1x20x14x14xf32, #tpu.memory_space<vmem>>, vector<1x1x12x12xf32>,
    %c0_297 = arith.constant 0 : index
    %c11 = arith.constant 11 : index
    %c1_298 = arith.constant 1 : index
    %c1_299 = arith.constant 1 : index
    %366 = vector.load %arg11[%c0_297, %c11, %c1_298, %c1_299] : memref<1x20x14x14xf32, #tpu.memory_space<vmem>>, vector<1x1x12x12xf32>
    tpu.vector_store %arg11[%c0_297, %c11, %c1_298, %c1_299], %341 {strides = array<i32>} : memref<1x20x14x14xf32, #tpu.memory_space<vmem>>, vector<1x1x12x12xf32>,
    %367 = arith.negf %344 : vector<1x1x12x12xf32>
    %368 = math.exp %367 : vector<1x1x12x12xf32>
    %cst_300 = arith.constant 1.000000e+00 : f32
    %369 = vector.broadcast %cst_300 : f32 to vector<1x1x12x12xf32>
    %370 = arith.addf %369, %368 : vector<1x1x12x12xf32>
    %371 = arith.divf %369, %370 : vector<1x1x12x12xf32>
    %372 = arith.mulf %344, %371 : vector<1x1x12x12xf32>
    %c0_301 = arith.constant 0 : index
    %c2_302 = arith.constant 2 : index
    %c1_303 = arith.constant 1 : index
    %c1_304 = arith.constant 1 : index
    %373 = vector.load %arg11[%c0_301, %c2_302, %c1_303, %c1_304] : memref<1x20x14x14xf32, #tpu.memory_space<vmem>>, vector<1x1x12x12xf32>
    tpu.vector_store %arg11[%c0_301, %c2_302, %c1_303, %c1_304], %372 {strides = array<i32>} : memref<1x20x14x14xf32, #tpu.memory_space<vmem>>, vector<1x1x12x12xf32>,
    %c0_305 = arith.constant 0 : index
    %c12 = arith.constant 12 : index
    %c1_306 = arith.constant 1 : index
    %c1_307 = arith.constant 1 : index
    %374 = vector.load %arg11[%c0_305, %c12, %c1_306, %c1_307] : memref<1x20x14x14xf32, #tpu.memory_space<vmem>>, vector<1x1x12x12xf32>
    tpu.vector_store %arg11[%c0_305, %c12, %c1_306, %c1_307], %344 {strides = array<i32>} : memref<1x20x14x14xf32, #tpu.memory_space<vmem>>, vector<1x1x12x12xf32>,
    %375 = arith.negf %347 : vector<1x1x12x12xf32>
    %376 = math.exp %375 : vector<1x1x12x12xf32>
    %cst_308 = arith.constant 1.000000e+00 : f32
    %377 = vector.broadcast %cst_308 : f32 to vector<1x1x12x12xf32>
    %378 = arith.addf %377, %376 : vector<1x1x12x12xf32>
    %379 = arith.divf %377, %378 : vector<1x1x12x12xf32>
    %380 = arith.mulf %347, %379 : vector<1x1x12x12xf32>
    %c0_309 = arith.constant 0 : index
    %c3_310 = arith.constant 3 : index
    %c1_311 = arith.constant 1 : index
    %c1_312 = arith.constant 1 : index
    %381 = vector.load %arg11[%c0_309, %c3_310, %c1_311, %c1_312] : memref<1x20x14x14xf32, #tpu.memory_space<vmem>>, vector<1x1x12x12xf32>
    tpu.vector_store %arg11[%c0_309, %c3_310, %c1_311, %c1_312], %380 {strides = array<i32>} : memref<1x20x14x14xf32, #tpu.memory_space<vmem>>, vector<1x1x12x12xf32>,
    %c0_313 = arith.constant 0 : index
    %c13 = arith.constant 13 : index
    %c1_314 = arith.constant 1 : index
    %c1_315 = arith.constant 1 : index
    %382 = vector.load %arg11[%c0_313, %c13, %c1_314, %c1_315] : memref<1x20x14x14xf32, #tpu.memory_space<vmem>>, vector<1x1x12x12xf32>
    tpu.vector_store %arg11[%c0_313, %c13, %c1_314, %c1_315], %347 {strides = array<i32>} : memref<1x20x14x14xf32, #tpu.memory_space<vmem>>, vector<1x1x12x12xf32>,
    %383 = arith.negf %350 : vector<1x1x12x12xf32>
    %384 = math.exp %383 : vector<1x1x12x12xf32>
    %cst_316 = arith.constant 1.000000e+00 : f32
    %385 = vector.broadcast %cst_316 : f32 to vector<1x1x12x12xf32>
    %386 = arith.addf %385, %384 : vector<1x1x12x12xf32>
    %387 = arith.divf %385, %386 : vector<1x1x12x12xf32>
    %388 = arith.mulf %350, %387 : vector<1x1x12x12xf32>
    %c0_317 = arith.constant 0 : index
    %c4_318 = arith.constant 4 : index
    %c1_319 = arith.constant 1 : index
    %c1_320 = arith.constant 1 : index
    %389 = vector.load %arg11[%c0_317, %c4_318, %c1_319, %c1_320] : memref<1x20x14x14xf32, #tpu.memory_space<vmem>>, vector<1x1x12x12xf32>
    tpu.vector_store %arg11[%c0_317, %c4_318, %c1_319, %c1_320], %388 {strides = array<i32>} : memref<1x20x14x14xf32, #tpu.memory_space<vmem>>, vector<1x1x12x12xf32>,
    %c0_321 = arith.constant 0 : index
    %c14 = arith.constant 14 : index
    %c1_322 = arith.constant 1 : index
    %c1_323 = arith.constant 1 : index
    %390 = vector.load %arg11[%c0_321, %c14, %c1_322, %c1_323] : memref<1x20x14x14xf32, #tpu.memory_space<vmem>>, vector<1x1x12x12xf32>
    tpu.vector_store %arg11[%c0_321, %c14, %c1_322, %c1_323], %350 {strides = array<i32>} : memref<1x20x14x14xf32, #tpu.memory_space<vmem>>, vector<1x1x12x12xf32>,
    %c0_324 = arith.constant 0 : index
    %c0_325 = arith.constant 0 : index
    %c0_326 = arith.constant 0 : index
    %c0_327 = arith.constant 0 : index
    %391 = vector.load %arg11[%c0_324, %c0_325, %c0_326, %c0_327] : memref<1x20x14x14xf32, #tpu.memory_space<vmem>>, vector<1x1x14x14xf32>
    %c0_328 = arith.constant 0 : index
    %c0_329 = arith.constant 0 : index
    %392 = memref.load %arg6[%c0_328, %c0_329] : memref<20x3xf32, #tpu.memory_space<smem>>
    %393 = vector.broadcast %392 : f32 to vector<1x1x14x14xf32>
    %394 = arith.mulf %393, %391 : vector<1x1x14x14xf32>
    %c0_330 = arith.constant 0 : index
    %c1_331 = arith.constant 1 : index
    %395 = memref.load %arg6[%c0_330, %c1_331] : memref<20x3xf32, #tpu.memory_space<smem>>
    %396 = vector.broadcast %395 : f32 to vector<1x1x14x14xf32>
    %397 = arith.mulf %396, %391 : vector<1x1x14x14xf32>
    %c0_332 = arith.constant 0 : index
    %c2_333 = arith.constant 2 : index
    %398 = memref.load %arg6[%c0_332, %c2_333] : memref<20x3xf32, #tpu.memory_space<smem>>
    %399 = vector.broadcast %398 : f32 to vector<1x1x14x14xf32>
    %400 = arith.mulf %399, %391 : vector<1x1x14x14xf32>
    %c0_334 = arith.constant 0 : index
    %c1_335 = arith.constant 1 : index
    %c0_336 = arith.constant 0 : index
    %c0_337 = arith.constant 0 : index
    %401 = vector.load %arg11[%c0_334, %c1_335, %c0_336, %c0_337] : memref<1x20x14x14xf32, #tpu.memory_space<vmem>>, vector<1x1x14x14xf32>
    %c1_338 = arith.constant 1 : index
    %c0_339 = arith.constant 0 : index
    %402 = memref.load %arg6[%c1_338, %c0_339] : memref<20x3xf32, #tpu.memory_space<smem>>
    %403 = vector.broadcast %402 : f32 to vector<1x1x14x14xf32>
    %404 = arith.mulf %403, %401 : vector<1x1x14x14xf32>
    %405 = arith.addf %394, %404 : vector<1x1x14x14xf32>
    %c1_340 = arith.constant 1 : index
    %c1_341 = arith.constant 1 : index
    %406 = memref.load %arg6[%c1_340, %c1_341] : memref<20x3xf32, #tpu.memory_space<smem>>
    %407 = vector.broadcast %406 : f32 to vector<1x1x14x14xf32>
    %408 = arith.mulf %407, %401 : vector<1x1x14x14xf32>
    %409 = arith.addf %397, %408 : vector<1x1x14x14xf32>
    %c1_342 = arith.constant 1 : index
    %c2_343 = arith.constant 2 : index
    %410 = memref.load %arg6[%c1_342, %c2_343] : memref<20x3xf32, #tpu.memory_space<smem>>
    %411 = vector.broadcast %410 : f32 to vector<1x1x14x14xf32>
    %412 = arith.mulf %411, %401 : vector<1x1x14x14xf32>
    %413 = arith.addf %400, %412 : vector<1x1x14x14xf32>
    %c0_344 = arith.constant 0 : index
    %c2_345 = arith.constant 2 : index
    %c0_346 = arith.constant 0 : index
    %c0_347 = arith.constant 0 : index
    %414 = vector.load %arg11[%c0_344, %c2_345, %c0_346, %c0_347] : memref<1x20x14x14xf32, #tpu.memory_space<vmem>>, vector<1x1x14x14xf32>
    %c2_348 = arith.constant 2 : index
    %c0_349 = arith.constant 0 : index
    %415 = memref.load %arg6[%c2_348, %c0_349] : memref<20x3xf32, #tpu.memory_space<smem>>
    %416 = vector.broadcast %415 : f32 to vector<1x1x14x14xf32>
    %417 = arith.mulf %416, %414 : vector<1x1x14x14xf32>
    %418 = arith.addf %405, %417 : vector<1x1x14x14xf32>
    %c2_350 = arith.constant 2 : index
    %c1_351 = arith.constant 1 : index
    %419 = memref.load %arg6[%c2_350, %c1_351] : memref<20x3xf32, #tpu.memory_space<smem>>
    %420 = vector.broadcast %419 : f32 to vector<1x1x14x14xf32>
    %421 = arith.mulf %420, %414 : vector<1x1x14x14xf32>
    %422 = arith.addf %409, %421 : vector<1x1x14x14xf32>
    %c2_352 = arith.constant 2 : index
    %c2_353 = arith.constant 2 : index
    %423 = memref.load %arg6[%c2_352, %c2_353] : memref<20x3xf32, #tpu.memory_space<smem>>
    %424 = vector.broadcast %423 : f32 to vector<1x1x14x14xf32>
    %425 = arith.mulf %424, %414 : vector<1x1x14x14xf32>
    %426 = arith.addf %413, %425 : vector<1x1x14x14xf32>
    %c0_354 = arith.constant 0 : index
    %c3_355 = arith.constant 3 : index
    %c0_356 = arith.constant 0 : index
    %c0_357 = arith.constant 0 : index
    %427 = vector.load %arg11[%c0_354, %c3_355, %c0_356, %c0_357] : memref<1x20x14x14xf32, #tpu.memory_space<vmem>>, vector<1x1x14x14xf32>
    %c3_358 = arith.constant 3 : index
    %c0_359 = arith.constant 0 : index
    %428 = memref.load %arg6[%c3_358, %c0_359] : memref<20x3xf32, #tpu.memory_space<smem>>
    %429 = vector.broadcast %428 : f32 to vector<1x1x14x14xf32>
    %430 = arith.mulf %429, %427 : vector<1x1x14x14xf32>
    %431 = arith.addf %418, %430 : vector<1x1x14x14xf32>
    %c3_360 = arith.constant 3 : index
    %c1_361 = arith.constant 1 : index
    %432 = memref.load %arg6[%c3_360, %c1_361] : memref<20x3xf32, #tpu.memory_space<smem>>
    %433 = vector.broadcast %432 : f32 to vector<1x1x14x14xf32>
    %434 = arith.mulf %433, %427 : vector<1x1x14x14xf32>
    %435 = arith.addf %422, %434 : vector<1x1x14x14xf32>
    %c3_362 = arith.constant 3 : index
    %c2_363 = arith.constant 2 : index
    %436 = memref.load %arg6[%c3_362, %c2_363] : memref<20x3xf32, #tpu.memory_space<smem>>
    %437 = vector.broadcast %436 : f32 to vector<1x1x14x14xf32>
    %438 = arith.mulf %437, %427 : vector<1x1x14x14xf32>
    %439 = arith.addf %426, %438 : vector<1x1x14x14xf32>
    %c0_364 = arith.constant 0 : index
    %c4_365 = arith.constant 4 : index
    %c0_366 = arith.constant 0 : index
    %c0_367 = arith.constant 0 : index
    %440 = vector.load %arg11[%c0_364, %c4_365, %c0_366, %c0_367] : memref<1x20x14x14xf32, #tpu.memory_space<vmem>>, vector<1x1x14x14xf32>
    %c4_368 = arith.constant 4 : index
    %c0_369 = arith.constant 0 : index
    %441 = memref.load %arg6[%c4_368, %c0_369] : memref<20x3xf32, #tpu.memory_space<smem>>
    %442 = vector.broadcast %441 : f32 to vector<1x1x14x14xf32>
    %443 = arith.mulf %442, %440 : vector<1x1x14x14xf32>
    %444 = arith.addf %431, %443 : vector<1x1x14x14xf32>
    %c4_370 = arith.constant 4 : index
    %c1_371 = arith.constant 1 : index
    %445 = memref.load %arg6[%c4_370, %c1_371] : memref<20x3xf32, #tpu.memory_space<smem>>
    %446 = vector.broadcast %445 : f32 to vector<1x1x14x14xf32>
    %447 = arith.mulf %446, %440 : vector<1x1x14x14xf32>
    %448 = arith.addf %435, %447 : vector<1x1x14x14xf32>
    %c4_372 = arith.constant 4 : index
    %c2_373 = arith.constant 2 : index
    %449 = memref.load %arg6[%c4_372, %c2_373] : memref<20x3xf32, #tpu.memory_space<smem>>
    %450 = vector.broadcast %449 : f32 to vector<1x1x14x14xf32>
    %451 = arith.mulf %450, %440 : vector<1x1x14x14xf32>
    %452 = arith.addf %439, %451 : vector<1x1x14x14xf32>
    %c0_374 = arith.constant 0 : index
    %c5_375 = arith.constant 5 : index
    %c0_376 = arith.constant 0 : index
    %c0_377 = arith.constant 0 : index
    %453 = vector.load %arg11[%c0_374, %c5_375, %c0_376, %c0_377] : memref<1x20x14x14xf32, #tpu.memory_space<vmem>>, vector<1x1x14x14xf32>
    %c5_378 = arith.constant 5 : index
    %c0_379 = arith.constant 0 : index
    %454 = memref.load %arg6[%c5_378, %c0_379] : memref<20x3xf32, #tpu.memory_space<smem>>
    %455 = vector.broadcast %454 : f32 to vector<1x1x14x14xf32>
    %456 = arith.mulf %455, %453 : vector<1x1x14x14xf32>
    %457 = arith.addf %444, %456 : vector<1x1x14x14xf32>
    %c5_380 = arith.constant 5 : index
    %c1_381 = arith.constant 1 : index
    %458 = memref.load %arg6[%c5_380, %c1_381] : memref<20x3xf32, #tpu.memory_space<smem>>
    %459 = vector.broadcast %458 : f32 to vector<1x1x14x14xf32>
    %460 = arith.mulf %459, %453 : vector<1x1x14x14xf32>
    %461 = arith.addf %448, %460 : vector<1x1x14x14xf32>
    %c5_382 = arith.constant 5 : index
    %c2_383 = arith.constant 2 : index
    %462 = memref.load %arg6[%c5_382, %c2_383] : memref<20x3xf32, #tpu.memory_space<smem>>
    %463 = vector.broadcast %462 : f32 to vector<1x1x14x14xf32>
    %464 = arith.mulf %463, %453 : vector<1x1x14x14xf32>
    %465 = arith.addf %452, %464 : vector<1x1x14x14xf32>
    %c0_384 = arith.constant 0 : index
    %c6_385 = arith.constant 6 : index
    %c0_386 = arith.constant 0 : index
    %c0_387 = arith.constant 0 : index
    %466 = vector.load %arg11[%c0_384, %c6_385, %c0_386, %c0_387] : memref<1x20x14x14xf32, #tpu.memory_space<vmem>>, vector<1x1x14x14xf32>
    %c6_388 = arith.constant 6 : index
    %c0_389 = arith.constant 0 : index
    %467 = memref.load %arg6[%c6_388, %c0_389] : memref<20x3xf32, #tpu.memory_space<smem>>
    %468 = vector.broadcast %467 : f32 to vector<1x1x14x14xf32>
    %469 = arith.mulf %468, %466 : vector<1x1x14x14xf32>
    %470 = arith.addf %457, %469 : vector<1x1x14x14xf32>
    %c6_390 = arith.constant 6 : index
    %c1_391 = arith.constant 1 : index
    %471 = memref.load %arg6[%c6_390, %c1_391] : memref<20x3xf32, #tpu.memory_space<smem>>
    %472 = vector.broadcast %471 : f32 to vector<1x1x14x14xf32>
    %473 = arith.mulf %472, %466 : vector<1x1x14x14xf32>
    %474 = arith.addf %461, %473 : vector<1x1x14x14xf32>
    %c6_392 = arith.constant 6 : index
    %c2_393 = arith.constant 2 : index
    %475 = memref.load %arg6[%c6_392, %c2_393] : memref<20x3xf32, #tpu.memory_space<smem>>
    %476 = vector.broadcast %475 : f32 to vector<1x1x14x14xf32>
    %477 = arith.mulf %476, %466 : vector<1x1x14x14xf32>
    %478 = arith.addf %465, %477 : vector<1x1x14x14xf32>
    %c0_394 = arith.constant 0 : index
    %c7_395 = arith.constant 7 : index
    %c0_396 = arith.constant 0 : index
    %c0_397 = arith.constant 0 : index
    %479 = vector.load %arg11[%c0_394, %c7_395, %c0_396, %c0_397] : memref<1x20x14x14xf32, #tpu.memory_space<vmem>>, vector<1x1x14x14xf32>
    %c7_398 = arith.constant 7 : index
    %c0_399 = arith.constant 0 : index
    %480 = memref.load %arg6[%c7_398, %c0_399] : memref<20x3xf32, #tpu.memory_space<smem>>
    %481 = vector.broadcast %480 : f32 to vector<1x1x14x14xf32>
    %482 = arith.mulf %481, %479 : vector<1x1x14x14xf32>
    %483 = arith.addf %470, %482 : vector<1x1x14x14xf32>
    %c7_400 = arith.constant 7 : index
    %c1_401 = arith.constant 1 : index
    %484 = memref.load %arg6[%c7_400, %c1_401] : memref<20x3xf32, #tpu.memory_space<smem>>
    %485 = vector.broadcast %484 : f32 to vector<1x1x14x14xf32>
    %486 = arith.mulf %485, %479 : vector<1x1x14x14xf32>
    %487 = arith.addf %474, %486 : vector<1x1x14x14xf32>
    %c7_402 = arith.constant 7 : index
    %c2_403 = arith.constant 2 : index
    %488 = memref.load %arg6[%c7_402, %c2_403] : memref<20x3xf32, #tpu.memory_space<smem>>
    %489 = vector.broadcast %488 : f32 to vector<1x1x14x14xf32>
    %490 = arith.mulf %489, %479 : vector<1x1x14x14xf32>
    %491 = arith.addf %478, %490 : vector<1x1x14x14xf32>
    %c0_404 = arith.constant 0 : index
    %c8_405 = arith.constant 8 : index
    %c0_406 = arith.constant 0 : index
    %c0_407 = arith.constant 0 : index
    %492 = vector.load %arg11[%c0_404, %c8_405, %c0_406, %c0_407] : memref<1x20x14x14xf32, #tpu.memory_space<vmem>>, vector<1x1x14x14xf32>
    %c8_408 = arith.constant 8 : index
    %c0_409 = arith.constant 0 : index
    %493 = memref.load %arg6[%c8_408, %c0_409] : memref<20x3xf32, #tpu.memory_space<smem>>
    %494 = vector.broadcast %493 : f32 to vector<1x1x14x14xf32>
    %495 = arith.mulf %494, %492 : vector<1x1x14x14xf32>
    %496 = arith.addf %483, %495 : vector<1x1x14x14xf32>
    %c8_410 = arith.constant 8 : index
    %c1_411 = arith.constant 1 : index
    %497 = memref.load %arg6[%c8_410, %c1_411] : memref<20x3xf32, #tpu.memory_space<smem>>
    %498 = vector.broadcast %497 : f32 to vector<1x1x14x14xf32>
    %499 = arith.mulf %498, %492 : vector<1x1x14x14xf32>
    %500 = arith.addf %487, %499 : vector<1x1x14x14xf32>
    %c8_412 = arith.constant 8 : index
    %c2_413 = arith.constant 2 : index
    %501 = memref.load %arg6[%c8_412, %c2_413] : memref<20x3xf32, #tpu.memory_space<smem>>
    %502 = vector.broadcast %501 : f32 to vector<1x1x14x14xf32>
    %503 = arith.mulf %502, %492 : vector<1x1x14x14xf32>
    %504 = arith.addf %491, %503 : vector<1x1x14x14xf32>
    %c0_414 = arith.constant 0 : index
    %c9_415 = arith.constant 9 : index
    %c0_416 = arith.constant 0 : index
    %c0_417 = arith.constant 0 : index
    %505 = vector.load %arg11[%c0_414, %c9_415, %c0_416, %c0_417] : memref<1x20x14x14xf32, #tpu.memory_space<vmem>>, vector<1x1x14x14xf32>
    %c9_418 = arith.constant 9 : index
    %c0_419 = arith.constant 0 : index
    %506 = memref.load %arg6[%c9_418, %c0_419] : memref<20x3xf32, #tpu.memory_space<smem>>
    %507 = vector.broadcast %506 : f32 to vector<1x1x14x14xf32>
    %508 = arith.mulf %507, %505 : vector<1x1x14x14xf32>
    %509 = arith.addf %496, %508 : vector<1x1x14x14xf32>
    %c9_420 = arith.constant 9 : index
    %c1_421 = arith.constant 1 : index
    %510 = memref.load %arg6[%c9_420, %c1_421] : memref<20x3xf32, #tpu.memory_space<smem>>
    %511 = vector.broadcast %510 : f32 to vector<1x1x14x14xf32>
    %512 = arith.mulf %511, %505 : vector<1x1x14x14xf32>
    %513 = arith.addf %500, %512 : vector<1x1x14x14xf32>
    %c9_422 = arith.constant 9 : index
    %c2_423 = arith.constant 2 : index
    %514 = memref.load %arg6[%c9_422, %c2_423] : memref<20x3xf32, #tpu.memory_space<smem>>
    %515 = vector.broadcast %514 : f32 to vector<1x1x14x14xf32>
    %516 = arith.mulf %515, %505 : vector<1x1x14x14xf32>
    %517 = arith.addf %504, %516 : vector<1x1x14x14xf32>
    %c0_424 = arith.constant 0 : index
    %c10_425 = arith.constant 10 : index
    %c0_426 = arith.constant 0 : index
    %c0_427 = arith.constant 0 : index
    %518 = vector.load %arg11[%c0_424, %c10_425, %c0_426, %c0_427] : memref<1x20x14x14xf32, #tpu.memory_space<vmem>>, vector<1x1x14x14xf32>
    %c10_428 = arith.constant 10 : index
    %c0_429 = arith.constant 0 : index
    %519 = memref.load %arg6[%c10_428, %c0_429] : memref<20x3xf32, #tpu.memory_space<smem>>
    %520 = vector.broadcast %519 : f32 to vector<1x1x14x14xf32>
    %521 = arith.mulf %520, %518 : vector<1x1x14x14xf32>
    %522 = arith.addf %509, %521 : vector<1x1x14x14xf32>
    %c10_430 = arith.constant 10 : index
    %c1_431 = arith.constant 1 : index
    %523 = memref.load %arg6[%c10_430, %c1_431] : memref<20x3xf32, #tpu.memory_space<smem>>
    %524 = vector.broadcast %523 : f32 to vector<1x1x14x14xf32>
    %525 = arith.mulf %524, %518 : vector<1x1x14x14xf32>
    %526 = arith.addf %513, %525 : vector<1x1x14x14xf32>
    %c10_432 = arith.constant 10 : index
    %c2_433 = arith.constant 2 : index
    %527 = memref.load %arg6[%c10_432, %c2_433] : memref<20x3xf32, #tpu.memory_space<smem>>
    %528 = vector.broadcast %527 : f32 to vector<1x1x14x14xf32>
    %529 = arith.mulf %528, %518 : vector<1x1x14x14xf32>
    %530 = arith.addf %517, %529 : vector<1x1x14x14xf32>
    %c0_434 = arith.constant 0 : index
    %c11_435 = arith.constant 11 : index
    %c0_436 = arith.constant 0 : index
    %c0_437 = arith.constant 0 : index
    %531 = vector.load %arg11[%c0_434, %c11_435, %c0_436, %c0_437] : memref<1x20x14x14xf32, #tpu.memory_space<vmem>>, vector<1x1x14x14xf32>
    %c11_438 = arith.constant 11 : index
    %c0_439 = arith.constant 0 : index
    %532 = memref.load %arg6[%c11_438, %c0_439] : memref<20x3xf32, #tpu.memory_space<smem>>
    %533 = vector.broadcast %532 : f32 to vector<1x1x14x14xf32>
    %534 = arith.mulf %533, %531 : vector<1x1x14x14xf32>
    %535 = arith.addf %522, %534 : vector<1x1x14x14xf32>
    %c11_440 = arith.constant 11 : index
    %c1_441 = arith.constant 1 : index
    %536 = memref.load %arg6[%c11_440, %c1_441] : memref<20x3xf32, #tpu.memory_space<smem>>
    %537 = vector.broadcast %536 : f32 to vector<1x1x14x14xf32>
    %538 = arith.mulf %537, %531 : vector<1x1x14x14xf32>
    %539 = arith.addf %526, %538 : vector<1x1x14x14xf32>
    %c11_442 = arith.constant 11 : index
    %c2_443 = arith.constant 2 : index
    %540 = memref.load %arg6[%c11_442, %c2_443] : memref<20x3xf32, #tpu.memory_space<smem>>
    %541 = vector.broadcast %540 : f32 to vector<1x1x14x14xf32>
    %542 = arith.mulf %541, %531 : vector<1x1x14x14xf32>
    %543 = arith.addf %530, %542 : vector<1x1x14x14xf32>
    %c0_444 = arith.constant 0 : index
    %c12_445 = arith.constant 12 : index
    %c0_446 = arith.constant 0 : index
    %c0_447 = arith.constant 0 : index
    %544 = vector.load %arg11[%c0_444, %c12_445, %c0_446, %c0_447] : memref<1x20x14x14xf32, #tpu.memory_space<vmem>>, vector<1x1x14x14xf32>
    %c12_448 = arith.constant 12 : index
    %c0_449 = arith.constant 0 : index
    %545 = memref.load %arg6[%c12_448, %c0_449] : memref<20x3xf32, #tpu.memory_space<smem>>
    %546 = vector.broadcast %545 : f32 to vector<1x1x14x14xf32>
    %547 = arith.mulf %546, %544 : vector<1x1x14x14xf32>
    %548 = arith.addf %535, %547 : vector<1x1x14x14xf32>
    %c12_450 = arith.constant 12 : index
    %c1_451 = arith.constant 1 : index
    %549 = memref.load %arg6[%c12_450, %c1_451] : memref<20x3xf32, #tpu.memory_space<smem>>
    %550 = vector.broadcast %549 : f32 to vector<1x1x14x14xf32>
    %551 = arith.mulf %550, %544 : vector<1x1x14x14xf32>
    %552 = arith.addf %539, %551 : vector<1x1x14x14xf32>
    %c12_452 = arith.constant 12 : index
    %c2_453 = arith.constant 2 : index
    %553 = memref.load %arg6[%c12_452, %c2_453] : memref<20x3xf32, #tpu.memory_space<smem>>
    %554 = vector.broadcast %553 : f32 to vector<1x1x14x14xf32>
    %555 = arith.mulf %554, %544 : vector<1x1x14x14xf32>
    %556 = arith.addf %543, %555 : vector<1x1x14x14xf32>
    %c0_454 = arith.constant 0 : index
    %c13_455 = arith.constant 13 : index
    %c0_456 = arith.constant 0 : index
    %c0_457 = arith.constant 0 : index
    %557 = vector.load %arg11[%c0_454, %c13_455, %c0_456, %c0_457] : memref<1x20x14x14xf32, #tpu.memory_space<vmem>>, vector<1x1x14x14xf32>
    %c13_458 = arith.constant 13 : index
    %c0_459 = arith.constant 0 : index
    %558 = memref.load %arg6[%c13_458, %c0_459] : memref<20x3xf32, #tpu.memory_space<smem>>
    %559 = vector.broadcast %558 : f32 to vector<1x1x14x14xf32>
    %560 = arith.mulf %559, %557 : vector<1x1x14x14xf32>
    %561 = arith.addf %548, %560 : vector<1x1x14x14xf32>
    %c13_460 = arith.constant 13 : index
    %c1_461 = arith.constant 1 : index
    %562 = memref.load %arg6[%c13_460, %c1_461] : memref<20x3xf32, #tpu.memory_space<smem>>
    %563 = vector.broadcast %562 : f32 to vector<1x1x14x14xf32>
    %564 = arith.mulf %563, %557 : vector<1x1x14x14xf32>
    %565 = arith.addf %552, %564 : vector<1x1x14x14xf32>
    %c13_462 = arith.constant 13 : index
    %c2_463 = arith.constant 2 : index
    %566 = memref.load %arg6[%c13_462, %c2_463] : memref<20x3xf32, #tpu.memory_space<smem>>
    %567 = vector.broadcast %566 : f32 to vector<1x1x14x14xf32>
    %568 = arith.mulf %567, %557 : vector<1x1x14x14xf32>
    %569 = arith.addf %556, %568 : vector<1x1x14x14xf32>
    %c0_464 = arith.constant 0 : index
    %c14_465 = arith.constant 14 : index
    %c0_466 = arith.constant 0 : index
    %c0_467 = arith.constant 0 : index
    %570 = vector.load %arg11[%c0_464, %c14_465, %c0_466, %c0_467] : memref<1x20x14x14xf32, #tpu.memory_space<vmem>>, vector<1x1x14x14xf32>
    %c14_468 = arith.constant 14 : index
    %c0_469 = arith.constant 0 : index
    %571 = memref.load %arg6[%c14_468, %c0_469] : memref<20x3xf32, #tpu.memory_space<smem>>
    %572 = vector.broadcast %571 : f32 to vector<1x1x14x14xf32>
    %573 = arith.mulf %572, %570 : vector<1x1x14x14xf32>
    %574 = arith.addf %561, %573 : vector<1x1x14x14xf32>
    %c14_470 = arith.constant 14 : index
    %c1_471 = arith.constant 1 : index
    %575 = memref.load %arg6[%c14_470, %c1_471] : memref<20x3xf32, #tpu.memory_space<smem>>
    %576 = vector.broadcast %575 : f32 to vector<1x1x14x14xf32>
    %577 = arith.mulf %576, %570 : vector<1x1x14x14xf32>
    %578 = arith.addf %565, %577 : vector<1x1x14x14xf32>
    %c14_472 = arith.constant 14 : index
    %c2_473 = arith.constant 2 : index
    %579 = memref.load %arg6[%c14_472, %c2_473] : memref<20x3xf32, #tpu.memory_space<smem>>
    %580 = vector.broadcast %579 : f32 to vector<1x1x14x14xf32>
    %581 = arith.mulf %580, %570 : vector<1x1x14x14xf32>
    %582 = arith.addf %569, %581 : vector<1x1x14x14xf32>
    %c0_474 = arith.constant 0 : index
    %c15_475 = arith.constant 15 : index
    %c0_476 = arith.constant 0 : index
    %c0_477 = arith.constant 0 : index
    %583 = vector.load %arg11[%c0_474, %c15_475, %c0_476, %c0_477] : memref<1x20x14x14xf32, #tpu.memory_space<vmem>>, vector<1x1x14x14xf32>
    %c15_478 = arith.constant 15 : index
    %c0_479 = arith.constant 0 : index
    %584 = memref.load %arg6[%c15_478, %c0_479] : memref<20x3xf32, #tpu.memory_space<smem>>
    %585 = vector.broadcast %584 : f32 to vector<1x1x14x14xf32>
    %586 = arith.mulf %585, %583 : vector<1x1x14x14xf32>
    %587 = arith.addf %574, %586 : vector<1x1x14x14xf32>
    %c15_480 = arith.constant 15 : index
    %c1_481 = arith.constant 1 : index
    %588 = memref.load %arg6[%c15_480, %c1_481] : memref<20x3xf32, #tpu.memory_space<smem>>
    %589 = vector.broadcast %588 : f32 to vector<1x1x14x14xf32>
    %590 = arith.mulf %589, %583 : vector<1x1x14x14xf32>
    %591 = arith.addf %578, %590 : vector<1x1x14x14xf32>
    %c15_482 = arith.constant 15 : index
    %c2_483 = arith.constant 2 : index
    %592 = memref.load %arg6[%c15_482, %c2_483] : memref<20x3xf32, #tpu.memory_space<smem>>
    %593 = vector.broadcast %592 : f32 to vector<1x1x14x14xf32>
    %594 = arith.mulf %593, %583 : vector<1x1x14x14xf32>
    %595 = arith.addf %582, %594 : vector<1x1x14x14xf32>
    %c0_484 = arith.constant 0 : index
    %c16_485 = arith.constant 16 : index
    %c0_486 = arith.constant 0 : index
    %c0_487 = arith.constant 0 : index
    %596 = vector.load %arg11[%c0_484, %c16_485, %c0_486, %c0_487] : memref<1x20x14x14xf32, #tpu.memory_space<vmem>>, vector<1x1x14x14xf32>
    %c16_488 = arith.constant 16 : index
    %c0_489 = arith.constant 0 : index
    %597 = memref.load %arg6[%c16_488, %c0_489] : memref<20x3xf32, #tpu.memory_space<smem>>
    %598 = vector.broadcast %597 : f32 to vector<1x1x14x14xf32>
    %599 = arith.mulf %598, %596 : vector<1x1x14x14xf32>
    %600 = arith.addf %587, %599 : vector<1x1x14x14xf32>
    %c16_490 = arith.constant 16 : index
    %c1_491 = arith.constant 1 : index
    %601 = memref.load %arg6[%c16_490, %c1_491] : memref<20x3xf32, #tpu.memory_space<smem>>
    %602 = vector.broadcast %601 : f32 to vector<1x1x14x14xf32>
    %603 = arith.mulf %602, %596 : vector<1x1x14x14xf32>
    %604 = arith.addf %591, %603 : vector<1x1x14x14xf32>
    %c16_492 = arith.constant 16 : index
    %c2_493 = arith.constant 2 : index
    %605 = memref.load %arg6[%c16_492, %c2_493] : memref<20x3xf32, #tpu.memory_space<smem>>
    %606 = vector.broadcast %605 : f32 to vector<1x1x14x14xf32>
    %607 = arith.mulf %606, %596 : vector<1x1x14x14xf32>
    %608 = arith.addf %595, %607 : vector<1x1x14x14xf32>
    %c0_494 = arith.constant 0 : index
    %c17_495 = arith.constant 17 : index
    %c0_496 = arith.constant 0 : index
    %c0_497 = arith.constant 0 : index
    %609 = vector.load %arg11[%c0_494, %c17_495, %c0_496, %c0_497] : memref<1x20x14x14xf32, #tpu.memory_space<vmem>>, vector<1x1x14x14xf32>
    %c17_498 = arith.constant 17 : index
    %c0_499 = arith.constant 0 : index
    %610 = memref.load %arg6[%c17_498, %c0_499] : memref<20x3xf32, #tpu.memory_space<smem>>
    %611 = vector.broadcast %610 : f32 to vector<1x1x14x14xf32>
    %612 = arith.mulf %611, %609 : vector<1x1x14x14xf32>
    %613 = arith.addf %600, %612 : vector<1x1x14x14xf32>
    %c17_500 = arith.constant 17 : index
    %c1_501 = arith.constant 1 : index
    %614 = memref.load %arg6[%c17_500, %c1_501] : memref<20x3xf32, #tpu.memory_space<smem>>
    %615 = vector.broadcast %614 : f32 to vector<1x1x14x14xf32>
    %616 = arith.mulf %615, %609 : vector<1x1x14x14xf32>
    %617 = arith.addf %604, %616 : vector<1x1x14x14xf32>
    %c17_502 = arith.constant 17 : index
    %c2_503 = arith.constant 2 : index
    %618 = memref.load %arg6[%c17_502, %c2_503] : memref<20x3xf32, #tpu.memory_space<smem>>
    %619 = vector.broadcast %618 : f32 to vector<1x1x14x14xf32>
    %620 = arith.mulf %619, %609 : vector<1x1x14x14xf32>
    %621 = arith.addf %608, %620 : vector<1x1x14x14xf32>
    %c0_504 = arith.constant 0 : index
    %c18_505 = arith.constant 18 : index
    %c0_506 = arith.constant 0 : index
    %c0_507 = arith.constant 0 : index
    %622 = vector.load %arg11[%c0_504, %c18_505, %c0_506, %c0_507] : memref<1x20x14x14xf32, #tpu.memory_space<vmem>>, vector<1x1x14x14xf32>
    %c18_508 = arith.constant 18 : index
    %c0_509 = arith.constant 0 : index
    %623 = memref.load %arg6[%c18_508, %c0_509] : memref<20x3xf32, #tpu.memory_space<smem>>
    %624 = vector.broadcast %623 : f32 to vector<1x1x14x14xf32>
    %625 = arith.mulf %624, %622 : vector<1x1x14x14xf32>
    %626 = arith.addf %613, %625 : vector<1x1x14x14xf32>
    %c18_510 = arith.constant 18 : index
    %c1_511 = arith.constant 1 : index
    %627 = memref.load %arg6[%c18_510, %c1_511] : memref<20x3xf32, #tpu.memory_space<smem>>
    %628 = vector.broadcast %627 : f32 to vector<1x1x14x14xf32>
    %629 = arith.mulf %628, %622 : vector<1x1x14x14xf32>
    %630 = arith.addf %617, %629 : vector<1x1x14x14xf32>
    %c18_512 = arith.constant 18 : index
    %c2_513 = arith.constant 2 : index
    %631 = memref.load %arg6[%c18_512, %c2_513] : memref<20x3xf32, #tpu.memory_space<smem>>
    %632 = vector.broadcast %631 : f32 to vector<1x1x14x14xf32>
    %633 = arith.mulf %632, %622 : vector<1x1x14x14xf32>
    %634 = arith.addf %621, %633 : vector<1x1x14x14xf32>
    %c0_514 = arith.constant 0 : index
    %c19_515 = arith.constant 19 : index
    %c0_516 = arith.constant 0 : index
    %c0_517 = arith.constant 0 : index
    %635 = vector.load %arg11[%c0_514, %c19_515, %c0_516, %c0_517] : memref<1x20x14x14xf32, #tpu.memory_space<vmem>>, vector<1x1x14x14xf32>
    %c19_518 = arith.constant 19 : index
    %c0_519 = arith.constant 0 : index
    %636 = memref.load %arg6[%c19_518, %c0_519] : memref<20x3xf32, #tpu.memory_space<smem>>
    %637 = vector.broadcast %636 : f32 to vector<1x1x14x14xf32>
    %638 = arith.mulf %637, %635 : vector<1x1x14x14xf32>
    %639 = arith.addf %626, %638 : vector<1x1x14x14xf32>
    %c19_520 = arith.constant 19 : index
    %c1_521 = arith.constant 1 : index
    %640 = memref.load %arg6[%c19_520, %c1_521] : memref<20x3xf32, #tpu.memory_space<smem>>
    %641 = vector.broadcast %640 : f32 to vector<1x1x14x14xf32>
    %642 = arith.mulf %641, %635 : vector<1x1x14x14xf32>
    %643 = arith.addf %630, %642 : vector<1x1x14x14xf32>
    %c19_522 = arith.constant 19 : index
    %c2_523 = arith.constant 2 : index
    %644 = memref.load %arg6[%c19_522, %c2_523] : memref<20x3xf32, #tpu.memory_space<smem>>
    %645 = vector.broadcast %644 : f32 to vector<1x1x14x14xf32>
    %646 = arith.mulf %645, %635 : vector<1x1x14x14xf32>
    %647 = arith.addf %634, %646 : vector<1x1x14x14xf32>
    %c0_524 = arith.constant 0 : index
    %648 = memref.load %arg7[%c0_524] : memref<3xf32, #tpu.memory_space<smem>>
    %649 = vector.broadcast %648 : f32 to vector<1x1x14x14xf32>
    %650 = arith.addf %639, %649 : vector<1x1x14x14xf32>
    %c1_525 = arith.constant 1 : index
    %651 = memref.load %arg7[%c1_525] : memref<3xf32, #tpu.memory_space<smem>>
    %652 = vector.broadcast %651 : f32 to vector<1x1x14x14xf32>
    %653 = arith.addf %643, %652 : vector<1x1x14x14xf32>
    %c2_526 = arith.constant 2 : index
    %654 = memref.load %arg7[%c2_526] : memref<3xf32, #tpu.memory_space<smem>>
    %655 = vector.broadcast %654 : f32 to vector<1x1x14x14xf32>
    %656 = arith.addf %647, %655 : vector<1x1x14x14xf32>
    %657 = arith.negf %650 : vector<1x1x14x14xf32>
    %658 = math.exp %657 : vector<1x1x14x14xf32>
    %cst_527 = arith.constant 1.000000e+00 : f32
    %659 = vector.broadcast %cst_527 : f32 to vector<1x1x14x14xf32>
    %660 = arith.addf %659, %658 : vector<1x1x14x14xf32>
    %661 = arith.divf %659, %660 : vector<1x1x14x14xf32>
    %662 = arith.mulf %650, %661 : vector<1x1x14x14xf32>
    %c0_528 = arith.constant 0 : index
    %c0_529 = arith.constant 0 : index
    %c0_530 = arith.constant 0 : index
    %c0_531 = arith.constant 0 : index
    %663 = vector.load %arg8[%c0_528, %c0_529, %c0_530, %c0_531] : memref<1x3x14x14xf32, #tpu.memory_space<vmem>>, vector<1x1x14x14xf32>
    tpu.vector_store %arg8[%c0_528, %c0_529, %c0_530, %c0_531], %662 {strides = array<i32>} : memref<1x3x14x14xf32, #tpu.memory_space<vmem>>, vector<1x1x14x14xf32>,
    %664 = arith.negf %653 : vector<1x1x14x14xf32>
    %665 = math.exp %664 : vector<1x1x14x14xf32>
    %cst_532 = arith.constant 1.000000e+00 : f32
    %666 = vector.broadcast %cst_532 : f32 to vector<1x1x14x14xf32>
    %667 = arith.addf %666, %665 : vector<1x1x14x14xf32>
    %668 = arith.divf %666, %667 : vector<1x1x14x14xf32>
    %669 = arith.mulf %653, %668 : vector<1x1x14x14xf32>
    %c0_533 = arith.constant 0 : index
    %c1_534 = arith.constant 1 : index
    %c0_535 = arith.constant 0 : index
    %c0_536 = arith.constant 0 : index
    %670 = vector.load %arg8[%c0_533, %c1_534, %c0_535, %c0_536] : memref<1x3x14x14xf32, #tpu.memory_space<vmem>>, vector<1x1x14x14xf32>
    tpu.vector_store %arg8[%c0_533, %c1_534, %c0_535, %c0_536], %669 {strides = array<i32>} : memref<1x3x14x14xf32, #tpu.memory_space<vmem>>, vector<1x1x14x14xf32>,
    %671 = arith.negf %656 : vector<1x1x14x14xf32>
    %672 = math.exp %671 : vector<1x1x14x14xf32>
    %cst_537 = arith.constant 1.000000e+00 : f32
    %673 = vector.broadcast %cst_537 : f32 to vector<1x1x14x14xf32>
    %674 = arith.addf %673, %672 : vector<1x1x14x14xf32>
    %675 = arith.divf %673, %674 : vector<1x1x14x14xf32>
    %676 = arith.mulf %656, %675 : vector<1x1x14x14xf32>
    %c0_538 = arith.constant 0 : index
    %c2_539 = arith.constant 2 : index
    %c0_540 = arith.constant 0 : index
    %c0_541 = arith.constant 0 : index
    %677 = vector.load %arg8[%c0_538, %c2_539, %c0_540, %c0_541] : memref<1x3x14x14xf32, #tpu.memory_space<vmem>>, vector<1x1x14x14xf32>
    tpu.vector_store %arg8[%c0_538, %c2_539, %c0_540, %c0_541], %676 {strides = array<i32>} : memref<1x3x14x14xf32, #tpu.memory_space<vmem>>, vector<1x1x14x14xf32>,
    return
  }
  func.func @transform_0(%arg0: i32) -> (i32, i32, i32, i32) {
    %c0_i32 = arith.constant 0 : i32
    %c0_i32_0 = arith.constant 0 : i32
    %c0_i32_1 = arith.constant 0 : i32
    %c0_i32_2 = arith.constant 0 : i32
    return %arg0, %c0_i32, %c0_i32_0, %c0_i32_1 : i32, i32, i32, i32
  }
  func.func @transform_1(%arg0: i32) -> (i32, i32) {
    %c0_i32 = arith.constant 0 : i32
    %c0_i32_0 = arith.constant 0 : i32
    %c0_i32_1 = arith.constant 0 : i32
    return %c0_i32, %c0_i32_0 : i32, i32
  }
  func.func @transform_2(%arg0: i32) -> i32 {
    %c0_i32 = arith.constant 0 : i32
    %c0_i32_0 = arith.constant 0 : i32
    return %c0_i32 : i32
  }
  func.func @transform_3(%arg0: i32) -> (i32, i32) {
    %c0_i32 = arith.constant 0 : i32
    %c0_i32_0 = arith.constant 0 : i32
    %c0_i32_1 = arith.constant 0 : i32
    return %c0_i32, %c0_i32_0 : i32, i32
  }
  func.func @transform_4(%arg0: i32) -> i32 {
    %c0_i32 = arith.constant 0 : i32
    %c0_i32_0 = arith.constant 0 : i32
    return %c0_i32 : i32
  }
  func.func @transform_5(%arg0: i32) -> (i32, i32) {
    %c0_i32 = arith.constant 0 : i32
    %c0_i32_0 = arith.constant 0 : i32
    %c0_i32_1 = arith.constant 0 : i32
    return %c0_i32, %c0_i32_0 : i32, i32
  }
  func.func @transform_6(%arg0: i32) -> i32 {
    %c0_i32 = arith.constant 0 : i32
    %c0_i32_0 = arith.constant 0 : i32
    return %c0_i32 : i32
  }
  func.func @transform_7(%arg0: i32) -> (i32, i32, i32, i32) {
    %c0_i32 = arith.constant 0 : i32
    %c0_i32_0 = arith.constant 0 : i32
    %c0_i32_1 = arith.constant 0 : i32
    %c0_i32_2 = arith.constant 0 : i32
    return %arg0, %c0_i32, %c0_i32_0, %c0_i32_1 : i32, i32, i32, i32
  }
}

</mosaic_0001>

<llo_original>
// kernel: model_forward.1
$region0: #{model_forward.1}
  #allocation0 [shape = 'u32[]', space=smem, size = 0x4, offset = 0x4, fixed_abs, tag = 'smem constant byte address 0x4 - core index']
  #allocation1 [shape = 'u32[144,128]{1,0:T(1,128)}', space=vmem, size = 0x12000, scoped, tag = 'internal scratch']
  #allocation2 [shape = 'f32[1,3,10,10]{3,2,1,0:T(8,128)}', space=vmem, size = 0x6000, scoped, tag = 'scratch operand']
  #allocation3 [shape = 'f32[1,10,12,12]{3,2,1,0:T(8,128)}', space=vmem, size = 0x14000, scoped, tag = 'scratch operand']
  #allocation4 [shape = 'f32[1,20,14,14]{3,2,1,0:T(8,128)}', space=vmem, size = 0x28000, scoped, tag = 'scratch operand']
  %s0 = inlined_call_operand.hbm [shape: f32[2,3,8,8], index: 0, kind: input, shape index: {}]
  %s1 = inlined_call_operand.hbm [shape: f32[3,5], index: 1, kind: input, shape index: {}]
  %s2 = inlined_call_operand.vmem [shape: f32[5], index: 2, kind: input, shape index: {}]
  %s3 = inlined_call_operand.hbm [shape: f32[10,5], index: 3, kind: input, shape index: {}]
  %s4 = inlined_call_operand.vmem [shape: f32[5], index: 4, kind: input, shape index: {}]
  %s5 = inlined_call_operand.hbm [shape: f32[20,3], index: 5, kind: input, shape index: {}]
  %s6 = inlined_call_operand.vmem [shape: f32[3], index: 6, kind: input, shape index: {}]
  %s7 = inlined_call_operand.vmem [shape: f32[2,3,14,14], index: 7, kind: output, shape index: {}]
  %s8 = sld [smem:[#allocation0]]
  $region89: #{model_forward.1} parent=0
    _
  %s10 = ssub.s32 1, %s8
  %s11 = scalar_select 0, %s10, %s8
  $region1: #{model_forward.1} parent=0
    #allocation5 [shape = 'u8[24576]{0}', space=vmem, size = 0x6000, scoped, tag = 'input window, operand 0']
    #allocation6 [shape = 's32[2]{0}', space=sflag, size = 0x8, scoped, tag = 'scoped memory for model_forward.1']
    #allocation7 [shape = 's32[2]{0}', space=sflag, size = 0x8, scoped, tag = 'scoped memory for model_forward.1']
    #allocation8 [shape = 's32[2]{0}', space=sflag, size = 0x8, scoped, tag = 'scoped memory for model_forward.1']
    #allocation9 [shape = 'u8[2048]{0}', space=smem, size = 0x800, scoped, tag = 'input window, operand 1, single buffered']
    #allocation10 [shape = 'u8[512]{0}', space=smem, size = 0x200, scoped, tag = 'input window, operand 2, single buffered']
    #allocation11 [shape = 'u8[8192]{0}', space=smem, size = 0x2000, scoped, tag = 'input window, operand 3, single buffered']
    #allocation12 [shape = 's32[1]{0}', space=sflag, size = 0x4, scoped, tag = 'scoped memory for model_forward.1']
    #allocation13 [shape = 'u8[512]{0}', space=smem, size = 0x200, scoped, tag = 'input window, operand 4, single buffered']
    #allocation14 [shape = 's32[1]{0}', space=sflag, size = 0x4, scoped, tag = 'scoped memory for model_forward.1']
    #allocation15 [shape = 'u8[12288]{0}', space=smem, size = 0x3000, scoped, tag = 'input window, operand 5, single buffered']
    #allocation16 [shape = 'u8[512]{0}', space=smem, size = 0x200, scoped, tag = 'input window, operand 6, single buffered']
    %12 = vsyncpa [#allocation6], 0
    %s13 = scalar_lea.sflag [#allocation6], 1
    %14 = vsyncpa %s13, 0
    %15 = vsyncpa [#allocation7], 0
    %16 = vsyncpa [#allocation8], 0
    %17 = vsyncpa [#allocation12], 0
    %18 = vsyncpa [#allocation14], 0
    loop: start=0, step=1, limit=4
    $region2: #{model_forward.1} parent=1 // loop_pre_header
      _
    $region3: #{model_forward.1} parent=1 // loop_header
      %s20 = sphi 0, %s24
      %p21 = scmp.ge.s32.totalorder %s20, 4
      %s30 = sphi 0, %s32
      %s33 = sphi 0, %s30
      %s34 = sphi 0, %s33
      %s50 = sphi 0, %s34
      %s54 = sphi 0, %s54
      %s56 = sphi 0, %s54
      %s57 = sphi 0, %s56
      %s71 = sphi 0, %s57
      %s75 = sphi 0, %s75
      %s77 = sphi 0, %s75
      %s78 = sphi 0, %s77
      %s92 = sphi 0, %s78
      %s96 = sphi 0, %s96
      %s98 = sphi 0, %s96
      %s99 = sphi 0, %s98
      %s113 = sphi 0, %s99
      %s117 = sphi 0, %s117
      %s119 = sphi 0, %s117
      %s120 = sphi 0, %s119
      %s134 = sphi 0, %s120
      %s138 = sphi 0, %s138
      %s140 = sphi 0, %s138
      %s141 = sphi 0, %s140
      %s155 = sphi 0, %s141
      %s159 = sphi 0, %s159
      %s161 = sphi 0, %s159
      %s162 = sphi 0, %s161
      %s176 = sphi 0, %s162
      %s182 = sphi 0, %s184
      %s185 = sphi 0, %s182
      %s186 = sphi 0, %s185
      %s202 = sphi 0, %s186
    $region4: #{model_forward.1} parent=1 // loop_header_branch
      %23 = sbr.rel (%p21) target = $region8
    $region5: #{model_forward.1} parent=1 // loop_body
      %s25 = ssub.s32 %s20, 1
      %s26 = ssub.s32 %s20, 2
      %s27 = sadd.s32 %s20, 1
      %s28 = ssub.s32 %s20, %s27
      %p29 = scmp.eq.s32.totalorder %s28, 0
      %s31 = sadd.s32 %s30, 1
      %s32 = scalar_select %p29, %s30, %s31
      %p35 = pneg %p29
      %p36 = scmp.eq.s32.totalorder %s20, 1
      %p37 = por %p35, %p36
      %p38 = scmp.ne.s32.totalorder %s30, %s33
      %p39 = scmp.eq.s32.totalorder %s20, 0
      %p40 = por %p38, %p39
      %p41 = scmp.ne.s32.totalorder %s30, %s33
      %p42 = scmp.eq.s32.totalorder %s25, 1
      %p43 = por %p41, %p42
      %p44 = scmp.ne.s32.totalorder %s33, %s34
      %p45 = scmp.eq.s32.totalorder %s25, 0
      %p46 = por %p44, %p45
      %p47 = scmp.ne.s32.totalorder %s33, %s34
      %p48 = scmp.eq.s32.totalorder %s26, 1
      %p49 = por %p47, %p48
      %p51 = scmp.ne.s32.totalorder %s34, %s50
      %p52 = scmp.eq.s32.totalorder %s26, 0
      %p53 = por %p51, %p52
      %s55 = sadd.s32 %s54, 1
      %p58 = scmp.eq.s32.totalorder %s20, 1
      %p59 = scmp.ne.s32.totalorder %s54, %s56
      %p60 = scmp.eq.s32.totalorder %s20, 0
      %p61 = por %p59, %p60
      %p62 = scmp.ne.s32.totalorder %s54, %s56
      %p63 = scmp.eq.s32.totalorder %s25, 1
      %p64 = por %p62, %p63
      %p65 = scmp.ne.s32.totalorder %s56, %s57
      %p66 = scmp.eq.s32.totalorder %s25, 0
      %p67 = por %p65, %p66
      %p68 = scmp.ne.s32.totalorder %s56, %s57
      %p69 = scmp.eq.s32.totalorder %s26, 1
      %p70 = por %p68, %p69
      %p72 = scmp.ne.s32.totalorder %s57, %s71
      %p73 = scmp.eq.s32.totalorder %s26, 0
      %p74 = por %p72, %p73
      %s76 = sadd.s32 %s75, 1
      %p79 = scmp.eq.s32.totalorder %s20, 1
      %p80 = scmp.ne.s32.totalorder %s75, %s77
      %p81 = scmp.eq.s32.totalorder %s20, 0
      %p82 = por %p80, %p81
      %p83 = scmp.ne.s32.totalorder %s75, %s77
      %p84 = scmp.eq.s32.totalorder %s25, 1
      %p85 = por %p83, %p84
      %p86 = scmp.ne.s32.totalorder %s77, %s78
      %p87 = scmp.eq.s32.totalorder %s25, 0
      %p88 = por %p86, %p87
      %p89 = scmp.ne.s32.totalorder %s77, %s78
      %p90 = scmp.eq.s32.totalorder %s26, 1
      %p91 = por %p89, %p90
      %p93 = scmp.ne.s32.totalorder %s78, %s92
      %p94 = scmp.eq.s32.totalorder %s26, 0
      %p95 = por %p93, %p94
      %s97 = sadd.s32 %s96, 1
      %p100 = scmp.eq.s32.totalorder %s20, 1
      %p101 = scmp.ne.s32.totalorder %s96, %s98
      %p102 = scmp.eq.s32.totalorder %s20, 0
      %p103 = por %p101, %p102
      %p104 = scmp.ne.s32.totalorder %s96, %s98
      %p105 = scmp.eq.s32.totalorder %s25, 1
      %p106 = por %p104, %p105
      %p107 = scmp.ne.s32.totalorder %s98, %s99
      %p108 = scmp.eq.s32.totalorder %s25, 0
      %p109 = por %p107, %p108
      %p110 = scmp.ne.s32.totalorder %s98, %s99
      %p111 = scmp.eq.s32.totalorder %s26, 1
      %p112 = por %p110, %p111
      %p114 = scmp.ne.s32.totalorder %s99, %s113
      %p115 = scmp.eq.s32.totalorder %s26, 0
      %p116 = por %p114, %p115
      %s118 = sadd.s32 %s117, 1
      %p121 = scmp.eq.s32.totalorder %s20, 1
      %p122 = scmp.ne.s32.totalorder %s117, %s119
      %p123 = scmp.eq.s32.totalorder %s20, 0
      %p124 = por %p122, %p123
      %p125 = scmp.ne.s32.totalorder %s117, %s119
      %p126 = scmp.eq.s32.totalorder %s25, 1
      %p127 = por %p125, %p126
      %p128 = scmp.ne.s32.totalorder %s119, %s120
      %p129 = scmp.eq.s32.totalorder %s25, 0
      %p130 = por %p128, %p129
      %p131 = scmp.ne.s32.totalorder %s119, %s120
      %p132 = scmp.eq.s32.totalorder %s26, 1
      %p133 = por %p131, %p132
      %p135 = scmp.ne.s32.totalorder %s120, %s134
      %p136 = scmp.eq.s32.totalorder %s26, 0
      %p137 = por %p135, %p136
      %s139 = sadd.s32 %s138, 1
      %p142 = scmp.eq.s32.totalorder %s20, 1
      %p143 = scmp.ne.s32.totalorder %s138, %s140
      %p144 = scmp.eq.s32.totalorder %s20, 0
      %p145 = por %p143, %p144
      %p146 = scmp.ne.s32.totalorder %s138, %s140
      %p147 = scmp.eq.s32.totalorder %s25, 1
      %p148 = por %p146, %p147
      %p149 = scmp.ne.s32.totalorder %s140, %s141
      %p150 = scmp.eq.s32.totalorder %s25, 0
      %p151 = por %p149, %p150
      %p152 = scmp.ne.s32.totalorder %s140, %s141
      %p153 = scmp.eq.s32.totalorder %s26, 1
      %p154 = por %p152, %p153
      %p156 = scmp.ne.s32.totalorder %s141, %s155
      %p157 = scmp.eq.s32.totalorder %s26, 0
      %p158 = por %p156, %p157
      %s160 = sadd.s32 %s159, 1
      %p163 = scmp.eq.s32.totalorder %s20, 1
      %p164 = scmp.ne.s32.totalorder %s159, %s161
      %p165 = scmp.eq.s32.totalorder %s20, 0
      %p166 = por %p164, %p165
      %p167 = scmp.ne.s32.totalorder %s159, %s161
      %p168 = scmp.eq.s32.totalorder %s25, 1
      %p169 = por %p167, %p168
      %p170 = scmp.ne.s32.totalorder %s161, %s162
      %p171 = scmp.eq.s32.totalorder %s25, 0
      %p172 = por %p170, %p171
      %p173 = scmp.ne.s32.totalorder %s161, %s162
      %p174 = scmp.eq.s32.totalorder %s26, 1
      %p175 = por %p173, %p174
      %p177 = scmp.ne.s32.totalorder %s162, %s176
      %p178 = scmp.eq.s32.totalorder %s26, 0
      %p179 = por %p177, %p178
      %s180 = ssub.s32 %s20, %s27
      %p181 = scmp.eq.s32.totalorder %s180, 0
      %s183 = sadd.s32 %s182, 1
      %s184 = scalar_select %p181, %s182, %s183
      %p187 = pneg %p181
      %p188 = scmp.eq.s32.totalorder %s20, 1
      %p189 = por %p187, %p188
      %p190 = scmp.ne.s32.totalorder %s182, %s185
      %p191 = scmp.eq.s32.totalorder %s20, 0
      %p192 = por %p190, %p191
      %p193 = scmp.ne.s32.totalorder %s182, %s185
      %p194 = scmp.eq.s32.totalorder %s25, 1
      %p195 = por %p193, %p194
      %p196 = scmp.ne.s32.totalorder %s185, %s186
      %p197 = scmp.eq.s32.totalorder %s25, 0
      %p198 = por %p196, %p197
      %p199 = scmp.ne.s32.totalorder %s185, %s186
      %p200 = scmp.eq.s32.totalorder %s26, 1
      %p201 = por %p199, %p200
      %p203 = scmp.ne.s32.totalorder %s186, %s202
      %p204 = scmp.eq.s32.totalorder %s26, 0
      %p205 = por %p203, %p204
      %p206 = scmp.le.s32.totalorder 1, %s20
      %p207 = scmp.lt.s32.totalorder %s20, 3
      %p208 = pnand %p206, %p207
      %p209 = pneg %p208
      // Predicated region
      $region9: #{model_forward.1} parent=5 // pred_check
        _
      $region10: #{model_forward.1} parent=5 // pred_check_branch
        %211 = sbr.rel (%p208) target = $region12
      $region11: #{model_forward.1} parent=5 // pred_region
        %s212 = ssub.s32 %s20, 1
        // Predicated region
        $region13: #{model_forward.1} parent=11 // pred_check
          %p213 = pneg %p67
        $region14: #{model_forward.1} parent=11 // pred_check_branch
          %215 = sbr.rel (%p213) target = $region16
        $region15: #{model_forward.1} parent=11 // pred_region
          %s217 = ssub.s32 64, 64
          %218 = vsyncadd [#allocation7], %s217
          %221 = dma.hbm_to_smem %s1, 64, [#allocation9], [#allocation7]
        $region16: #{model_forward.1} parent=11 // pred_fallthru
          _
        // Predicated region
        $region17: #{model_forward.1} parent=11 // pred_check
          %p222 = pneg %p88
        $region18: #{model_forward.1} parent=11 // pred_check_branch
          %224 = sbr.rel (%p222) target = $region20
        $region19: #{model_forward.1} parent=11 // pred_region
          %s226 = ssub.s32 16, 16
          %227 = vsyncadd [#allocation8], %s226
          %s229 = sshll.u32 %s2, 4
          %s230 = int_to_ptr.vmem [resolvable:$true] %s229
          %232 = dma.vmem_to_smem %s230, 16, [#allocation10], [#allocation8]
        $region20: #{model_forward.1} parent=11 // pred_fallthru
          _
        // Predicated region
        $region21: #{model_forward.1} parent=11 // pred_check
          %p233 = pneg %p109
        $region22: #{model_forward.1} parent=11 // pred_check_branch
          %235 = sbr.rel (%p233) target = $region24
        $region23: #{model_forward.1} parent=11 // pred_region
          %s237 = ssub.s32 256, 256
          %238 = vsyncadd [#allocation12], %s237
          %243 = dma.hbm_to_smem %s3, 256, [#allocation11], [#allocation12], 128, 128, 8
        $region24: #{model_forward.1} parent=11 // pred_fallthru
          _
        // Predicated region
        $region25: #{model_forward.1} parent=11 // pred_check
          %p244 = pneg %p130
        $region26: #{model_forward.1} parent=11 // pred_check_branch
          %246 = sbr.rel (%p244) target = $region28
        $region27: #{model_forward.1} parent=11 // pred_region
          %s248 = ssub.s32 16, 16
          %249 = vsyncadd [#allocation14], %s248
          %s251 = sshll.u32 %s4, 4
          %s252 = int_to_ptr.vmem [resolvable:$true] %s251
          %254 = dma.vmem_to_smem %s252, 16, [#allocation13], [#allocation14]
        $region28: #{model_forward.1} parent=11 // pred_fallthru
          _
        // Predicated region
        $region29: #{model_forward.1} parent=11 // pred_check
          %p255 = pneg %p151
        $region30: #{model_forward.1} parent=11 // pred_check_branch
          %257 = sbr.rel (%p255) target = $region32
        $region31: #{model_forward.1} parent=11 // pred_region
          %s259 = ssub.s32 384, 384
          %260 = vsyncadd [#allocation12], %s259
          %265 = dma.hbm_to_smem %s5, 384, [#allocation15], [#allocation12], 128, 128, 8
        $region32: #{model_forward.1} parent=11 // pred_fallthru
          _
        // Predicated region
        $region33: #{model_forward.1} parent=11 // pred_check
          %p266 = pneg %p172
        $region34: #{model_forward.1} parent=11 // pred_check_branch
          %268 = sbr.rel (%p266) target = $region36
        $region35: #{model_forward.1} parent=11 // pred_region
          %s270 = ssub.s32 16, 16
          %271 = vsyncadd [#allocation14], %s270
          %s273 = sshll.u32 %s6, 4
          %s274 = int_to_ptr.vmem [resolvable:$true] %s273
          %276 = dma.vmem_to_smem %s274, 16, [#allocation16], [#allocation14]
        $region36: #{model_forward.1} parent=11 // pred_fallthru
          _
      $region12: #{model_forward.1} parent=5 // pred_fallthru
        _
      %p277 = scmp.lt.s32.totalorder %s20, 2
      // Predicated region
      $region37: #{model_forward.1} parent=5 // pred_check
        %p278 = pneg %p277
      $region38: #{model_forward.1} parent=5 // pred_check_branch
        %280 = sbr.rel (%p278) target = $region40
      $region39: #{model_forward.1} parent=5 // pred_region
        // Predicated region
        $region41: #{model_forward.1} parent=39 // pred_check
          %p281 = pneg %p40
        $region42: #{model_forward.1} parent=39 // pred_check_branch
          %283 = sbr.rel (%p281) target = $region44
        $region43: #{model_forward.1} parent=39 // pred_region
          %s284 = sand.u32 %s30, 1
          %s285 = scalar_lea.sflag [#allocation6], %s284
          %s286 = sand.u32 %s30, 1
          %s287 = smul.addr %s286, 24
          %s288 = scalar_lea.vmem [#allocation5], %s287
          %s290 = ssub.s32 384, 384
          %291 = vsyncadd %s285, %s290
          %s292 = smul.addr %s20, 3
          %s293 = smul.addr %s292, 128
          %s294 = scalar_lea.hbm %s0, %s293
          %s295 = sshll.u32 %s288, 4
          %s296 = int_to_ptr.vmem [resolvable:$true] %s295
          %301 = dma.hbm_to_vmem [thread:$0]  %s294, 384, %s296, %s285, 128, 128, 8
        $region44: #{model_forward.1} parent=39 // pred_fallthru
          _
      $region40: #{model_forward.1} parent=5 // pred_fallthru
        _
      %p302 = scmp.le.s32.totalorder 1, %s20
      %p303 = scmp.lt.s32.totalorder %s20, 3
      %p304 = pnand %p302, %p303
      %p305 = pneg %p304
      // Predicated region
      $region45: #{model_forward.1} parent=5 // pred_check
        _
      $region46: #{model_forward.1} parent=5 // pred_check_branch
        %307 = sbr.rel (%p304) target = $region48
      $region47: #{model_forward.1} parent=5 // pred_region
        %s308 = ssub.s32 %s20, 1
        %s309 = sand.u32 %s33, 1
        %s310 = scalar_lea.sflag [#allocation6], %s309
        %s311 = sand.u32 %s33, 1
        %s312 = smul.addr %s311, 24
        %s313 = scalar_lea.vmem [#allocation5], %s312
        // Predicated region
        $region49: #{model_forward.1} parent=47 // pred_check
          %p314 = pneg %p46
        $region50: #{model_forward.1} parent=47 // pred_check_branch
          %316 = sbr.rel (%p314) target = $region52
        $region51: #{model_forward.1} parent=47 // pred_region
          %317 = dma.done %s310, 384
        $region52: #{model_forward.1} parent=47 // pred_fallthru
          _
        // Predicated region
        $region53: #{model_forward.1} parent=47 // pred_check
          %p318 = pneg %p67
        $region54: #{model_forward.1} parent=47 // pred_check_branch
          %320 = sbr.rel (%p318) target = $region56
        $region55: #{model_forward.1} parent=47 // pred_region
          %321 = dma.done [#allocation7], 64
        $region56: #{model_forward.1} parent=47 // pred_fallthru
          _
        // Predicated region
        $region57: #{model_forward.1} parent=47 // pred_check
          %p322 = pneg %p88
        $region58: #{model_forward.1} parent=47 // pred_check_branch
          %324 = sbr.rel (%p322) target = $region60
        $region59: #{model_forward.1} parent=47 // pred_region
          %325 = dma.done [#allocation8], 16
        $region60: #{model_forward.1} parent=47 // pred_fallthru
          _
        // Predicated region
        $region61: #{model_forward.1} parent=47 // pred_check
          %p326 = pneg %p109
        $region62: #{model_forward.1} parent=47 // pred_check_branch
          %328 = sbr.rel (%p326) target = $region64
        $region63: #{model_forward.1} parent=47 // pred_region
          %329 = dma.done [#allocation12], 256
        $region64: #{model_forward.1} parent=47 // pred_fallthru
          _
        // Predicated region
        $region65: #{model_forward.1} parent=47 // pred_check
          %p330 = pneg %p130
        $region66: #{model_forward.1} parent=47 // pred_check_branch
          %332 = sbr.rel (%p330) target = $region68
        $region67: #{model_forward.1} parent=47 // pred_region
          %333 = dma.done [#allocation14], 16
        $region68: #{model_forward.1} parent=47 // pred_fallthru
          _
        // Predicated region
        $region69: #{model_forward.1} parent=47 // pred_check
          %p334 = pneg %p151
        $region70: #{model_forward.1} parent=47 // pred_check_branch
          %336 = sbr.rel (%p334) target = $region72
        $region71: #{model_forward.1} parent=47 // pred_region
          %337 = dma.done [#allocation12], 384
        $region72: #{model_forward.1} parent=47 // pred_fallthru
          _
        // Predicated region
        $region73: #{model_forward.1} parent=47 // pred_check
          %p338 = pneg %p172
        $region74: #{model_forward.1} parent=47 // pred_check_branch
          %340 = sbr.rel (%p338) target = $region76
        $region75: #{model_forward.1} parent=47 // pred_region
          %341 = dma.done [#allocation14], 16
        $region76: #{model_forward.1} parent=47 // pred_fallthru
          _
        %342 = sfence
        %s343 = sand.u32 %s33, 1
        %s344 = scalar_lea.sflag [#allocation6], %s343
        %s345 = sand.u32 %s33, 1
        %s346 = smul.addr %s345, 24
        %s347 = scalar_lea.vmem [#allocation5], %s346
        %p348 = pneg %p46
        %p349 = pneg %p43
        %p350 = pneg %p67
        %p351 = pneg %p64
        %p352 = pneg %p88
        %p353 = pneg %p85
        %p354 = pneg %p109
        %p355 = pneg %p106
        %p356 = pneg %p130
        %p357 = pneg %p127
        %p358 = pneg %p151
        %p359 = pneg %p148
        %p360 = pneg %p172
        %p361 = pneg %p169
        %p362 = pneg %p198
        %p363 = pneg %p195
        %p364 = scmp.lt.s32.totalorder %s25, 1
        %s365 = scalar_select %p364, %s25, 1
        %s366 = smul.addr %s365, 6
        %s367 = smul.addr %s366, 8
        %s368 = scalar_lea.vmem %s7, %s367
        %p369 = scmp.lt.s32.totalorder %s25, 1
        %s370 = scalar_select %p369, %s25, 1
        %s371 = smul.addr %s370, 6
        %s372 = smul.addr %s371, 8
        %s373 = scalar_lea.vmem %s7, %s372
        %vm374 = vcmask 80896
        %375 = vst.msk [vmem:[#allocation2] sm:$0xff] %vm374, 0.0
        %vm376 = vcmask 74752
        %377 = vst.msk [vmem:[#allocation2 + $0x8] sm:$0x3] %vm376, 0.0
        %378 = vst.msk [vmem:[#allocation2 + $0x10] sm:$0xff] %vm374, 0.0
        %379 = vst.msk [vmem:[#allocation2 + $0x18] sm:$0x3] %vm376, 0.0
        %380 = vst.msk [vmem:[#allocation2 + $0x20] sm:$0xff] %vm374, 0.0
        %381 = vst.msk [vmem:[#allocation2 + $0x28] sm:$0x3] %vm376, 0.0
        %vm382 = vcmask 97280
        %383 = vst.msk [vmem:[#allocation3] sm:$0xff] %vm382, 0.0
        %vm384 = vcmask 93184
        %385 = vst.msk [vmem:[#allocation3 + $0x8] sm:$0xf] %vm384, 0.0
        %386 = vst.msk [vmem:[#allocation3 + $0x10] sm:$0xff] %vm382, 0.0
        %387 = vst.msk [vmem:[#allocation3 + $0x18] sm:$0xf] %vm384, 0.0
        %388 = vst.msk [vmem:[#allocation3 + $0x20] sm:$0xff] %vm382, 0.0
        %389 = vst.msk [vmem:[#allocation3 + $0x28] sm:$0xf] %vm384, 0.0
        %390 = vst.msk [vmem:[#allocation3 + $0x30] sm:$0xff] %vm382, 0.0
        %391 = vst.msk [vmem:[#allocation3 + $0x38] sm:$0xf] %vm384, 0.0
        %392 = vst.msk [vmem:[#allocation3 + $0x40] sm:$0xff] %vm382, 0.0
        %393 = vst.msk [vmem:[#allocation3 + $0x48] sm:$0xf] %vm384, 0.0
        %394 = vst.msk [vmem:[#allocation3 + $0x50] sm:$0xff] %vm382, 0.0
        %395 = vst.msk [vmem:[#allocation3 + $0x58] sm:$0xf] %vm384, 0.0
        %396 = vst.msk [vmem:[#allocation3 + $0x60] sm:$0xff] %vm382, 0.0
        %397 = vst.msk [vmem:[#allocation3 + $0x68] sm:$0xf] %vm384, 0.0
        %398 = vst.msk [vmem:[#allocation3 + $0x70] sm:$0xff] %vm382, 0.0
        %399 = vst.msk [vmem:[#allocation3 + $0x78] sm:$0xf] %vm384, 0.0
        %400 = vst.msk [vmem:[#allocation3 + $0x80] sm:$0xff] %vm382, 0.0
        %401 = vst.msk [vmem:[#allocation3 + $0x88] sm:$0xf] %vm384, 0.0
        %402 = vst.msk [vmem:[#allocation3 + $0x90] sm:$0xff] %vm382, 0.0
        %403 = vst.msk [vmem:[#allocation3 + $0x98] sm:$0xf] %vm384, 0.0
        %vm404 = vcmask 113664
        %405 = vst.msk [vmem:[#allocation4] sm:$0xff] %vm404, 0.0
        %vm406 = vcmask 111616
        %407 = vst.msk [vmem:[#allocation4 + $0x8] sm:$0x3f] %vm406, 0.0
        %408 = vst.msk [vmem:[#allocation4 + $0x10] sm:$0xff] %vm404, 0.0
        %409 = vst.msk [vmem:[#allocation4 + $0x18] sm:$0x3f] %vm406, 0.0
        %410 = vst.msk [vmem:[#allocation4 + $0x20] sm:$0xff] %vm404, 0.0
        %411 = vst.msk [vmem:[#allocation4 + $0x28] sm:$0x3f] %vm406, 0.0
        %412 = vst.msk [vmem:[#allocation4 + $0x30] sm:$0xff] %vm404, 0.0
        %413 = vst.msk [vmem:[#allocation4 + $0x38] sm:$0x3f] %vm406, 0.0
        %414 = vst.msk [vmem:[#allocation4 + $0x40] sm:$0xff] %vm404, 0.0
        %415 = vst.msk [vmem:[#allocation4 + $0x48] sm:$0x3f] %vm406, 0.0
        %416 = vst.msk [vmem:[#allocation4 + $0x50] sm:$0xff] %vm404, 0.0
        %417 = vst.msk [vmem:[#allocation4 + $0x58] sm:$0x3f] %vm406, 0.0
        %418 = vst.msk [vmem:[#allocation4 + $0x60] sm:$0xff] %vm404, 0.0
        %419 = vst.msk [vmem:[#allocation4 + $0x68] sm:$0x3f] %vm406, 0.0
        %420 = vst.msk [vmem:[#allocation4 + $0x70] sm:$0xff] %vm404, 0.0
        %421 = vst.msk [vmem:[#allocation4 + $0x78] sm:$0x3f] %vm406, 0.0
        %422 = vst.msk [vmem:[#allocation4 + $0x80] sm:$0xff] %vm404, 0.0
        %423 = vst.msk [vmem:[#allocation4 + $0x88] sm:$0x3f] %vm406, 0.0
        %424 = vst.msk [vmem:[#allocation4 + $0x90] sm:$0xff] %vm404, 0.0
        %425 = vst.msk [vmem:[#allocation4 + $0x98] sm:$0x3f] %vm406, 0.0
        %426 = vst.msk [vmem:[#allocation4 + $0xa0] sm:$0xff] %vm404, 0.0
        %427 = vst.msk [vmem:[#allocation4 + $0xa8] sm:$0x3f] %vm406, 0.0
        %428 = vst.msk [vmem:[#allocation4 + $0xb0] sm:$0xff] %vm404, 0.0
        %429 = vst.msk [vmem:[#allocation4 + $0xb8] sm:$0x3f] %vm406, 0.0
        %430 = vst.msk [vmem:[#allocation4 + $0xc0] sm:$0xff] %vm404, 0.0
        %431 = vst.msk [vmem:[#allocation4 + $0xc8] sm:$0x3f] %vm406, 0.0
        %432 = vst.msk [vmem:[#allocation4 + $0xd0] sm:$0xff] %vm404, 0.0
        %433 = vst.msk [vmem:[#allocation4 + $0xd8] sm:$0x3f] %vm406, 0.0
        %434 = vst.msk [vmem:[#allocation4 + $0xe0] sm:$0xff] %vm404, 0.0
        %435 = vst.msk [vmem:[#allocation4 + $0xe8] sm:$0x3f] %vm406, 0.0
        %436 = vst.msk [vmem:[#allocation4 + $0xf0] sm:$0xff] %vm404, 0.0
        %437 = vst.msk [vmem:[#allocation4 + $0xf8] sm:$0x3f] %vm406, 0.0
        %438 = vst.msk [vmem:[#allocation4 + $0x100] sm:$0xff] %vm404, 0.0
        %439 = vst.msk [vmem:[#allocation4 + $0x108] sm:$0x3f] %vm406, 0.0
        %440 = vst.msk [vmem:[#allocation4 + $0x110] sm:$0xff] %vm404, 0.0
        %441 = vst.msk [vmem:[#allocation4 + $0x118] sm:$0x3f] %vm406, 0.0
        %442 = vst.msk [vmem:[#allocation4 + $0x120] sm:$0xff] %vm404, 0.0
        %443 = vst.msk [vmem:[#allocation4 + $0x128] sm:$0x3f] %vm406, 0.0
        %444 = vst.msk [vmem:[#allocation4 + $0x130] sm:$0xff] %vm404, 0.0
        %445 = vst.msk [vmem:[#allocation4 + $0x138] sm:$0x3f] %vm406, 0.0
        %v446 = vld [vmem:[%s313] sm:$0xff]
        %v447 = vld [vmem:[%s313 + $0x8] sm:$0xff]
        %v448 = vld [vmem:[%s313 + $0x10] sm:$0xff]
        %452 = vrot.lane.b32.xlu0 %v446, 1
        %v453 = vpop.permute.xlu0 %452
        %454 = vrot.lane.b32.xlu0 %v447, 1
        %v455 = vpop.permute.xlu0 %454
        %456 = vrot.lane.b32.xlu0 %v448, 1
        %v457 = vpop.permute.xlu0 %456
        %vm461 = vcmask 72712
        %462 = vst.msk [vmem:[#allocation2 + $0x1] sm:$0xff] %vm461, %v453
        %463 = vst.msk [vmem:[#allocation2 + $0x11] sm:$0xff] %vm461, %v455
        %464 = vst.msk [vmem:[#allocation2 + $0x21] sm:$0xff] %vm461, %v457
        %v465 = vld [vmem:[#allocation2] sm:$0xff]
        %v466 = vld [vmem:[#allocation2 + $0x8] sm:$0x3]
        %s467 = sld [smem:[#allocation9]]
        %v468 = vstv %s467
        %v469 = vmul.f32 %v468, %v465
        %v470 = vmul.f32 %v468, %v466
        %s471 = sld [smem:[#allocation9 + $0x1]]
        %v472 = vstv %s471
        %v473 = vmul.f32 %v472, %v465
        %v474 = vmul.f32 %v472, %v466
        %s475 = sld [smem:[#allocation9 + $0x2]]
        %v476 = vstv %s475
        %v477 = vmul.f32 %v476, %v465
        %v478 = vmul.f32 %v476, %v466
        %s479 = sld [smem:[#allocation9 + $0x3]]
        %v480 = vstv %s479
        %v481 = vmul.f32 %v480, %v465
        %v482 = vmul.f32 %v480, %v466
        %s483 = sld [smem:[#allocation9 + $0x4]]
        %v484 = vstv %s483
        %v485 = vmul.f32 %v484, %v465
        %v486 = vmul.f32 %v484, %v466
        %s487 = scalar_lea.vmem [#allocation2], 16
        %v488 = vld [vmem:[%s487] sm:$0xff]
        %v489 = vld [vmem:[%s487 + $0x8] sm:$0x3]
        %s490 = sld [smem:[#allocation9 + $0x80]]
        %v491 = vstv %s490
        %v492 = vmul.f32 %v491, %v488
        %v493 = vmul.f32 %v491, %v489
        %v494 = vadd.f32 %v469, %v492
        %v495 = vadd.f32 %v470, %v493
        %s496 = sld [smem:[#allocation9 + $0x81]]
        %v497 = vstv %s496
        %v498 = vmul.f32 %v497, %v488
        %v499 = vmul.f32 %v497, %v489
        %v500 = vadd.f32 %v473, %v498
        %v501 = vadd.f32 %v474, %v499
        %s502 = sld [smem:[#allocation9 + $0x82]]
        %v503 = vstv %s502
        %v504 = vmul.f32 %v503, %v488
        %v505 = vmul.f32 %v503, %v489
        %v506 = vadd.f32 %v477, %v504
        %v507 = vadd.f32 %v478, %v505
        %s508 = sld [smem:[#allocation9 + $0x83]]
        %v509 = vstv %s508
        %v510 = vmul.f32 %v509, %v488
        %v511 = vmul.f32 %v509, %v489
        %v512 = vadd.f32 %v481, %v510
        %v513 = vadd.f32 %v482, %v511
        %s514 = sld [smem:[#allocation9 + $0x84]]
        %v515 = vstv %s514
        %v516 = vmul.f32 %v515, %v488
        %v517 = vmul.f32 %v515, %v489
        %v518 = vadd.f32 %v485, %v516
        %v519 = vadd.f32 %v486, %v517
        %s520 = scalar_lea.vmem [#allocation2], 32
        %v521 = vld [vmem:[%s520] sm:$0xff]
        %v522 = vld [vmem:[%s520 + $0x8] sm:$0x3]
        %s523 = sld [smem:[#allocation9 + $0x100]]
        %v524 = vstv %s523
        %v525 = vmul.f32 %v524, %v521
        %v526 = vmul.f32 %v524, %v522
        %v527 = vadd.f32 %v494, %v525
        %v528 = vadd.f32 %v495, %v526
        %s529 = sld [smem:[#allocation9 + $0x101]]
        %v530 = vstv %s529
        %v531 = vmul.f32 %v530, %v521
        %v532 = vmul.f32 %v530, %v522
        %v533 = vadd.f32 %v500, %v531
        %v534 = vadd.f32 %v501, %v532
        %s535 = sld [smem:[#allocation9 + $0x102]]
        %v536 = vstv %s535
        %v537 = vmul.f32 %v536, %v521
        %v538 = vmul.f32 %v536, %v522
        %v539 = vadd.f32 %v506, %v537
        %v540 = vadd.f32 %v507, %v538
        %s541 = sld [smem:[#allocation9 + $0x103]]
        %v542 = vstv %s541
        %v543 = vmul.f32 %v542, %v521
        %v544 = vmul.f32 %v542, %v522
        %v545 = vadd.f32 %v512, %v543
        %v546 = vadd.f32 %v513, %v544
        %s547 = sld [smem:[#allocation9 + $0x104]]
        %v548 = vstv %s547
        %v549 = vmul.f32 %v548, %v521
        %v550 = vmul.f32 %v548, %v522
        %v551 = vadd.f32 %v518, %v549
        %v552 = vadd.f32 %v519, %v550
        %s553 = sld [smem:[#allocation10]]
        %v554 = vstv %s553
        %v555 = vadd.f32 %v527, %v554
        %v556 = vadd.f32 %v528, %v554
        %s557 = sld [smem:[#allocation10 + $0x1]]
        %v558 = vstv %s557
        %v559 = vadd.f32 %v533, %v558
        %v560 = vadd.f32 %v534, %v558
        %s561 = sld [smem:[#allocation10 + $0x2]]
        %v562 = vstv %s561
        %v563 = vadd.f32 %v539, %v562
        %v564 = vadd.f32 %v540, %v562
        %s565 = sld [smem:[#allocation10 + $0x3]]
        %v566 = vstv %s565
        %v567 = vadd.f32 %v545, %v566
        %v568 = vadd.f32 %v546, %v566
        %s569 = sld [smem:[#allocation10 + $0x4]]
        %v570 = vstv %s569
        %v571 = vadd.f32 %v551, %v570
        %v572 = vadd.f32 %v552, %v570
        %v573 = vxor.u32 %v555, 2147483648
        %v574 = vxor.u32 %v556, 2147483648
        %v575 = vmul.f32 %v573, 1.442695
        %v576 = vpow.pop %v575
        %v577 = vmul.f32 %v574, 1.442695
        %v578 = vpow.pop %v577
        %v579 = vadd.f32 %v576, 1.0
        %v580 = vadd.f32 %v578, 1.0
        %v581 = vrcp.pop %v579
        %v582 = vmul.f32 1.0, %v581
        %v583 = vrcp.pop %v580
        %v584 = vmul.f32 1.0, %v583
        %v585 = vmul.f32 %v555, %v582
        %v586 = vmul.f32 %v556, %v584
        %589 = vrot.lane.b32.xlu0 %v585, 1
        %v590 = vpop.permute.xlu0 %589
        %591 = vrot.lane.b32.xlu0 %v586, 1
        %v592 = vpop.permute.xlu0 %591
        %vm595 = vcmask 89096
        %596 = vst.msk [vmem:[#allocation3 + $0x1] sm:$0xff] %vm595, %v590
        %vm597 = vcmask 82952
        %598 = vst.msk [vmem:[#allocation3 + $0x9] sm:$0x3] %vm597, %v592
        %601 = vrot.lane.b32.xlu0 %v555, 1
        %v602 = vpop.permute.xlu0 %601
        %603 = vrot.lane.b32.xlu0 %v556, 1
        %v604 = vpop.permute.xlu0 %603
        %s607 = scalar_lea.vmem [#allocation3], 80
        %608 = vst.msk [vmem:[%s607 + $0x1] sm:$0xff] %vm595, %v602
        %609 = vst.msk [vmem:[%s607 + $0x9] sm:$0x3] %vm597, %v604
        %610 = vrot.lane.b32.xlu0 %v555, 2
        %v611 = vpop.permute.xlu0 %610
        %612 = vrot.lane.b32.xlu0 %v556, 2
        %v613 = vpop.permute.xlu0 %612
        %s616 = scalar_lea.vmem [#allocation4], 80
        %vm617 = vcmask 97296
        %618 = vst.msk [vmem:[%s616 + $0x2] sm:$0xff] %vm617, %v611
        %vm619 = vcmask 91152
        %620 = vst.msk [vmem:[%s616 + $0xa] sm:$0x3] %vm619, %v613
        %621 = vrot.lane.b32.xlu0 %v585, 2
        %v622 = vpop.permute.xlu0 %621
        %623 = vrot.lane.b32.xlu0 %v586, 2
        %v624 = vpop.permute.xlu0 %623
        %s627 = scalar_lea.vmem [#allocation4], 240
        %628 = vst.msk [vmem:[%s627 + $0x2] sm:$0xff] %vm617, %v622
        %629 = vst.msk [vmem:[%s627 + $0xa] sm:$0x3] %vm619, %v624
        %v630 = vxor.u32 %v559, 2147483648
        %v631 = vxor.u32 %v560, 2147483648
        %v632 = vmul.f32 %v630, 1.442695
        %v633 = vpow.pop %v632
        %v634 = vmul.f32 %v631, 1.442695
        %v635 = vpow.pop %v634
        %v636 = vadd.f32 %v633, 1.0
        %v637 = vadd.f32 %v635, 1.0
        %v638 = vrcp.pop %v636
        %v639 = vmul.f32 1.0, %v638
        %v640 = vrcp.pop %v637
        %v641 = vmul.f32 1.0, %v640
        %v642 = vmul.f32 %v559, %v639
        %v643 = vmul.f32 %v560, %v641
        %646 = vrot.lane.b32.xlu0 %v642, 1
        %v647 = vpop.permute.xlu0 %646
        %648 = vrot.lane.b32.xlu0 %v643, 1
        %v649 = vpop.permute.xlu0 %648
        %s652 = scalar_lea.vmem [#allocation3], 16
        %653 = vst.msk [vmem:[%s652 + $0x1] sm:$0xff] %vm595, %v647
        %654 = vst.msk [vmem:[%s652 + $0x9] sm:$0x3] %vm597, %v649
        %657 = vrot.lane.b32.xlu0 %v559, 1
        %v658 = vpop.permute.xlu0 %657
        %659 = vrot.lane.b32.xlu0 %v560, 1
        %v660 = vpop.permute.xlu0 %659
        %s663 = scalar_lea.vmem [#allocation3], 96
        %664 = vst.msk [vmem:[%s663 + $0x1] sm:$0xff] %vm595, %v658
        %665 = vst.msk [vmem:[%s663 + $0x9] sm:$0x3] %vm597, %v660
        %666 = vrot.lane.b32.xlu0 %v559, 2
        %v667 = vpop.permute.xlu0 %666
        %668 = vrot.lane.b32.xlu0 %v560, 2
        %v669 = vpop.permute.xlu0 %668
        %s672 = scalar_lea.vmem [#allocation4], 96
        %673 = vst.msk [vmem:[%s672 + $0x2] sm:$0xff] %vm617, %v667
        %674 = vst.msk [vmem:[%s672 + $0xa] sm:$0x3] %vm619, %v669
        %675 = vrot.lane.b32.xlu0 %v642, 2
        %v676 = vpop.permute.xlu0 %675
        %677 = vrot.lane.b32.xlu0 %v643, 2
        %v678 = vpop.permute.xlu0 %677
        %s681 = scalar_lea.vmem [#allocation4], 256
        %682 = vst.msk [vmem:[%s681 + $0x2] sm:$0xff] %vm617, %v676
        %683 = vst.msk [vmem:[%s681 + $0xa] sm:$0x3] %vm619, %v678
        %v684 = vxor.u32 %v563, 2147483648
        %v685 = vxor.u32 %v564, 2147483648
        %v686 = vmul.f32 %v684, 1.442695
        %v687 = vpow.pop %v686
        %v688 = vmul.f32 %v685, 1.442695
        %v689 = vpow.pop %v688
        %v690 = vadd.f32 %v687, 1.0
        %v691 = vadd.f32 %v689, 1.0
        %v692 = vrcp.pop %v690
        %v693 = vmul.f32 1.0, %v692
        %v694 = vrcp.pop %v691
        %v695 = vmul.f32 1.0, %v694
        %v696 = vmul.f32 %v563, %v693
        %v697 = vmul.f32 %v564, %v695
        %700 = vrot.lane.b32.xlu0 %v696, 1
        %v701 = vpop.permute.xlu0 %700
        %702 = vrot.lane.b32.xlu0 %v697, 1
        %v703 = vpop.permute.xlu0 %702
        %s706 = scalar_lea.vmem [#allocation3], 32
        %707 = vst.msk [vmem:[%s706 + $0x1] sm:$0xff] %vm595, %v701
        %708 = vst.msk [vmem:[%s706 + $0x9] sm:$0x3] %vm597, %v703
        %711 = vrot.lane.b32.xlu0 %v563, 1
        %v712 = vpop.permute.xlu0 %711
        %713 = vrot.lane.b32.xlu0 %v564, 1
        %v714 = vpop.permute.xlu0 %713
        %s717 = scalar_lea.vmem [#allocation3], 112
        %718 = vst.msk [vmem:[%s717 + $0x1] sm:$0xff] %vm595, %v712
        %719 = vst.msk [vmem:[%s717 + $0x9] sm:$0x3] %vm597, %v714
        %720 = vrot.lane.b32.xlu0 %v563, 2
        %v721 = vpop.permute.xlu0 %720
        %722 = vrot.lane.b32.xlu0 %v564, 2
        %v723 = vpop.permute.xlu0 %722
        %s726 = scalar_lea.vmem [#allocation4], 112
        %727 = vst.msk [vmem:[%s726 + $0x2] sm:$0xff] %vm617, %v721
        %728 = vst.msk [vmem:[%s726 + $0xa] sm:$0x3] %vm619, %v723
        %729 = vrot.lane.b32.xlu0 %v696, 2
        %v730 = vpop.permute.xlu0 %729
        %731 = vrot.lane.b32.xlu0 %v697, 2
        %v732 = vpop.permute.xlu0 %731
        %s735 = scalar_lea.vmem [#allocation4], 272
        %736 = vst.msk [vmem:[%s735 + $0x2] sm:$0xff] %vm617, %v730
        %737 = vst.msk [vmem:[%s735 + $0xa] sm:$0x3] %vm619, %v732
        %v738 = vxor.u32 %v567, 2147483648
        %v739 = vxor.u32 %v568, 2147483648
        %v740 = vmul.f32 %v738, 1.442695
        %v741 = vpow.pop %v740
        %v742 = vmul.f32 %v739, 1.442695
        %v743 = vpow.pop %v742
        %v744 = vadd.f32 %v741, 1.0
        %v745 = vadd.f32 %v743, 1.0
        %v746 = vrcp.pop %v744
        %v747 = vmul.f32 1.0, %v746
        %v748 = vrcp.pop %v745
        %v749 = vmul.f32 1.0, %v748
        %v750 = vmul.f32 %v567, %v747
        %v751 = vmul.f32 %v568, %v749
        %754 = vrot.lane.b32.xlu0 %v750, 1
        %v755 = vpop.permute.xlu0 %754
        %756 = vrot.lane.b32.xlu0 %v751, 1
        %v757 = vpop.permute.xlu0 %756
        %s760 = scalar_lea.vmem [#allocation3], 48
        %761 = vst.msk [vmem:[%s760 + $0x1] sm:$0xff] %vm595, %v755
        %762 = vst.msk [vmem:[%s760 + $0x9] sm:$0x3] %vm597, %v757
        %765 = vrot.lane.b32.xlu0 %v567, 1
        %v766 = vpop.permute.xlu0 %765
        %767 = vrot.lane.b32.xlu0 %v568, 1
        %v768 = vpop.permute.xlu0 %767
        %s771 = scalar_lea.vmem [#allocation3], 128
        %772 = vst.msk [vmem:[%s771 + $0x1] sm:$0xff] %vm595, %v766
        %773 = vst.msk [vmem:[%s771 + $0x9] sm:$0x3] %vm597, %v768
        %774 = vrot.lane.b32.xlu0 %v567, 2
        %v775 = vpop.permute.xlu0 %774
        %776 = vrot.lane.b32.xlu0 %v568, 2
        %v777 = vpop.permute.xlu0 %776
        %s780 = scalar_lea.vmem [#allocation4], 128
        %781 = vst.msk [vmem:[%s780 + $0x2] sm:$0xff] %vm617, %v775
        %782 = vst.msk [vmem:[%s780 + $0xa] sm:$0x3] %vm619, %v777
        %783 = vrot.lane.b32.xlu0 %v750, 2
        %v784 = vpop.permute.xlu0 %783
        %785 = vrot.lane.b32.xlu0 %v751, 2
        %v786 = vpop.permute.xlu0 %785
        %s789 = scalar_lea.vmem [#allocation4], 288
        %790 = vst.msk [vmem:[%s789 + $0x2] sm:$0xff] %vm617, %v784
        %791 = vst.msk [vmem:[%s789 + $0xa] sm:$0x3] %vm619, %v786
        %v792 = vxor.u32 %v571, 2147483648
        %v793 = vxor.u32 %v572, 2147483648
        %v794 = vmul.f32 %v792, 1.442695
        %v795 = vpow.pop %v794
        %v796 = vmul.f32 %v793, 1.442695
        %v797 = vpow.pop %v796
        %v798 = vadd.f32 %v795, 1.0
        %v799 = vadd.f32 %v797, 1.0
        %v800 = vrcp.pop %v798
        %v801 = vmul.f32 1.0, %v800
        %v802 = vrcp.pop %v799
        %v803 = vmul.f32 1.0, %v802
        %v804 = vmul.f32 %v571, %v801
        %v805 = vmul.f32 %v572, %v803
        %808 = vrot.lane.b32.xlu0 %v804, 1
        %v809 = vpop.permute.xlu0 %808
        %810 = vrot.lane.b32.xlu0 %v805, 1
        %v811 = vpop.permute.xlu0 %810
        %s814 = scalar_lea.vmem [#allocation3], 64
        %815 = vst.msk [vmem:[%s814 + $0x1] sm:$0xff] %vm595, %v809
        %816 = vst.msk [vmem:[%s814 + $0x9] sm:$0x3] %vm597, %v811
        %819 = vrot.lane.b32.xlu0 %v571, 1
        %v820 = vpop.permute.xlu0 %819
        %821 = vrot.lane.b32.xlu0 %v572, 1
        %v822 = vpop.permute.xlu0 %821
        %s825 = scalar_lea.vmem [#allocation3], 144
        %826 = vst.msk [vmem:[%s825 + $0x1] sm:$0xff] %vm595, %v820
        %827 = vst.msk [vmem:[%s825 + $0x9] sm:$0x3] %vm597, %v822
        %828 = vrot.lane.b32.xlu0 %v571, 2
        %v829 = vpop.permute.xlu0 %828
        %830 = vrot.lane.b32.xlu0 %v572, 2
        %v831 = vpop.permute.xlu0 %830
        %s834 = scalar_lea.vmem [#allocation4], 144
        %835 = vst.msk [vmem:[%s834 + $0x2] sm:$0xff] %vm617, %v829
        %836 = vst.msk [vmem:[%s834 + $0xa] sm:$0x3] %vm619, %v831
        %837 = vrot.lane.b32.xlu0 %v804, 2
        %v838 = vpop.permute.xlu0 %837
        %839 = vrot.lane.b32.xlu0 %v805, 2
        %v840 = vpop.permute.xlu0 %839
        %s843 = scalar_lea.vmem [#allocation4], 304
        %844 = vst.msk [vmem:[%s843 + $0x2] sm:$0xff] %vm617, %v838
        %845 = vst.msk [vmem:[%s843 + $0xa] sm:$0x3] %vm619, %v840
        %v846 = vld [vmem:[#allocation3] sm:$0xff]
        %v847 = vld [vmem:[#allocation3 + $0x8] sm:$0xf]
        %s848 = sld [smem:[#allocation11]]
        %v849 = vstv %s848
        %v850 = vmul.f32 %v849, %v846
        %v851 = vmul.f32 %v849, %v847
        %s852 = sld [smem:[#allocation11 + $0x1]]
        %v853 = vstv %s852
        %v854 = vmul.f32 %v853, %v846
        %v855 = vmul.f32 %v853, %v847
        %s856 = sld [smem:[#allocation11 + $0x2]]
        %v857 = vstv %s856
        %v858 = vmul.f32 %v857, %v846
        %v859 = vmul.f32 %v857, %v847
        %s860 = sld [smem:[#allocation11 + $0x3]]
        %v861 = vstv %s860
        %v862 = vmul.f32 %v861, %v846
        %v863 = vmul.f32 %v861, %v847
        %s864 = sld [smem:[#allocation11 + $0x4]]
        %v865 = vstv %s864
        %v866 = vmul.f32 %v865, %v846
        %v867 = vmul.f32 %v865, %v847
        %v868 = vld [vmem:[%s652] sm:$0xff]
        %v869 = vld [vmem:[%s652 + $0x8] sm:$0xf]
        %s870 = sld [smem:[#allocation11 + $0x80]]
        %v871 = vstv %s870
        %v872 = vmul.f32 %v871, %v868
        %v873 = vmul.f32 %v871, %v869
        %v874 = vadd.f32 %v850, %v872
        %v875 = vadd.f32 %v851, %v873
        %s876 = sld [smem:[#allocation11 + $0x81]]
        %v877 = vstv %s876
        %v878 = vmul.f32 %v877, %v868
        %v879 = vmul.f32 %v877, %v869
        %v880 = vadd.f32 %v854, %v878
        %v881 = vadd.f32 %v855, %v879
        %s882 = sld [smem:[#allocation11 + $0x82]]
        %v883 = vstv %s882
        %v884 = vmul.f32 %v883, %v868
        %v885 = vmul.f32 %v883, %v869
        %v886 = vadd.f32 %v858, %v884
        %v887 = vadd.f32 %v859, %v885
        %s888 = sld [smem:[#allocation11 + $0x83]]
        %v889 = vstv %s888
        %v890 = vmul.f32 %v889, %v868
        %v891 = vmul.f32 %v889, %v869
        %v892 = vadd.f32 %v862, %v890
        %v893 = vadd.f32 %v863, %v891
        %s894 = sld [smem:[#allocation11 + $0x84]]
        %v895 = vstv %s894
        %v896 = vmul.f32 %v895, %v868
        %v897 = vmul.f32 %v895, %v869
        %v898 = vadd.f32 %v866, %v896
        %v899 = vadd.f32 %v867, %v897
        %v900 = vld [vmem:[%s706] sm:$0xff]
        %v901 = vld [vmem:[%s706 + $0x8] sm:$0xf]
        %s902 = sld [smem:[#allocation11 + $0x100]]
        %v903 = vstv %s902
        %v904 = vmul.f32 %v903, %v900
        %v905 = vmul.f32 %v903, %v901
        %v906 = vadd.f32 %v874, %v904
        %v907 = vadd.f32 %v875, %v905
        %s908 = sld [smem:[#allocation11 + $0x101]]
        %v909 = vstv %s908
        %v910 = vmul.f32 %v909, %v900
        %v911 = vmul.f32 %v909, %v901
        %v912 = vadd.f32 %v880, %v910
        %v913 = vadd.f32 %v881, %v911
        %s914 = sld [smem:[#allocation11 + $0x102]]
        %v915 = vstv %s914
        %v916 = vmul.f32 %v915, %v900
        %v917 = vmul.f32 %v915, %v901
        %v918 = vadd.f32 %v886, %v916
        %v919 = vadd.f32 %v887, %v917
        %s920 = sld [smem:[#allocation11 + $0x103]]
        %v921 = vstv %s920
        %v922 = vmul.f32 %v921, %v900
        %v923 = vmul.f32 %v921, %v901
        %v924 = vadd.f32 %v892, %v922
        %v925 = vadd.f32 %v893, %v923
        %s926 = sld [smem:[#allocation11 + $0x104]]
        %v927 = vstv %s926
        %v928 = vmul.f32 %v927, %v900
        %v929 = vmul.f32 %v927, %v901
        %v930 = vadd.f32 %v898, %v928
        %v931 = vadd.f32 %v899, %v929
        %v932 = vld [vmem:[%s760] sm:$0xff]
        %v933 = vld [vmem:[%s760 + $0x8] sm:$0xf]
        %s934 = sld [smem:[#allocation11 + $0x180]]
        %v935 = vstv %s934
        %v936 = vmul.f32 %v935, %v932
        %v937 = vmul.f32 %v935, %v933
        %v938 = vadd.f32 %v906, %v936
        %v939 = vadd.f32 %v907, %v937
        %s940 = sld [smem:[#allocation11 + $0x181]]
        %v941 = vstv %s940
        %v942 = vmul.f32 %v941, %v932
        %v943 = vmul.f32 %v941, %v933
        %v944 = vadd.f32 %v912, %v942
        %v945 = vadd.f32 %v913, %v943
        %s946 = sld [smem:[#allocation11 + $0x182]]
        %v947 = vstv %s946
        %v948 = vmul.f32 %v947, %v932
        %v949 = vmul.f32 %v947, %v933
        %v950 = vadd.f32 %v918, %v948
        %v951 = vadd.f32 %v919, %v949
        %s952 = sld [smem:[#allocation11 + $0x183]]
        %v953 = vstv %s952
        %v954 = vmul.f32 %v953, %v932
        %v955 = vmul.f32 %v953, %v933
        %v956 = vadd.f32 %v924, %v954
        %v957 = vadd.f32 %v925, %v955
        %s958 = sld [smem:[#allocation11 + $0x184]]
        %v959 = vstv %s958
        %v960 = vmul.f32 %v959, %v932
        %v961 = vmul.f32 %v959, %v933
        %v962 = vadd.f32 %v930, %v960
        %v963 = vadd.f32 %v931, %v961
        %v964 = vld [vmem:[%s814] sm:$0xff]
        %v965 = vld [vmem:[%s814 + $0x8] sm:$0xf]
        %s966 = sld [smem:[#allocation11 + $0x200]]
        %v967 = vstv %s966
        %v968 = vmul.f32 %v967, %v964
        %v969 = vmul.f32 %v967, %v965
        %v970 = vadd.f32 %v938, %v968
        %v971 = vadd.f32 %v939, %v969
        %s972 = sld [smem:[#allocation11 + $0x201]]
        %v973 = vstv %s972
        %v974 = vmul.f32 %v973, %v964
        %v975 = vmul.f32 %v973, %v965
        %v976 = vadd.f32 %v944, %v974
        %v977 = vadd.f32 %v945, %v975
        %s978 = sld [smem:[#allocation11 + $0x202]]
        %v979 = vstv %s978
        %v980 = vmul.f32 %v979, %v964
        %v981 = vmul.f32 %v979, %v965
        %v982 = vadd.f32 %v950, %v980
        %v983 = vadd.f32 %v951, %v981
        %s984 = sld [smem:[#allocation11 + $0x203]]
        %v985 = vstv %s984
        %v986 = vmul.f32 %v985, %v964
        %v987 = vmul.f32 %v985, %v965
        %v988 = vadd.f32 %v956, %v986
        %v989 = vadd.f32 %v957, %v987
        %s990 = sld [smem:[#allocation11 + $0x204]]
        %v991 = vstv %s990
        %v992 = vmul.f32 %v991, %v964
        %v993 = vmul.f32 %v991, %v965
        %v994 = vadd.f32 %v962, %v992
        %v995 = vadd.f32 %v963, %v993
        %v996 = vld [vmem:[%s607] sm:$0xff]
        %v997 = vld [vmem:[%s607 + $0x8] sm:$0xf]
        %s998 = sld [smem:[#allocation11 + $0x280]]
        %v999 = vstv %s998
        %v1000 = vmul.f32 %v999, %v996
        %v1001 = vmul.f32 %v999, %v997
        %v1002 = vadd.f32 %v970, %v1000
        %v1003 = vadd.f32 %v971, %v1001
        %s1004 = sld [smem:[#allocation11 + $0x281]]
        %v1005 = vstv %s1004
        %v1006 = vmul.f32 %v1005, %v996
        %v1007 = vmul.f32 %v1005, %v997
        %v1008 = vadd.f32 %v976, %v1006
        %v1009 = vadd.f32 %v977, %v1007
        %s1010 = sld [smem:[#allocation11 + $0x282]]
        %v1011 = vstv %s1010
        %v1012 = vmul.f32 %v1011, %v996
        %v1013 = vmul.f32 %v1011, %v997
        %v1014 = vadd.f32 %v982, %v1012
        %v1015 = vadd.f32 %v983, %v1013
        %s1016 = sld [smem:[#allocation11 + $0x283]]
        %v1017 = vstv %s1016
        %v1018 = vmul.f32 %v1017, %v996
        %v1019 = vmul.f32 %v1017, %v997
        %v1020 = vadd.f32 %v988, %v1018
        %v1021 = vadd.f32 %v989, %v1019
        %s1022 = sld [smem:[#allocation11 + $0x284]]
        %v1023 = vstv %s1022
        %v1024 = vmul.f32 %v1023, %v996
        %v1025 = vmul.f32 %v1023, %v997
        %v1026 = vadd.f32 %v994, %v1024
        %v1027 = vadd.f32 %v995, %v1025
        %v1028 = vld [vmem:[%s663] sm:$0xff]
        %v1029 = vld [vmem:[%s663 + $0x8] sm:$0xf]
        %s1030 = sld [smem:[#allocation11 + $0x300]]
        %v1031 = vstv %s1030
        %v1032 = vmul.f32 %v1031, %v1028
        %v1033 = vmul.f32 %v1031, %v1029
        %v1034 = vadd.f32 %v1002, %v1032
        %v1035 = vadd.f32 %v1003, %v1033
        %s1036 = sld [smem:[#allocation11 + $0x301]]
        %v1037 = vstv %s1036
        %v1038 = vmul.f32 %v1037, %v1028
        %v1039 = vmul.f32 %v1037, %v1029
        %v1040 = vadd.f32 %v1008, %v1038
        %v1041 = vadd.f32 %v1009, %v1039
        %s1042 = sld [smem:[#allocation11 + $0x302]]
        %v1043 = vstv %s1042
        %v1044 = vmul.f32 %v1043, %v1028
        %v1045 = vmul.f32 %v1043, %v1029
        %v1046 = vadd.f32 %v1014, %v1044
        %v1047 = vadd.f32 %v1015, %v1045
        %s1048 = sld [smem:[#allocation11 + $0x303]]
        %v1049 = vstv %s1048
        %v1050 = vmul.f32 %v1049, %v1028
        %v1051 = vmul.f32 %v1049, %v1029
        %v1052 = vadd.f32 %v1020, %v1050
        %v1053 = vadd.f32 %v1021, %v1051
        %s1054 = sld [smem:[#allocation11 + $0x304]]
        %v1055 = vstv %s1054
        %v1056 = vmul.f32 %v1055, %v1028
        %v1057 = vmul.f32 %v1055, %v1029
        %v1058 = vadd.f32 %v1026, %v1056
        %v1059 = vadd.f32 %v1027, %v1057
        %v1060 = vld [vmem:[%s717] sm:$0xff]
        %v1061 = vld [vmem:[%s717 + $0x8] sm:$0xf]
        %s1062 = sld [smem:[#allocation11 + $0x380]]
        %v1063 = vstv %s1062
        %v1064 = vmul.f32 %v1063, %v1060
        %v1065 = vmul.f32 %v1063, %v1061
        %v1066 = vadd.f32 %v1034, %v1064
        %v1067 = vadd.f32 %v1035, %v1065
        %s1068 = sld [smem:[#allocation11 + $0x381]]
        %v1069 = vstv %s1068
        %v1070 = vmul.f32 %v1069, %v1060
        %v1071 = vmul.f32 %v1069, %v1061
        %v1072 = vadd.f32 %v1040, %v1070
        %v1073 = vadd.f32 %v1041, %v1071
        %s1074 = sld [smem:[#allocation11 + $0x382]]
        %v1075 = vstv %s1074
        %v1076 = vmul.f32 %v1075, %v1060
        %v1077 = vmul.f32 %v1075, %v1061
        %v1078 = vadd.f32 %v1046, %v1076
        %v1079 = vadd.f32 %v1047, %v1077
        %s1080 = sld [smem:[#allocation11 + $0x383]]
        %v1081 = vstv %s1080
        %v1082 = vmul.f32 %v1081, %v1060
        %v1083 = vmul.f32 %v1081, %v1061
        %v1084 = vadd.f32 %v1052, %v1082
        %v1085 = vadd.f32 %v1053, %v1083
        %s1086 = sld [smem:[#allocation11 + $0x384]]
        %v1087 = vstv %s1086
        %v1088 = vmul.f32 %v1087, %v1060
        %v1089 = vmul.f32 %v1087, %v1061
        %v1090 = vadd.f32 %v1058, %v1088
        %v1091 = vadd.f32 %v1059, %v1089
        %v1092 = vld [vmem:[%s771] sm:$0xff]
        %v1093 = vld [vmem:[%s771 + $0x8] sm:$0xf]
        %s1094 = sld [smem:[#allocation11 + $0x400]]
        %v1095 = vstv %s1094
        %v1096 = vmul.f32 %v1095, %v1092
        %v1097 = vmul.f32 %v1095, %v1093
        %v1098 = vadd.f32 %v1066, %v1096
        %v1099 = vadd.f32 %v1067, %v1097
        %s1100 = sld [smem:[#allocation11 + $0x401]]
        %v1101 = vstv %s1100
        %v1102 = vmul.f32 %v1101, %v1092
        %v1103 = vmul.f32 %v1101, %v1093
        %v1104 = vadd.f32 %v1072, %v1102
        %v1105 = vadd.f32 %v1073, %v1103
        %s1106 = sld [smem:[#allocation11 + $0x402]]
        %v1107 = vstv %s1106
        %v1108 = vmul.f32 %v1107, %v1092
        %v1109 = vmul.f32 %v1107, %v1093
        %v1110 = vadd.f32 %v1078, %v1108
        %v1111 = vadd.f32 %v1079, %v1109
        %s1112 = sld [smem:[#allocation11 + $0x403]]
        %v1113 = vstv %s1112
        %v1114 = vmul.f32 %v1113, %v1092
        %v1115 = vmul.f32 %v1113, %v1093
        %v1116 = vadd.f32 %v1084, %v1114
        %v1117 = vadd.f32 %v1085, %v1115
        %s1118 = sld [smem:[#allocation11 + $0x404]]
        %v1119 = vstv %s1118
        %v1120 = vmul.f32 %v1119, %v1092
        %v1121 = vmul.f32 %v1119, %v1093
        %v1122 = vadd.f32 %v1090, %v1120
        %v1123 = vadd.f32 %v1091, %v1121
        %v1124 = vld [vmem:[%s825] sm:$0xff]
        %v1125 = vld [vmem:[%s825 + $0x8] sm:$0xf]
        %s1126 = sld [smem:[#allocation11 + $0x480]]
        %v1127 = vstv %s1126
        %v1128 = vmul.f32 %v1127, %v1124
        %v1129 = vmul.f32 %v1127, %v1125
        %v1130 = vadd.f32 %v1098, %v1128
        %v1131 = vadd.f32 %v1099, %v1129
        %s1132 = sld [smem:[#allocation11 + $0x481]]
        %v1133 = vstv %s1132
        %v1134 = vmul.f32 %v1133, %v1124
        %v1135 = vmul.f32 %v1133, %v1125
        %v1136 = vadd.f32 %v1104, %v1134
        %v1137 = vadd.f32 %v1105, %v1135
        %s1138 = sld [smem:[#allocation11 + $0x482]]
        %v1139 = vstv %s1138
        %v1140 = vmul.f32 %v1139, %v1124
        %v1141 = vmul.f32 %v1139, %v1125
        %v1142 = vadd.f32 %v1110, %v1140
        %v1143 = vadd.f32 %v1111, %v1141
        %s1144 = sld [smem:[#allocation11 + $0x483]]
        %v1145 = vstv %s1144
        %v1146 = vmul.f32 %v1145, %v1124
        %v1147 = vmul.f32 %v1145, %v1125
        %v1148 = vadd.f32 %v1116, %v1146
        %v1149 = vadd.f32 %v1117, %v1147
        %s1150 = sld [smem:[#allocation11 + $0x484]]
        %v1151 = vstv %s1150
        %v1152 = vmul.f32 %v1151, %v1124
        %v1153 = vmul.f32 %v1151, %v1125
        %v1154 = vadd.f32 %v1122, %v1152
        %v1155 = vadd.f32 %v1123, %v1153
        %s1156 = sld [smem:[#allocation13]]
        %v1157 = vstv %s1156
        %v1158 = vadd.f32 %v1130, %v1157
        %v1159 = vadd.f32 %v1131, %v1157
        %s1160 = sld [smem:[#allocation13 + $0x1]]
        %v1161 = vstv %s1160
        %v1162 = vadd.f32 %v1136, %v1161
        %v1163 = vadd.f32 %v1137, %v1161
        %s1164 = sld [smem:[#allocation13 + $0x2]]
        %v1165 = vstv %s1164
        %v1166 = vadd.f32 %v1142, %v1165
        %v1167 = vadd.f32 %v1143, %v1165
        %s1168 = sld [smem:[#allocation13 + $0x3]]
        %v1169 = vstv %s1168
        %v1170 = vadd.f32 %v1148, %v1169
        %v1171 = vadd.f32 %v1149, %v1169
        %s1172 = sld [smem:[#allocation13 + $0x4]]
        %v1173 = vstv %s1172
        %v1174 = vadd.f32 %v1154, %v1173
        %v1175 = vadd.f32 %v1155, %v1173
        %v1176 = vxor.u32 %v1158, 2147483648
        %v1177 = vxor.u32 %v1159, 2147483648
        %v1178 = vmul.f32 %v1176, 1.442695
        %v1179 = vpow.pop %v1178
        %v1180 = vmul.f32 %v1177, 1.442695
        %v1181 = vpow.pop %v1180
        %v1182 = vadd.f32 %v1179, 1.0
        %v1183 = vadd.f32 %v1181, 1.0
        %v1184 = vrcp.pop %v1182
        %v1185 = vmul.f32 1.0, %v1184
        %v1186 = vrcp.pop %v1183
        %v1187 = vmul.f32 1.0, %v1186
        %v1188 = vmul.f32 %v1158, %v1185
        %v1189 = vmul.f32 %v1159, %v1187
        %1192 = vrot.lane.b32.xlu0 %v1188, 1
        %v1193 = vpop.permute.xlu0 %1192
        %1194 = vrot.lane.b32.xlu0 %v1189, 1
        %v1195 = vpop.permute.xlu0 %1194
        %vm1198 = vcmask 105480
        %1199 = vst.msk [vmem:[#allocation4 + $0x1] sm:$0xff] %vm1198, %v1193
        %vm1200 = vcmask 101384
        %1201 = vst.msk [vmem:[#allocation4 + $0x9] sm:$0xf] %vm1200, %v1195
        %1204 = vrot.lane.b32.xlu0 %v1158, 1
        %v1205 = vpop.permute.xlu0 %1204
        %1206 = vrot.lane.b32.xlu0 %v1159, 1
        %v1207 = vpop.permute.xlu0 %1206
        %s1210 = scalar_lea.vmem [#allocation4], 160
        %1211 = vst.msk [vmem:[%s1210 + $0x1] sm:$0xff] %vm1198, %v1205
        %1212 = vst.msk [vmem:[%s1210 + $0x9] sm:$0xf] %vm1200, %v1207
        %v1213 = vxor.u32 %v1162, 2147483648
        %v1214 = vxor.u32 %v1163, 2147483648
        %v1215 = vmul.f32 %v1213, 1.442695
        %v1216 = vpow.pop %v1215
        %v1217 = vmul.f32 %v1214, 1.442695
        %v1218 = vpow.pop %v1217
        %v1219 = vadd.f32 %v1216, 1.0
        %v1220 = vadd.f32 %v1218, 1.0
        %v1221 = vrcp.pop %v1219
        %v1222 = vmul.f32 1.0, %v1221
        %v1223 = vrcp.pop %v1220
        %v1224 = vmul.f32 1.0, %v1223
        %v1225 = vmul.f32 %v1162, %v1222
        %v1226 = vmul.f32 %v1163, %v1224
        %1229 = vrot.lane.b32.xlu0 %v1225, 1
        %v1230 = vpop.permute.xlu0 %1229
        %1231 = vrot.lane.b32.xlu0 %v1226, 1
        %v1232 = vpop.permute.xlu0 %1231
        %s1235 = scalar_lea.vmem [#allocation4], 16
        %1236 = vst.msk [vmem:[%s1235 + $0x1] sm:$0xff] %vm1198, %v1230
        %1237 = vst.msk [vmem:[%s1235 + $0x9] sm:$0xf] %vm1200, %v1232
        %1240 = vrot.lane.b32.xlu0 %v1162, 1
        %v1241 = vpop.permute.xlu0 %1240
        %1242 = vrot.lane.b32.xlu0 %v1163, 1
        %v1243 = vpop.permute.xlu0 %1242
        %s1246 = scalar_lea.vmem [#allocation4], 176
        %1247 = vst.msk [vmem:[%s1246 + $0x1] sm:$0xff] %vm1198, %v1241
        %1248 = vst.msk [vmem:[%s1246 + $0x9] sm:$0xf] %vm1200, %v1243
        %v1249 = vxor.u32 %v1166, 2147483648
        %v1250 = vxor.u32 %v1167, 2147483648
        %v1251 = vmul.f32 %v1249, 1.442695
        %v1252 = vpow.pop %v1251
        %v1253 = vmul.f32 %v1250, 1.442695
        %v1254 = vpow.pop %v1253
        %v1255 = vadd.f32 %v1252, 1.0
        %v1256 = vadd.f32 %v1254, 1.0
        %v1257 = vrcp.pop %v1255
        %v1258 = vmul.f32 1.0, %v1257
        %v1259 = vrcp.pop %v1256
        %v1260 = vmul.f32 1.0, %v1259
        %v1261 = vmul.f32 %v1166, %v1258
        %v1262 = vmul.f32 %v1167, %v1260
        %1265 = vrot.lane.b32.xlu0 %v1261, 1
        %v1266 = vpop.permute.xlu0 %1265
        %1267 = vrot.lane.b32.xlu0 %v1262, 1
        %v1268 = vpop.permute.xlu0 %1267
        %s1271 = scalar_lea.vmem [#allocation4], 32
        %1272 = vst.msk [vmem:[%s1271 + $0x1] sm:$0xff] %vm1198, %v1266
        %1273 = vst.msk [vmem:[%s1271 + $0x9] sm:$0xf] %vm1200, %v1268
        %1276 = vrot.lane.b32.xlu0 %v1166, 1
        %v1277 = vpop.permute.xlu0 %1276
        %1278 = vrot.lane.b32.xlu0 %v1167, 1
        %v1279 = vpop.permute.xlu0 %1278
        %s1282 = scalar_lea.vmem [#allocation4], 192
        %1283 = vst.msk [vmem:[%s1282 + $0x1] sm:$0xff] %vm1198, %v1277
        %1284 = vst.msk [vmem:[%s1282 + $0x9] sm:$0xf] %vm1200, %v1279
        %v1285 = vxor.u32 %v1170, 2147483648
        %v1286 = vxor.u32 %v1171, 2147483648
        %v1287 = vmul.f32 %v1285, 1.442695
        %v1288 = vpow.pop %v1287
        %v1289 = vmul.f32 %v1286, 1.442695
        %v1290 = vpow.pop %v1289
        %v1291 = vadd.f32 %v1288, 1.0
        %v1292 = vadd.f32 %v1290, 1.0
        %v1293 = vrcp.pop %v1291
        %v1294 = vmul.f32 1.0, %v1293
        %v1295 = vrcp.pop %v1292
        %v1296 = vmul.f32 1.0, %v1295
        %v1297 = vmul.f32 %v1170, %v1294
        %v1298 = vmul.f32 %v1171, %v1296
        %1301 = vrot.lane.b32.xlu0 %v1297, 1
        %v1302 = vpop.permute.xlu0 %1301
        %1303 = vrot.lane.b32.xlu0 %v1298, 1
        %v1304 = vpop.permute.xlu0 %1303
        %s1307 = scalar_lea.vmem [#allocation4], 48
        %1308 = vst.msk [vmem:[%s1307 + $0x1] sm:$0xff] %vm1198, %v1302
        %1309 = vst.msk [vmem:[%s1307 + $0x9] sm:$0xf] %vm1200, %v1304
        %1312 = vrot.lane.b32.xlu0 %v1170, 1
        %v1313 = vpop.permute.xlu0 %1312
        %1314 = vrot.lane.b32.xlu0 %v1171, 1
        %v1315 = vpop.permute.xlu0 %1314
        %s1318 = scalar_lea.vmem [#allocation4], 208
        %1319 = vst.msk [vmem:[%s1318 + $0x1] sm:$0xff] %vm1198, %v1313
        %1320 = vst.msk [vmem:[%s1318 + $0x9] sm:$0xf] %vm1200, %v1315
        %v1321 = vxor.u32 %v1174, 2147483648
        %v1322 = vxor.u32 %v1175, 2147483648
        %v1323 = vmul.f32 %v1321, 1.442695
        %v1324 = vpow.pop %v1323
        %v1325 = vmul.f32 %v1322, 1.442695
        %v1326 = vpow.pop %v1325
        %v1327 = vadd.f32 %v1324, 1.0
        %v1328 = vadd.f32 %v1326, 1.0
        %v1329 = vrcp.pop %v1327
        %v1330 = vmul.f32 1.0, %v1329
        %v1331 = vrcp.pop %v1328
        %v1332 = vmul.f32 1.0, %v1331
        %v1333 = vmul.f32 %v1174, %v1330
        %v1334 = vmul.f32 %v1175, %v1332
        %1337 = vrot.lane.b32.xlu0 %v1333, 1
        %v1338 = vpop.permute.xlu0 %1337
        %1339 = vrot.lane.b32.xlu0 %v1334, 1
        %v1340 = vpop.permute.xlu0 %1339
        %s1343 = scalar_lea.vmem [#allocation4], 64
        %1344 = vst.msk [vmem:[%s1343 + $0x1] sm:$0xff] %vm1198, %v1338
        %1345 = vst.msk [vmem:[%s1343 + $0x9] sm:$0xf] %vm1200, %v1340
        %1348 = vrot.lane.b32.xlu0 %v1174, 1
        %v1349 = vpop.permute.xlu0 %1348
        %1350 = vrot.lane.b32.xlu0 %v1175, 1
        %v1351 = vpop.permute.xlu0 %1350
        %s1354 = scalar_lea.vmem [#allocation4], 224
        %1355 = vst.msk [vmem:[%s1354 + $0x1] sm:$0xff] %vm1198, %v1349
        %1356 = vst.msk [vmem:[%s1354 + $0x9] sm:$0xf] %vm1200, %v1351
        %v1357 = vld [vmem:[#allocation4] sm:$0xff]
        %v1358 = vld [vmem:[#allocation4 + $0x8] sm:$0x3f]
        %s1359 = sld [smem:[#allocation15]]
        %v1360 = vstv %s1359
        %v1361 = vmul.f32 %v1360, %v1357
        %v1362 = vmul.f32 %v1360, %v1358
        %s1363 = sld [smem:[#allocation15 + $0x1]]
        %v1364 = vstv %s1363
        %v1365 = vmul.f32 %v1364, %v1357
        %v1366 = vmul.f32 %v1364, %v1358
        %s1367 = sld [smem:[#allocation15 + $0x2]]
        %v1368 = vstv %s1367
        %v1369 = vmul.f32 %v1368, %v1357
        %v1370 = vmul.f32 %v1368, %v1358
        %v1371 = vld [vmem:[%s1235] sm:$0xff]
        %v1372 = vld [vmem:[%s1235 + $0x8] sm:$0x3f]
        %s1373 = sld [smem:[#allocation15 + $0x80]]
        %v1374 = vstv %s1373
        %v1375 = vmul.f32 %v1374, %v1371
        %v1376 = vmul.f32 %v1374, %v1372
        %v1377 = vadd.f32 %v1361, %v1375
        %v1378 = vadd.f32 %v1362, %v1376
        %s1379 = sld [smem:[#allocation15 + $0x81]]
        %v1380 = vstv %s1379
        %v1381 = vmul.f32 %v1380, %v1371
        %v1382 = vmul.f32 %v1380, %v1372
        %v1383 = vadd.f32 %v1365, %v1381
        %v1384 = vadd.f32 %v1366, %v1382
        %s1385 = sld [smem:[#allocation15 + $0x82]]
        %v1386 = vstv %s1385
        %v1387 = vmul.f32 %v1386, %v1371
        %v1388 = vmul.f32 %v1386, %v1372
        %v1389 = vadd.f32 %v1369, %v1387
        %v1390 = vadd.f32 %v1370, %v1388
        %v1391 = vld [vmem:[%s1271] sm:$0xff]
        %v1392 = vld [vmem:[%s1271 + $0x8] sm:$0x3f]
        %s1393 = sld [smem:[#allocation15 + $0x100]]
        %v1394 = vstv %s1393
        %v1395 = vmul.f32 %v1394, %v1391
        %v1396 = vmul.f32 %v1394, %v1392
        %v1397 = vadd.f32 %v1377, %v1395
        %v1398 = vadd.f32 %v1378, %v1396
        %s1399 = sld [smem:[#allocation15 + $0x101]]
        %v1400 = vstv %s1399
        %v1401 = vmul.f32 %v1400, %v1391
        %v1402 = vmul.f32 %v1400, %v1392
        %v1403 = vadd.f32 %v1383, %v1401
        %v1404 = vadd.f32 %v1384, %v1402
        %s1405 = sld [smem:[#allocation15 + $0x102]]
        %v1406 = vstv %s1405
        %v1407 = vmul.f32 %v1406, %v1391
        %v1408 = vmul.f32 %v1406, %v1392
        %v1409 = vadd.f32 %v1389, %v1407
        %v1410 = vadd.f32 %v1390, %v1408
        %v1411 = vld [vmem:[%s1307] sm:$0xff]
        %v1412 = vld [vmem:[%s1307 + $0x8] sm:$0x3f]
        %s1413 = sld [smem:[#allocation15 + $0x180]]
        %v1414 = vstv %s1413
        %v1415 = vmul.f32 %v1414, %v1411
        %v1416 = vmul.f32 %v1414, %v1412
        %v1417 = vadd.f32 %v1397, %v1415
        %v1418 = vadd.f32 %v1398, %v1416
        %s1419 = sld [smem:[#allocation15 + $0x181]]
        %v1420 = vstv %s1419
        %v1421 = vmul.f32 %v1420, %v1411
        %v1422 = vmul.f32 %v1420, %v1412
        %v1423 = vadd.f32 %v1403, %v1421
        %v1424 = vadd.f32 %v1404, %v1422
        %s1425 = sld [smem:[#allocation15 + $0x182]]
        %v1426 = vstv %s1425
        %v1427 = vmul.f32 %v1426, %v1411
        %v1428 = vmul.f32 %v1426, %v1412
        %v1429 = vadd.f32 %v1409, %v1427
        %v1430 = vadd.f32 %v1410, %v1428
        %v1431 = vld [vmem:[%s1343] sm:$0xff]
        %v1432 = vld [vmem:[%s1343 + $0x8] sm:$0x3f]
        %s1433 = sld [smem:[#allocation15 + $0x200]]
        %v1434 = vstv %s1433
        %v1435 = vmul.f32 %v1434, %v1431
        %v1436 = vmul.f32 %v1434, %v1432
        %v1437 = vadd.f32 %v1417, %v1435
        %v1438 = vadd.f32 %v1418, %v1436
        %s1439 = sld [smem:[#allocation15 + $0x201]]
        %v1440 = vstv %s1439
        %v1441 = vmul.f32 %v1440, %v1431
        %v1442 = vmul.f32 %v1440, %v1432
        %v1443 = vadd.f32 %v1423, %v1441
        %v1444 = vadd.f32 %v1424, %v1442
        %s1445 = sld [smem:[#allocation15 + $0x202]]
        %v1446 = vstv %s1445
        %v1447 = vmul.f32 %v1446, %v1431
        %v1448 = vmul.f32 %v1446, %v1432
        %v1449 = vadd.f32 %v1429, %v1447
        %v1450 = vadd.f32 %v1430, %v1448
        %v1451 = vld [vmem:[%s616] sm:$0xff]
        %v1452 = vld [vmem:[%s616 + $0x8] sm:$0x3f]
        %s1453 = sld [smem:[#allocation15 + $0x280]]
        %v1454 = vstv %s1453
        %v1455 = vmul.f32 %v1454, %v1451
        %v1456 = vmul.f32 %v1454, %v1452
        %v1457 = vadd.f32 %v1437, %v1455
        %v1458 = vadd.f32 %v1438, %v1456
        %s1459 = sld [smem:[#allocation15 + $0x281]]
        %v1460 = vstv %s1459
        %v1461 = vmul.f32 %v1460, %v1451
        %v1462 = vmul.f32 %v1460, %v1452
        %v1463 = vadd.f32 %v1443, %v1461
        %v1464 = vadd.f32 %v1444, %v1462
        %s1465 = sld [smem:[#allocation15 + $0x282]]
        %v1466 = vstv %s1465
        %v1467 = vmul.f32 %v1466, %v1451
        %v1468 = vmul.f32 %v1466, %v1452
        %v1469 = vadd.f32 %v1449, %v1467
        %v1470 = vadd.f32 %v1450, %v1468
        %v1471 = vld [vmem:[%s672] sm:$0xff]
        %v1472 = vld [vmem:[%s672 + $0x8] sm:$0x3f]
        %s1473 = sld [smem:[#allocation15 + $0x300]]
        %v1474 = vstv %s1473
        %v1475 = vmul.f32 %v1474, %v1471
        %v1476 = vmul.f32 %v1474, %v1472
        %v1477 = vadd.f32 %v1457, %v1475
        %v1478 = vadd.f32 %v1458, %v1476
        %s1479 = sld [smem:[#allocation15 + $0x301]]
        %v1480 = vstv %s1479
        %v1481 = vmul.f32 %v1480, %v1471
        %v1482 = vmul.f32 %v1480, %v1472
        %v1483 = vadd.f32 %v1463, %v1481
        %v1484 = vadd.f32 %v1464, %v1482
        %s1485 = sld [smem:[#allocation15 + $0x302]]
        %v1486 = vstv %s1485
        %v1487 = vmul.f32 %v1486, %v1471
        %v1488 = vmul.f32 %v1486, %v1472
        %v1489 = vadd.f32 %v1469, %v1487
        %v1490 = vadd.f32 %v1470, %v1488
        %v1491 = vld [vmem:[%s726] sm:$0xff]
        %v1492 = vld [vmem:[%s726 + $0x8] sm:$0x3f]
        %s1493 = sld [smem:[#allocation15 + $0x380]]
        %v1494 = vstv %s1493
        %v1495 = vmul.f32 %v1494, %v1491
        %v1496 = vmul.f32 %v1494, %v1492
        %v1497 = vadd.f32 %v1477, %v1495
        %v1498 = vadd.f32 %v1478, %v1496
        %s1499 = sld [smem:[#allocation15 + $0x381]]
        %v1500 = vstv %s1499
        %v1501 = vmul.f32 %v1500, %v1491
        %v1502 = vmul.f32 %v1500, %v1492
        %v1503 = vadd.f32 %v1483, %v1501
        %v1504 = vadd.f32 %v1484, %v1502
        %s1505 = sld [smem:[#allocation15 + $0x382]]
        %v1506 = vstv %s1505
        %v1507 = vmul.f32 %v1506, %v1491
        %v1508 = vmul.f32 %v1506, %v1492
        %v1509 = vadd.f32 %v1489, %v1507
        %v1510 = vadd.f32 %v1490, %v1508
        %v1511 = vld [vmem:[%s780] sm:$0xff]
        %v1512 = vld [vmem:[%s780 + $0x8] sm:$0x3f]
        %s1513 = sld [smem:[#allocation15 + $0x400]]
        %v1514 = vstv %s1513
        %v1515 = vmul.f32 %v1514, %v1511
        %v1516 = vmul.f32 %v1514, %v1512
        %v1517 = vadd.f32 %v1497, %v1515
        %v1518 = vadd.f32 %v1498, %v1516
        %s1519 = sld [smem:[#allocation15 + $0x401]]
        %v1520 = vstv %s1519
        %v1521 = vmul.f32 %v1520, %v1511
        %v1522 = vmul.f32 %v1520, %v1512
        %v1523 = vadd.f32 %v1503, %v1521
        %v1524 = vadd.f32 %v1504, %v1522
        %s1525 = sld [smem:[#allocation15 + $0x402]]
        %v1526 = vstv %s1525
        %v1527 = vmul.f32 %v1526, %v1511
        %v1528 = vmul.f32 %v1526, %v1512
        %v1529 = vadd.f32 %v1509, %v1527
        %v1530 = vadd.f32 %v1510, %v1528
        %v1531 = vld [vmem:[%s834] sm:$0xff]
        %v1532 = vld [vmem:[%s834 + $0x8] sm:$0x3f]
        %s1533 = sld [smem:[#allocation15 + $0x480]]
        %v1534 = vstv %s1533
        %v1535 = vmul.f32 %v1534, %v1531
        %v1536 = vmul.f32 %v1534, %v1532
        %v1537 = vadd.f32 %v1517, %v1535
        %v1538 = vadd.f32 %v1518, %v1536
        %s1539 = sld [smem:[#allocation15 + $0x481]]
        %v1540 = vstv %s1539
        %v1541 = vmul.f32 %v1540, %v1531
        %v1542 = vmul.f32 %v1540, %v1532
        %v1543 = vadd.f32 %v1523, %v1541
        %v1544 = vadd.f32 %v1524, %v1542
        %s1545 = sld [smem:[#allocation15 + $0x482]]
        %v1546 = vstv %s1545
        %v1547 = vmul.f32 %v1546, %v1531
        %v1548 = vmul.f32 %v1546, %v1532
        %v1549 = vadd.f32 %v1529, %v1547
        %v1550 = vadd.f32 %v1530, %v1548
        %v1551 = vld [vmem:[%s1210] sm:$0xff]
        %v1552 = vld [vmem:[%s1210 + $0x8] sm:$0x3f]
        %s1553 = sld [smem:[#allocation15 + $0x500]]
        %v1554 = vstv %s1553
        %v1555 = vmul.f32 %v1554, %v1551
        %v1556 = vmul.f32 %v1554, %v1552
        %v1557 = vadd.f32 %v1537, %v1555
        %v1558 = vadd.f32 %v1538, %v1556
        %s1559 = sld [smem:[#allocation15 + $0x501]]
        %v1560 = vstv %s1559
        %v1561 = vmul.f32 %v1560, %v1551
        %v1562 = vmul.f32 %v1560, %v1552
        %v1563 = vadd.f32 %v1543, %v1561
        %v1564 = vadd.f32 %v1544, %v1562
        %s1565 = sld [smem:[#allocation15 + $0x502]]
        %v1566 = vstv %s1565
        %v1567 = vmul.f32 %v1566, %v1551
        %v1568 = vmul.f32 %v1566, %v1552
        %v1569 = vadd.f32 %v1549, %v1567
        %v1570 = vadd.f32 %v1550, %v1568
        %v1571 = vld [vmem:[%s1246] sm:$0xff]
        %v1572 = vld [vmem:[%s1246 + $0x8] sm:$0x3f]
        %s1573 = sld [smem:[#allocation15 + $0x580]]
        %v1574 = vstv %s1573
        %v1575 = vmul.f32 %v1574, %v1571
        %v1576 = vmul.f32 %v1574, %v1572
        %v1577 = vadd.f32 %v1557, %v1575
        %v1578 = vadd.f32 %v1558, %v1576
        %s1579 = sld [smem:[#allocation15 + $0x581]]
        %v1580 = vstv %s1579
        %v1581 = vmul.f32 %v1580, %v1571
        %v1582 = vmul.f32 %v1580, %v1572
        %v1583 = vadd.f32 %v1563, %v1581
        %v1584 = vadd.f32 %v1564, %v1582
        %s1585 = sld [smem:[#allocation15 + $0x582]]
        %v1586 = vstv %s1585
        %v1587 = vmul.f32 %v1586, %v1571
        %v1588 = vmul.f32 %v1586, %v1572
        %v1589 = vadd.f32 %v1569, %v1587
        %v1590 = vadd.f32 %v1570, %v1588
        %v1591 = vld [vmem:[%s1282] sm:$0xff]
        %v1592 = vld [vmem:[%s1282 + $0x8] sm:$0x3f]
        %s1593 = sld [smem:[#allocation15 + $0x600]]
        %v1594 = vstv %s1593
        %v1595 = vmul.f32 %v1594, %v1591
        %v1596 = vmul.f32 %v1594, %v1592
        %v1597 = vadd.f32 %v1577, %v1595
        %v1598 = vadd.f32 %v1578, %v1596
        %s1599 = sld [smem:[#allocation15 + $0x601]]
        %v1600 = vstv %s1599
        %v1601 = vmul.f32 %v1600, %v1591
        %v1602 = vmul.f32 %v1600, %v1592
        %v1603 = vadd.f32 %v1583, %v1601
        %v1604 = vadd.f32 %v1584, %v1602
        %s1605 = sld [smem:[#allocation15 + $0x602]]
        %v1606 = vstv %s1605
        %v1607 = vmul.f32 %v1606, %v1591
        %v1608 = vmul.f32 %v1606, %v1592
        %v1609 = vadd.f32 %v1589, %v1607
        %v1610 = vadd.f32 %v1590, %v1608
        %v1611 = vld [vmem:[%s1318] sm:$0xff]
        %v1612 = vld [vmem:[%s1318 + $0x8] sm:$0x3f]
        %s1613 = sld [smem:[#allocation15 + $0x680]]
        %v1614 = vstv %s1613
        %v1615 = vmul.f32 %v1614, %v1611
        %v1616 = vmul.f32 %v1614, %v1612
        %v1617 = vadd.f32 %v1597, %v1615
        %v1618 = vadd.f32 %v1598, %v1616
        %s1619 = sld [smem:[#allocation15 + $0x681]]
        %v1620 = vstv %s1619
        %v1621 = vmul.f32 %v1620, %v1611
        %v1622 = vmul.f32 %v1620, %v1612
        %v1623 = vadd.f32 %v1603, %v1621
        %v1624 = vadd.f32 %v1604, %v1622
        %s1625 = sld [smem:[#allocation15 + $0x682]]
        %v1626 = vstv %s1625
        %v1627 = vmul.f32 %v1626, %v1611
        %v1628 = vmul.f32 %v1626, %v1612
        %v1629 = vadd.f32 %v1609, %v1627
        %v1630 = vadd.f32 %v1610, %v1628
        %v1631 = vld [vmem:[%s1354] sm:$0xff]
        %v1632 = vld [vmem:[%s1354 + $0x8] sm:$0x3f]
        %s1633 = sld [smem:[#allocation15 + $0x700]]
        %v1634 = vstv %s1633
        %v1635 = vmul.f32 %v1634, %v1631
        %v1636 = vmul.f32 %v1634, %v1632
        %v1637 = vadd.f32 %v1617, %v1635
        %v1638 = vadd.f32 %v1618, %v1636
        %s1639 = sld [smem:[#allocation15 + $0x701]]
        %v1640 = vstv %s1639
        %v1641 = vmul.f32 %v1640, %v1631
        %v1642 = vmul.f32 %v1640, %v1632
        %v1643 = vadd.f32 %v1623, %v1641
        %v1644 = vadd.f32 %v1624, %v1642
        %s1645 = sld [smem:[#allocation15 + $0x702]]
        %v1646 = vstv %s1645
        %v1647 = vmul.f32 %v1646, %v1631
        %v1648 = vmul.f32 %v1646, %v1632
        %v1649 = vadd.f32 %v1629, %v1647
        %v1650 = vadd.f32 %v1630, %v1648
        %v1651 = vld [vmem:[%s627] sm:$0xff]
        %v1652 = vld [vmem:[%s627 + $0x8] sm:$0x3f]
        %s1653 = sld [smem:[#allocation15 + $0x780]]
        %v1654 = vstv %s1653
        %v1655 = vmul.f32 %v1654, %v1651
        %v1656 = vmul.f32 %v1654, %v1652
        %v1657 = vadd.f32 %v1637, %v1655
        %v1658 = vadd.f32 %v1638, %v1656
        %s1659 = sld [smem:[#allocation15 + $0x781]]
        %v1660 = vstv %s1659
        %v1661 = vmul.f32 %v1660, %v1651
        %v1662 = vmul.f32 %v1660, %v1652
        %v1663 = vadd.f32 %v1643, %v1661
        %v1664 = vadd.f32 %v1644, %v1662
        %s1665 = sld [smem:[#allocation15 + $0x782]]
        %v1666 = vstv %s1665
        %v1667 = vmul.f32 %v1666, %v1651
        %v1668 = vmul.f32 %v1666, %v1652
        %v1669 = vadd.f32 %v1649, %v1667
        %v1670 = vadd.f32 %v1650, %v1668
        %v1671 = vld [vmem:[%s681] sm:$0xff]
        %v1672 = vld [vmem:[%s681 + $0x8] sm:$0x3f]
        %s1673 = sld [smem:[#allocation15 + $0x800]]
        %v1674 = vstv %s1673
        %v1675 = vmul.f32 %v1674, %v1671
        %v1676 = vmul.f32 %v1674, %v1672
        %v1677 = vadd.f32 %v1657, %v1675
        %v1678 = vadd.f32 %v1658, %v1676
        %s1679 = sld [smem:[#allocation15 + $0x801]]
        %v1680 = vstv %s1679
        %v1681 = vmul.f32 %v1680, %v1671
        %v1682 = vmul.f32 %v1680, %v1672
        %v1683 = vadd.f32 %v1663, %v1681
        %v1684 = vadd.f32 %v1664, %v1682
        %s1685 = sld [smem:[#allocation15 + $0x802]]
        %v1686 = vstv %s1685
        %v1687 = vmul.f32 %v1686, %v1671
        %v1688 = vmul.f32 %v1686, %v1672
        %v1689 = vadd.f32 %v1669, %v1687
        %v1690 = vadd.f32 %v1670, %v1688
        %v1691 = vld [vmem:[%s735] sm:$0xff]
        %v1692 = vld [vmem:[%s735 + $0x8] sm:$0x3f]
        %s1693 = sld [smem:[#allocation15 + $0x880]]
        %v1694 = vstv %s1693
        %v1695 = vmul.f32 %v1694, %v1691
        %v1696 = vmul.f32 %v1694, %v1692
        %v1697 = vadd.f32 %v1677, %v1695
        %v1698 = vadd.f32 %v1678, %v1696
        %s1699 = sld [smem:[#allocation15 + $0x881]]
        %v1700 = vstv %s1699
        %v1701 = vmul.f32 %v1700, %v1691
        %v1702 = vmul.f32 %v1700, %v1692
        %v1703 = vadd.f32 %v1683, %v1701
        %v1704 = vadd.f32 %v1684, %v1702
        %s1705 = sld [smem:[#allocation15 + $0x882]]
        %v1706 = vstv %s1705
        %v1707 = vmul.f32 %v1706, %v1691
        %v1708 = vmul.f32 %v1706, %v1692
        %v1709 = vadd.f32 %v1689, %v1707
        %v1710 = vadd.f32 %v1690, %v1708
        %v1711 = vld [vmem:[%s789] sm:$0xff]
        %v1712 = vld [vmem:[%s789 + $0x8] sm:$0x3f]
        %s1713 = sld [smem:[#allocation15 + $0x900]]
        %v1714 = vstv %s1713
        %v1715 = vmul.f32 %v1714, %v1711
        %v1716 = vmul.f32 %v1714, %v1712
        %v1717 = vadd.f32 %v1697, %v1715
        %v1718 = vadd.f32 %v1698, %v1716
        %s1719 = sld [smem:[#allocation15 + $0x901]]
        %v1720 = vstv %s1719
        %v1721 = vmul.f32 %v1720, %v1711
        %v1722 = vmul.f32 %v1720, %v1712
        %v1723 = vadd.f32 %v1703, %v1721
        %v1724 = vadd.f32 %v1704, %v1722
        %s1725 = sld [smem:[#allocation15 + $0x902]]
        %v1726 = vstv %s1725
        %v1727 = vmul.f32 %v1726, %v1711
        %v1728 = vmul.f32 %v1726, %v1712
        %v1729 = vadd.f32 %v1709, %v1727
        %v1730 = vadd.f32 %v1710, %v1728
        %v1731 = vld [vmem:[%s843] sm:$0xff]
        %v1732 = vld [vmem:[%s843 + $0x8] sm:$0x3f]
        %s1733 = sld [smem:[#allocation15 + $0x980]]
        %v1734 = vstv %s1733
        %v1735 = vmul.f32 %v1734, %v1731
        %v1736 = vmul.f32 %v1734, %v1732
        %v1737 = vadd.f32 %v1717, %v1735
        %v1738 = vadd.f32 %v1718, %v1736
        %s1739 = sld [smem:[#allocation15 + $0x981]]
        %v1740 = vstv %s1739
        %v1741 = vmul.f32 %v1740, %v1731
        %v1742 = vmul.f32 %v1740, %v1732
        %v1743 = vadd.f32 %v1723, %v1741
        %v1744 = vadd.f32 %v1724, %v1742
        %s1745 = sld [smem:[#allocation15 + $0x982]]
        %v1746 = vstv %s1745
        %v1747 = vmul.f32 %v1746, %v1731
        %v1748 = vmul.f32 %v1746, %v1732
        %v1749 = vadd.f32 %v1729, %v1747
        %v1750 = vadd.f32 %v1730, %v1748
        %s1751 = sld [smem:[#allocation16]]
        %v1752 = vstv %s1751
        %v1753 = vadd.f32 %v1737, %v1752
        %v1754 = vadd.f32 %v1738, %v1752
        %s1755 = sld [smem:[#allocation16 + $0x1]]
        %v1756 = vstv %s1755
        %v1757 = vadd.f32 %v1743, %v1756
        %v1758 = vadd.f32 %v1744, %v1756
        %s1759 = sld [smem:[#allocation16 + $0x2]]
        %v1760 = vstv %s1759
        %v1761 = vadd.f32 %v1749, %v1760
        %v1762 = vadd.f32 %v1750, %v1760
        %v1763 = vxor.u32 %v1753, 2147483648
        %v1764 = vxor.u32 %v1754, 2147483648
        %v1765 = vmul.f32 %v1763, 1.442695
        %v1766 = vpow.pop %v1765
        %v1767 = vmul.f32 %v1764, 1.442695
        %v1768 = vpow.pop %v1767
        %v1769 = vadd.f32 %v1766, 1.0
        %v1770 = vadd.f32 %v1768, 1.0
        %v1771 = vrcp.pop %v1769
        %v1772 = vmul.f32 1.0, %v1771
        %v1773 = vrcp.pop %v1770
        %v1774 = vmul.f32 1.0, %v1773
        %v1775 = vmul.f32 %v1753, %v1772
        %v1776 = vmul.f32 %v1754, %v1774
        %1777 = vst.msk [vmem:[%s373] sm:$0xff] %vm404, %v1775
        %1778 = vst.msk [vmem:[%s373 + $0x8] sm:$0x3f] %vm406, %v1776
        %v1779 = vxor.u32 %v1757, 2147483648
        %v1780 = vxor.u32 %v1758, 2147483648
        %v1781 = vmul.f32 %v1779, 1.442695
        %v1782 = vpow.pop %v1781
        %v1783 = vmul.f32 %v1780, 1.442695
        %v1784 = vpow.pop %v1783
        %v1785 = vadd.f32 %v1782, 1.0
        %v1786 = vadd.f32 %v1784, 1.0
        %v1787 = vrcp.pop %v1785
        %v1788 = vmul.f32 1.0, %v1787
        %v1789 = vrcp.pop %v1786
        %v1790 = vmul.f32 1.0, %v1789
        %v1791 = vmul.f32 %v1757, %v1788
        %v1792 = vmul.f32 %v1758, %v1790
        %s1793 = scalar_lea.vmem %s373, 16
        %1794 = vst.msk [vmem:[%s1793] sm:$0xff] %vm404, %v1791
        %1795 = vst.msk [vmem:[%s1793 + $0x8] sm:$0x3f] %vm406, %v1792
        %v1796 = vxor.u32 %v1761, 2147483648
        %v1797 = vxor.u32 %v1762, 2147483648
        %v1798 = vmul.f32 %v1796, 1.442695
        %v1799 = vpow.pop %v1798
        %v1800 = vmul.f32 %v1797, 1.442695
        %v1801 = vpow.pop %v1800
        %v1802 = vadd.f32 %v1799, 1.0
        %v1803 = vadd.f32 %v1801, 1.0
        %v1804 = vrcp.pop %v1802
        %v1805 = vmul.f32 1.0, %v1804
        %v1806 = vrcp.pop %v1803
        %v1807 = vmul.f32 1.0, %v1806
        %v1808 = vmul.f32 %v1761, %v1805
        %v1809 = vmul.f32 %v1762, %v1807
        %s1810 = scalar_lea.vmem %s373, 32
        %1811 = vst.msk [vmem:[%s1810] sm:$0xff] %vm404, %v1808
        %1812 = vst.msk [vmem:[%s1810 + $0x8] sm:$0x3f] %vm406, %v1809
        %p1813 = scmp.lt.s32.totalorder %s25, 1
        %s1814 = scalar_select %p1813, %s25, 1
        %s1815 = smul.addr %s1814, 6
        %s1816 = smul.addr %s1815, 8
        %s1817 = scalar_lea.vmem %s7, %s1816
        // Predicated region
        $region77: #{model_forward.1} parent=47 // pred_check
          %p1818 = pneg %p195
        $region78: #{model_forward.1} parent=47 // pred_check_branch
          %1820 = sbr.rel (%p1818) target = $region80
        $region79: #{model_forward.1} parent=47 // pred_region
          _
        $region80: #{model_forward.1} parent=47 // pred_fallthru
          _
      $region48: #{model_forward.1} parent=5 // pred_fallthru
        _
      %p1821 = scmp.le.s32.totalorder 2, %s20
      // Predicated region
      $region81: #{model_forward.1} parent=5 // pred_check
        %p1822 = pneg %p1821
      $region82: #{model_forward.1} parent=5 // pred_check_branch
        %1824 = sbr.rel (%p1822) target = $region84
      $region83: #{model_forward.1} parent=5 // pred_region
        %s1825 = ssub.s32 %s20, 2
        // Predicated region
        $region85: #{model_forward.1} parent=83 // pred_check
          %p1826 = pneg %p201
        $region86: #{model_forward.1} parent=83 // pred_check_branch
          %1828 = sbr.rel (%p1826) target = $region88
        $region87: #{model_forward.1} parent=83 // pred_region
          %p1829 = scmp.lt.s32.totalorder %s26, 1
          %s1830 = scalar_select %p1829, %s26, 1
          %s1831 = smul.addr %s1830, 6
          %s1832 = smul.addr %s1831, 8
          %s1833 = scalar_lea.vmem %s7, %s1832
        $region88: #{model_forward.1} parent=83 // pred_fallthru
          _
      $region84: #{model_forward.1} parent=5 // pred_fallthru
        _
    $region6: #{model_forward.1} parent=1 // loop_footer
      %s24 = sadd.s32 1, %s20
    $region7: #{model_forward.1} parent=1 // loop_footer_branch
      %19 = sbr.rel target = $region3
    $region8: #{model_forward.1} parent=1 // loop_exit
      _
    %1834 = vsyncpa [#allocation6], 1
    %s1835 = scalar_lea.sflag [#allocation6], 1
    %1836 = vsyncpa %s1835, 1
    %1837 = vsyncpa [#allocation7], 1
    %s1838 = scalar_lea.sflag [#allocation7], 1
    %1839 = vsyncpa %s1838, 1
    %1840 = vsyncpa [#allocation12], 1
    %1841 = vsyncpa [#allocation8], 1
    %s1842 = scalar_lea.sflag [#allocation8], 1
    %1843 = vsyncpa %s1842, 1
    %1844 = vsyncpa [#allocation14], 1

</llo_original>
